<compile_context>
chip_gen: v6e
topology: v6e:2x2x1
jax: 0.10.0
libtpu: 0.0.40
codegen_flags: <defaults>
</compile_context>

<pallas_src>
from functools import partial

import jax
import jax.numpy as jnp
from jax.experimental import pallas as pl
from jax.experimental.pallas import tpu as pltpu


# ----------------------------------------------------------------------------
# Small helpers
# ----------------------------------------------------------------------------
def _round_up(x, m):
    return ((x + m - 1) // m) * m


def _vmem_budget_bytes():
    """~85% of this chip's VMEM, capped at 110 MiB (v5e/v6e: ~110 MiB, v7x: ~54 MiB)."""
    cap = 64 * 1024 * 1024            # safe fallback = v7x physical VMEM per TC
    try:
        cap = int(getattr(pltpu.get_tpu_info(), 'vmem_capacity_bytes', cap))
    except Exception:
        pass
    return int(min(cap * 0.85, 110 * 1024 * 1024))


def _pick_batch_tile(B, S, D, O, vmem_budget_bytes):
    """Largest divisor of B whose per-step activation footprint fits the budget
    after reserving space for the double-buffered bf16 layer weights."""
    per_img = 4 * S * (16 * D + 2 * O) + 8 * S * S     # rough live f32 activations/image
    layer_w = 2 * 2 * 12 * D * D                       # bf16 layer weights, double-buffered
    avail = vmem_budget_bytes - layer_w - 2 * D * O
    cap = max(1, avail // max(per_img, 1))
    bt = 1
    for d in range(1, B + 1):
        if B % d == 0 and d <= cap:
            bt = d
    return int(bt)


# ----------------------------------------------------------------------------
# Pallas kernels
# ----------------------------------------------------------------------------
def matmul_kernel(a_ref, b_ref, o_ref, acc_ref):
    """Tiled matmul with f32 VMEM accumulator; K is the last (arbitrary) grid axis."""
    @pl.when(pl.program_id(2) == 0)
    def _():
        acc_ref[...] = jnp.zeros_like(acc_ref)

    acc_ref[...] += jnp.dot(a_ref[...], b_ref[...],
                            preferred_element_type=jnp.float32)

    @pl.when(pl.program_id(2) == pl.num_programs(2) - 1)
    def _():
        o_ref[...] = acc_ref[...].astype(o_ref.dtype)


def transformer_kernel(x_ref,
                       lnpre_w_ref, lnpre_b_ref,
                       ln1w_ref, ln1b_ref, inw_ref, inb_ref,
                       outw_ref, outb_ref, ln2w_ref, ln2b_ref,
                       fcw_ref, fcb_ref, prw_ref, prb_ref,
                       lnpost_w_ref, lnpost_b_ref, proj_ref,
                       x11_ref, x12_ref, xproj_ref,
                       resid_ref, *, n_head, s_valid):
    """Fused ln_pre + all residual attention blocks + ln_post + projection.

    grid = (B // Bt, n_layers); the layer axis is innermost ("arbitrary") and the
    residual stream for the current batch tile is carried across it in `resid_ref`
    (VMEM f32 scratch).  Weights arrive pre-transposed, bf16, with the q scale
    folded in, so every linear is a plain y = x @ W_t + b MXU matmul (f32 accum).
    """
    l = pl.program_id(1)
    n_layers = pl.num_programs(1)

    Bt, S, D = x_ref.shape
    hd = D // n_head
    M = Bt * S
    bf16 = jnp.bfloat16

    def ln(v, w, b):                  # f32 LayerNorm (torch default eps=1e-5)
        mu = jnp.mean(v, axis=-1, keepdims=True)
        var = jnp.mean(jnp.square(v - mu), axis=-1, keepdims=True)
        return (v - mu) * jax.lax.rsqrt(var + 1e-5) * w + b

    # ---- grid step l == 0: initialize the residual stream with ln_pre(x) ----
    @pl.when(l == 0)
    def _():
        x0 = x_ref[...].reshape(M, D)
        resid_ref[...] = ln(x0, lnpre_w_ref[...], lnpre_b_ref[...]).reshape(Bt, S, D)

    x2d = resid_ref[...].reshape(M, D)                                 # (M, D) f32

    # ---- multi-head self-attention (nn.MultiheadAttention, dropout=0) ----
    xl = ln(x2d, ln1w_ref[0], ln1b_ref[0]).astype(bf16)
    qkv = jnp.dot(xl, inw_ref[0],
                  preferred_element_type=jnp.float32) + inb_ref[0]     # (M, 3D) f32
    qkv3 = qkv.reshape(Bt, S, 3 * D)

    if s_valid < S:                   # mask padded key columns (static at trace time)
        key_valid = jax.lax.broadcasted_iota(jnp.int32, (Bt, S, S), 2) < s_valid
    else:
        key_valid = None

    # Per-head loop (unrolled): per-head output projection accumulates directly
    # into (M, D), so no merge-heads transpose/concat relayout is needed.
    # TODO(synk): for long sequences (e.g. 336px ViT-L, S~577) block the KV axis
    # flash-style instead of materializing full (Bt, S, S) logits per head.
    attn = None
    for hh in range(n_head):
        q_h = qkv3[:, :, hh * hd:(hh + 1) * hd].astype(bf16)           # scale pre-folded
        k_h = qkv3[:, :, D + hh * hd:D + (hh + 1) * hd].astype(bf16)
        v_h = qkv3[:, :, 2 * D + hh * hd:2 * D + (hh + 1) * hd].astype(bf16)
        logits = jnp.einsum('bqd,bkd->bqk', q_h, k_h,
                            preferred_element_type=jnp.float32)        # (Bt, S, S)
        if key_valid is not None:
            logits = jnp.where(key_valid, logits, -1e30)
        logits = logits - jnp.max(logits, axis=-1, keepdims=True)
        p = jnp.exp(logits)
        p = p * pl.reciprocal(jnp.sum(p, axis=-1, keepdims=True), approx=True)
        ctx_h = jnp.einsum('bqk,bkd->bqd', p.astype(bf16), v_h,
                           preferred_element_type=jnp.float32)         # (Bt, S, hd)
        part = jnp.dot(ctx_h.reshape(M, hd).astype(bf16), outw_ref[0, hh],
                       preferred_element_type=jnp.float32)             # (M, D)
        attn = part if attn is None else attn + part
    x2d = x2d + attn + outb_ref[0]

    # ---- MLP with QuickGELU (bf16 elementwise; bf16 VPU/EUP on v6e/v7x) ----
    xl2 = ln(x2d, ln2w_ref[0], ln2b_ref[0]).astype(bf16)
    h1 = jnp.dot(xl2, fcw_ref[0],
                 preferred_element_type=jnp.float32) + fcb_ref[0]      # (M, 4D) f32
    h1 = h1.astype(bf16)
    h1 = h1 * (1.0 / (1.0 + jnp.exp(h1 * -1.702)))                     # QuickGELU
    mlp_out = jnp.dot(h1, prw_ref[0],
                      preferred_element_type=jnp.float32) + prb_ref[0]
    x2d = x2d + mlp_out
    resid_ref[...] = x2d.reshape(Bt, S, D)

    # ---- epilogues ----
    @pl.when(l == n_layers - 2)       # after resblocks[:11] (layers == 12 in CLIP)
    def _():
        x11_ref[...] = x2d.reshape(Bt, S, D).astype(x11_ref.dtype)

    @pl.when(l == n_layers - 1)       # after the last block: ln_post + projection
    def _():
        x12 = ln(x2d, lnpost_w_ref[...], lnpost_b_ref[...])
        x12_ref[...] = x12.reshape(Bt, S, D).astype(x12_ref.dtype)
        xp = jnp.dot(x12.astype(bf16), proj_ref[...],
                     preferred_element_type=jnp.float32)
        xproj_ref[...] = xp.reshape(Bt, S, -1).astype(xproj_ref.dtype)


# ----------------------------------------------------------------------------
# Pallas wrappers
# ----------------------------------------------------------------------------
def pallas_matmul(a, b, *, tm=256, tn=256, tk=256, out_dtype=jnp.float32):
    """Grid-tiled MXU matmul.  Inputs are zero-padded up to tile multiples so
    ragged dims never collapse into one giant (VMEM-busting) tile."""
    M, K = a.shape
    _, N = b.shape
    tm = min(tm, _round_up(M, 8))
    tn = min(tn, _round_up(N, 128))
    tk = min(tk, _round_up(K, 128))
    Mp, Kp, Np = _round_up(M, tm), _round_up(K, tk), _round_up(N, tn)
    if (Mp, Kp) != (M, K):
        a = jnp.pad(a, ((0, Mp - M), (0, Kp - K)))
    if (Kp, Np) != (K, N):
        b = jnp.pad(b, ((0, Kp - K), (0, Np - N)))
    out = pl.pallas_call(
        matmul_kernel,
        out_shape=jax.ShapeDtypeStruct((Mp, Np), out_dtype),
        grid_spec=pltpu.PrefetchScalarGridSpec(
            num_scalar_prefetch=0,
            grid=(Mp // tm, Np // tn, Kp // tk),
            in_specs=[pl.BlockSpec((tm, tk), lambda i, j, k: (i, k)),
                      pl.BlockSpec((tk, tn), lambda i, j, k: (k, j))],
            out_specs=pl.BlockSpec((tm, tn), lambda i, j, k: (i, j)),
            scratch_shapes=[pltpu.VMEM((tm, tn), jnp.float32)]),
        compiler_params=pltpu.CompilerParams(
            dimension_semantics=("parallel", "parallel", "arbitrary")),
    )(a, b)
    if (Mp, Np) != (M, N):
        out = out[:M, :N]
    return out


def fused_transformer(x, pp, *, n_head, s_valid, batch_tile=None,
                      out_dtype=jnp.float32):
    """One pallas_call: ln_pre + all resblocks + ln_post + projection, batch-tiled."""
    B, S, D = x.shape
    O = pp['proj'].shape[1]
    n_layers = pp['ln1_w'].shape[0]
    assert n_layers >= 2 and D % n_head == 0

    budget = _vmem_budget_bytes()
    if batch_tile is None:
        batch_tile = _pick_batch_tile(B, S, D, O, budget)
    Bt = batch_tile
    assert B % Bt == 0

    layer_ws = [pp['ln1_w'], pp['ln1_b'], pp['in_w'], pp['in_b'],
                pp['out_w'], pp['out_b'], pp['ln2_w'], pp['ln2_b'],
                pp['fc_w'], pp['fc_b'], pp['pr_w'], pp['pr_b']]

    def layer_spec(arr):              # stacked per-layer weight: block follows layer axis
        rest = arr.ndim - 1
        return pl.BlockSpec((1,) + arr.shape[1:],
                            lambda b, l, _n=rest: (l,) + (0,) * _n)

    def fixed_spec(arr):              # constant block (VMEM resident)
        nd = arr.ndim
        return pl.BlockSpec(arr.shape, lambda b, l, _n=nd: (0,) * _n)

    in_specs = ([pl.BlockSpec((Bt, S, D), lambda b, l: (b, 0, 0)),
                 fixed_spec(pp['ln_pre_w']), fixed_spec(pp['ln_pre_b'])]
                + [layer_spec(w) for w in layer_ws]
                + [fixed_spec(pp['ln_post_w']), fixed_spec(pp['ln_post_b']),
                   fixed_spec(pp['proj'])])

    out_specs = [pl.BlockSpec((Bt, S, D), lambda b, l: (b, 0, 0)),
                 pl.BlockSpec((Bt, S, D), lambda b, l: (b, 0, 0)),
                 pl.BlockSpec((Bt, S, O), lambda b, l: (b, 0, 0))]

    out_shape = (jax.ShapeDtypeStruct((B, S, D), out_dtype),
                 jax.ShapeDtypeStruct((B, S, D), out_dtype),
                 jax.ShapeDtypeStruct((B, S, O), out_dtype))

    # TODO(synk): on v7x with D>=1024 (ViT-L), tile fc_w/pr_w over the 4*D axis with an
    # inner pltpu.emit_pipeline so double-buffered bf16 MLP weights fit in 64 MiB VMEM.
    # TODO(synk): optionally pipeline_mode=pl.Buffered(3) on layer_spec for v5e/v6e.
    return pl.pallas_call(
        partial(transformer_kernel, n_head=n_head, s_valid=s_valid),
        out_shape=out_shape,
        grid_spec=pltpu.PrefetchScalarGridSpec(
            num_scalar_prefetch=0,
            grid=(B // Bt, n_layers),
            in_specs=in_specs,
            out_specs=out_specs,
            scratch_shapes=[pltpu.VMEM((Bt, S, D), jnp.float32)]),
        compiler_params=pltpu.CompilerParams(
            dimension_semantics=("parallel", "arbitrary"),
            vmem_limit_bytes=budget),
    )(x, pp['ln_pre_w'], pp['ln_pre_b'], *layer_ws,
      pp['ln_post_w'], pp['ln_post_b'], pp['proj'])


# ----------------------------------------------------------------------------
# One-time parameter preparation (hoisted out of the forward path)
# ----------------------------------------------------------------------------
def prepare_params(p, *, n_head):
    """Torch-layout params -> kernel-ready layout: linear weights transposed to
    (in, out) and cast to bf16, per-layer weights stacked with a leading layer
    axis, LN params / biases as 2-D rows, 1/sqrt(head_dim) folded into q, and
    out_proj stored per-head as (h, hd, D)."""
    D = p['class_embedding'].shape[0]
    hd = D // n_head
    qscale = hd ** (-0.5)
    bf = jnp.bfloat16

    def stack(name, f):
        return jnp.stack([f(blk[name]) for blk in p['blocks']], axis=0)

    def prep_in_w(w):                 # torch (3D, D): rows [0:D] are W_q
        return jnp.concatenate([w[:D] * qscale, w[D:]], axis=0).T.astype(bf)

    def prep_in_b(b):
        return jnp.concatenate([b[:D] * qscale, b[D:]], axis=0).reshape(1, 3 * D)

    return {
        'conv_w2d': p['conv_w'].reshape(p['conv_w'].shape[0], -1).T.astype(bf),
        'class_embedding': p['class_embedding'],
        'positional_embedding': p['positional_embedding'],
        'ln_pre_w': p['ln_pre_w'].reshape(1, D),
        'ln_pre_b': p['ln_pre_b'].reshape(1, D),
        'ln_post_w': p['ln_post_w'].reshape(1, D),
        'ln_post_b': p['ln_post_b'].reshape(1, D),
        'proj': p['proj'].astype(bf),                                    # (D, O)
        'ln1_w': stack('ln1_w', lambda w: w.reshape(1, D)),              # (L,1,D)
        'ln1_b': stack('ln1_b', lambda w: w.reshape(1, D)),
        'in_w': stack('in_proj_w', prep_in_w),                           # (L,D,3D)
        'in_b': stack('in_proj_b', prep_in_b),                           # (L,1,3D)
        'out_w': stack('out_proj_w',
                       lambda w: w.T.reshape(n_head, hd, D).astype(bf)), # (L,h,hd,D)
        'out_b': stack('out_proj_b', lambda w: w.reshape(1, D)),
        'ln2_w': stack('ln2_w', lambda w: w.reshape(1, D)),
        'ln2_b': stack('ln2_b', lambda w: w.reshape(1, D)),
        'fc_w': stack('fc_w', lambda w: w.T.astype(bf)),                 # (L,D,4D)
        'fc_b': stack('fc_b', lambda w: w.reshape(1, 4 * D)),
        'pr_w': stack('proj_w', lambda w: w.T.astype(bf)),               # (L,4D,D)
        'pr_b': stack('proj_b', lambda w: w.reshape(1, D)),
    }


# ----------------------------------------------------------------------------
# Model forward (glue + kernels)
# ----------------------------------------------------------------------------
def patch_embed(x_nchw, conv_w2d, patch):
    """Conv2d(3, width, kernel=stride=patch, bias=False) as im2col + tiled matmul."""
    # TODO(synk): stride_size != patch_size (overlapping patches) would need a
    # general im2col gather; this assumes stride == patch (standard CLIP).
    B, C, H, W = x_nchw.shape
    hp, wp = H // patch, W // patch
    pt = x_nchw.reshape(B, C, hp, patch, wp, patch)
    pt = jnp.transpose(pt, (0, 2, 4, 1, 3, 5))                # (B, hp, wp, C, p, p)
    pt = pt.reshape(B * hp * wp, C * patch * patch).astype(jnp.bfloat16)
    out = pallas_matmul(pt, conv_w2d)                         # (B*L, width) f32
    return out.reshape(B, hp * wp, conv_w2d.shape[1])


def vision_transformer_forward(x_nchw, pp, *, patch, n_head, cv_emb=None,
                               batch_tile=None):
    D = pp['class_embedding'].shape[0]
    x = patch_embed(x_nchw, pp['conv_w2d'], patch)            # (B, L, D) f32
    B, L, _ = x.shape
    cls = jnp.broadcast_to(pp['class_embedding'].reshape(1, 1, D), (B, 1, D))
    x = jnp.concatenate([cls, x], axis=1)                     # (B, L+1, D)
    if cv_emb is not None:
        x = x.at[:, 0].add(cv_emb)
    x = x + pp['positional_embedding'][None, :, :]
    S = L + 1
    Sp = _round_up(S, 8)                                      # sublane-dense token axis
    if Sp != S:
        x = jnp.pad(x, ((0, 0), (0, Sp - S), (0, 0)))
    # ln_pre, all resblocks, ln_post and the output projection fused in one call.
    x11, x12, xproj = fused_transformer(x, pp, n_head=n_head, s_valid=S,
                                        batch_tile=batch_tile)
    if Sp != S:
        x11, x12, xproj = x11[:, :S], x12[:, :S], xproj[:, :S]
    return x11, x12, xproj


# ----------------------------------------------------------------------------
# Deterministic parameter init (shapes from VisionTransformer.__init__)
# ----------------------------------------------------------------------------
def init_params(key, *, width, layers, patch, output_dim, n_tokens):
    scale = width ** (-0.5)
    ks = iter(jax.random.split(key, 16 + layers * 8))

    def nrm(shape, s=0.02):
        return s * jax.random.normal(next(ks), shape, jnp.float32)

    p = {
        'conv_w': nrm((width, 3, patch, patch)),
        'class_embedding': scale * jax.random.normal(next(ks), (width,), jnp.float32),
        'positional_embedding': scale * jax.random.normal(next(ks), (n_tokens, width), jnp.float32),
        'ln_pre_w': jnp.ones((width,), jnp.float32),
        'ln_pre_b': jnp.zeros((width,), jnp.float32),
        'ln_post_w': jnp.ones((width,), jnp.float32),
        'ln_post_b': jnp.zeros((width,), jnp.float32),
        'proj': scale * jax.random.normal(next(ks), (width, output_dim), jnp.float32),
    }
    blocks = []
    for _ in range(layers):
        blocks.append({
            'ln1_w': jnp.ones((width,), jnp.float32),
            'ln1_b': jnp.zeros((width,), jnp.float32),
            'in_proj_w': nrm((3 * width, width)),
            'in_proj_b': nrm((3 * width,)),
            'out_proj_w': nrm((width, width)),
            'out_proj_b': nrm((width,)),
            'ln2_w': jnp.ones((width,), jnp.float32),
            'ln2_b': jnp.zeros((width,), jnp.float32),
            'fc_w': nrm((4 * width, width)),
            'fc_b': nrm((4 * width,)),
            'proj_w': nrm((width, 4 * width)),
            'proj_b': nrm((width,)),
        })
    p['blocks'] = blocks
    return p


# ----------------------------------------------------------------------------
if __name__ == "__main__":
    # Small config: 16x16 RGB image, 4x4 patches -> h_res = w_res = 4, S = 17.
    # layers must be 12 because the reference forward indexes resblocks[11].
    B, patch, h_res, w_res = 2, 4, 4, 4
    width, layers, heads, output_dim = 32, 12, 4, 16
    H, W = h_res * patch, w_res * patch

    key = jax.random.PRNGKey(0)
    kx, kp = jax.random.split(key)
    x = jax.random.normal(kx, (B, 3, H, W), jnp.float32)      # NCHW like torch
    params = init_params(kp, width=width, layers=layers, patch=patch,
                         output_dim=output_dim, n_tokens=h_res * w_res + 1)
    prepped = prepare_params(params, n_head=heads)            # one-time prep

    fwd = jax.jit(partial(vision_transformer_forward, patch=patch, n_head=heads))
    x11, x12, xproj = fwd(x, prepped)
    jax.block_until_ready((x11, x12, xproj))

    S = h_res * w_res + 1
    assert x11.shape == (B, S, width)
    assert x12.shape == (B, S, width)
    assert xproj.shape == (B, S, output_dim)
    assert bool(jnp.all(jnp.isfinite(x11))) and bool(jnp.all(jnp.isfinite(xproj)))
    print("KERNEL_OK")
</pallas_src>

<mosaic_0001>
module attributes {stable_mosaic.version = 11 : i64} {
  func.func @matmul_kernel(%arg0: i32, %arg1: i32, %arg2: i32, %arg3: memref<32x128xbf16, #tpu.memory_space<vmem>>, %arg4: memref<128x128xbf16, #tpu.memory_space<vmem>>, %arg5: memref<32x128xf32, #tpu.memory_space<vmem>>, %arg6: memref<32x128xf32, #tpu.memory_space<vmem>>) attributes {dimension_semantics = [#tpu.dimension_semantics<parallel>, #tpu.dimension_semantics<parallel>, #tpu.dimension_semantics<arbitrary>], iteration_bounds = array<i64: 1, 1, 1>, scalar_prefetch = 0 : i64, scratch_operands = 1 : i64, tpu.core_type = #tpu.core_type<tc>, window_params = [{transform_indices = @transform_0, window_bounds = array<i64: 32, 128>}, {transform_indices = @transform_1, window_bounds = array<i64: 128, 128>}, {transform_indices = @transform_2, window_bounds = array<i64: 32, 128>}]} {
    %c0_i32 = arith.constant 0 : i32
    %0 = arith.cmpi eq, %arg2, %c0_i32 : i32
    %1 = arith.extui %0 : i1 to i32
    %c0_i32_0 = arith.constant 0 : i32
    %2 = arith.cmpi ne, %1, %c0_i32_0 : i32
    scf.if %2 {
      %cst_10 = arith.constant 0.000000e+00 : f32
      %12 = vector.broadcast %cst_10 : f32 to vector<32x128xf32>
      %c0_11 = arith.constant 0 : index
      %c0_12 = arith.constant 0 : index
      %13 = vector.load %arg6[%c0_11, %c0_12] : memref<32x128xf32, #tpu.memory_space<vmem>>, vector<32x128xf32>
      tpu.vector_store %arg6[%c0_11, %c0_12], %12 {strides = array<i32>} : memref<32x128xf32, #tpu.memory_space<vmem>>, vector<32x128xf32>,
    } else {
    }
    %c0 = arith.constant 0 : index
    %c0_1 = arith.constant 0 : index
    %3 = vector.load %arg6[%c0, %c0_1] : memref<32x128xf32, #tpu.memory_space<vmem>>, vector<32x128xf32>
    %c0_2 = arith.constant 0 : index
    %c0_3 = arith.constant 0 : index
    %4 = vector.load %arg3[%c0_2, %c0_3] : memref<32x128xbf16, #tpu.memory_space<vmem>>, vector<32x128xbf16>
    %c0_4 = arith.constant 0 : index
    %c0_5 = arith.constant 0 : index
    %5 = vector.load %arg4[%c0_4, %c0_5] : memref<128x128xbf16, #tpu.memory_space<vmem>>, vector<128x128xbf16>
    %cst = arith.constant dense<0.000000e+00> : vector<32x128xf32>
    %6 = tpu.matmul %4, %5, %cst {dimension_numbers = #tpu.dot_dimension_numbers<[1], [0], [0], [1], [0, 0, 1, 1], [], []>} : vector<32x128xbf16>, vector<128x128xbf16>, vector<32x128xf32> -> vector<32x128xf32>
    %7 = arith.addf %3, %6 : vector<32x128xf32>
    %c0_6 = arith.constant 0 : index
    %c0_7 = arith.constant 0 : index
    %8 = vector.load %arg6[%c0_6, %c0_7] : memref<32x128xf32, #tpu.memory_space<vmem>>, vector<32x128xf32>
    tpu.vector_store %arg6[%c0_6, %c0_7], %7 {strides = array<i32>} : memref<32x128xf32, #tpu.memory_space<vmem>>, vector<32x128xf32>,
    %c0_i32_8 = arith.constant 0 : i32
    %9 = arith.cmpi eq, %arg2, %c0_i32_8 : i32
    %10 = arith.extui %9 : i1 to i32
    %c0_i32_9 = arith.constant 0 : i32
    %11 = arith.cmpi ne, %10, %c0_i32_9 : i32
    scf.if %11 {
      %c0_10 = arith.constant 0 : index
      %c0_11 = arith.constant 0 : index
      %12 = vector.load %arg6[%c0_10, %c0_11] : memref<32x128xf32, #tpu.memory_space<vmem>>, vector<32x128xf32>
      %c0_12 = arith.constant 0 : index
      %c0_13 = arith.constant 0 : index
      %13 = vector.load %arg5[%c0_12, %c0_13] : memref<32x128xf32, #tpu.memory_space<vmem>>, vector<32x128xf32>
      tpu.vector_store %arg5[%c0_12, %c0_13], %12 {strides = array<i32>} : memref<32x128xf32, #tpu.memory_space<vmem>>, vector<32x128xf32>,
    } else {
    }
    return
  }
  func.func @transform_0(%arg0: i32, %arg1: i32, %arg2: i32) -> (i32, i32) {
    %c0_i32 = arith.constant 0 : i32
    return %arg0, %arg2 : i32, i32
  }
  func.func @transform_1(%arg0: i32, %arg1: i32, %arg2: i32) -> (i32, i32) {
    %c0_i32 = arith.constant 0 : i32
    return %arg2, %arg1 : i32, i32
  }
  func.func @transform_2(%arg0: i32, %arg1: i32, %arg2: i32) -> (i32, i32) {
    %c0_i32 = arith.constant 0 : i32
    return %arg0, %arg1 : i32, i32
  }
}

module attributes {stable_mosaic.version = 11 : i64} {
  func.func @transformer_kernel(%arg0: i32, %arg1: i32, %arg2: memref<2x24x32xf32, #tpu.memory_space<vmem>>, %arg3: memref<1x32xf32, #tpu.memory_space<vmem>>, %arg4: memref<1x32xf32, #tpu.memory_space<vmem>>, %arg5: memref<1x1x32xf32, #tpu.memory_space<vmem>>, %arg6: memref<1x1x32xf32, #tpu.memory_space<vmem>>, %arg7: memref<1x32x96xbf16, #tpu.memory_space<vmem>>, %arg8: memref<1x1x96xf32, #tpu.memory_space<vmem>>, %arg9: memref<1x4x8x32xbf16, #tpu.memory_space<vmem>>, %arg10: memref<1x1x32xf32, #tpu.memory_space<vmem>>, %arg11: memref<1x1x32xf32, #tpu.memory_space<vmem>>, %arg12: memref<1x1x32xf32, #tpu.memory_space<vmem>>, %arg13: memref<1x32x128xbf16, #tpu.memory_space<vmem>>, %arg14: memref<1x1x128xf32, #tpu.memory_space<vmem>>, %arg15: memref<1x128x32xbf16, #tpu.memory_space<vmem>>, %arg16: memref<1x1x32xf32, #tpu.memory_space<vmem>>, %arg17: memref<1x32xf32, #tpu.memory_space<vmem>>, %arg18: memref<1x32xf32, #tpu.memory_space<vmem>>, %arg19: memref<32x16xbf16, #tpu.memory_space<vmem>>, %arg20: memref<2x24x32xf32, #tpu.memory_space<vmem>>, %arg21: memref<2x24x32xf32, #tpu.memory_space<vmem>>, %arg22: memref<2x24x16xf32, #tpu.memory_space<vmem>>, %arg23: memref<2x24x32xf32, #tpu.memory_space<vmem>>) attributes {dimension_semantics = [#tpu.dimension_semantics<parallel>, #tpu.dimension_semantics<arbitrary>], iteration_bounds = array<i64: 1, 12>, scalar_prefetch = 0 : i64, scratch_operands = 1 : i64, tpu.core_type = #tpu.core_type<tc>, window_params = [{transform_indices = @transform_0, window_bounds = array<i64: 2, 24, 32>}, {pipeline_mode = #tpu.pipeline_mode<synchronous>, transform_indices = @transform_1, window_bounds = array<i64: 1, 32>}, {pipeline_mode = #tpu.pipeline_mode<synchronous>, transform_indices = @transform_2, window_bounds = array<i64: 1, 32>}, {transform_indices = @transform_3, window_bounds = array<i64: 1, 1, 32>}, {transform_indices = @transform_4, window_bounds = array<i64: 1, 1, 32>}, {transform_indices = @transform_5, window_bounds = array<i64: 1, 32, 96>}, {transform_indices = @transform_6, window_bounds = array<i64: 1, 1, 96>}, {transform_indices = @transform_7, window_bounds = array<i64: 1, 4, 8, 32>}, {transform_indices = @transform_8, window_bounds = array<i64: 1, 1, 32>}, {transform_indices = @transform_9, window_bounds = array<i64: 1, 1, 32>}, {transform_indices = @transform_10, window_bounds = array<i64: 1, 1, 32>}, {transform_indices = @transform_11, window_bounds = array<i64: 1, 32, 128>}, {transform_indices = @transform_12, window_bounds = array<i64: 1, 1, 128>}, {transform_indices = @transform_13, window_bounds = array<i64: 1, 128, 32>}, {transform_indices = @transform_14, window_bounds = array<i64: 1, 1, 32>}, {pipeline_mode = #tpu.pipeline_mode<synchronous>, transform_indices = @transform_15, window_bounds = array<i64: 1, 32>}, {pipeline_mode = #tpu.pipeline_mode<synchronous>, transform_indices = @transform_16, window_bounds = array<i64: 1, 32>}, {pipeline_mode = #tpu.pipeline_mode<synchronous>, transform_indices = @transform_17, window_bounds = array<i64: 32, 16>}, {transform_indices = @transform_18, window_bounds = array<i64: 2, 24, 32>}, {transform_indices = @transform_19, window_bounds = array<i64: 2, 24, 32>}, {transform_indices = @transform_20, window_bounds = array<i64: 2, 24, 16>}]} {
    %c0_i32 = arith.constant 0 : i32
    %0 = arith.cmpi eq, %arg1, %c0_i32 : i32
    %1 = arith.extui %0 : i1 to i32
    %c0_i32_0 = arith.constant 0 : i32
    %2 = arith.cmpi ne, %1, %c0_i32_0 : i32
    scf.if %2 {
      %c0_93 = arith.constant 0 : index
      %c0_94 = arith.constant 0 : index
      %c0_95 = arith.constant 0 : index
      %214 = vector.load %arg2[%c0_93, %c0_94, %c0_95] : memref<2x24x32xf32, #tpu.memory_space<vmem>>, vector<2x24x32xf32>
      %215 = vector.shape_cast %214 : vector<2x24x32xf32> to vector<48x32xf32>
      %c0_96 = arith.constant 0 : index
      %c0_97 = arith.constant 0 : index
      %216 = vector.load %arg3[%c0_96, %c0_97] : memref<1x32xf32, #tpu.memory_space<vmem>>, vector<1x32xf32>
      %c0_98 = arith.constant 0 : index
      %c0_99 = arith.constant 0 : index
      %217 = vector.load %arg4[%c0_98, %c0_99] : memref<1x32xf32, #tpu.memory_space<vmem>>, vector<1x32xf32>
      %cst_100 = arith.constant dense<0.000000e+00> : vector<48xf32>
      %218 = vector.multi_reduction <add>, %215, %cst_100 [1] : vector<48x32xf32> to vector<48xf32>
      %219 = vector.shape_cast %218 : vector<48xf32> to vector<48x1xf32>
      %cst_101 = arith.constant 3.200000e+01 : f32
      %220 = vector.broadcast %cst_101 : f32 to vector<48x1xf32>
      %221 = arith.divf %219, %220 : vector<48x1xf32>
      %222 = vector.broadcast %221 : vector<48x1xf32> to vector<48x32xf32>
      %223 = arith.subf %215, %222 : vector<48x32xf32>
      %224 = arith.mulf %223, %223 : vector<48x32xf32>
      %cst_102 = arith.constant dense<0.000000e+00> : vector<48xf32>
      %225 = vector.multi_reduction <add>, %224, %cst_102 [1] : vector<48x32xf32> to vector<48xf32>
      %226 = vector.shape_cast %225 : vector<48xf32> to vector<48x1xf32>
      %cst_103 = arith.constant 3.200000e+01 : f32
      %227 = vector.broadcast %cst_103 : f32 to vector<48x1xf32>
      %228 = arith.divf %226, %227 : vector<48x1xf32>
      %229 = vector.broadcast %221 : vector<48x1xf32> to vector<48x32xf32>
      %230 = arith.subf %215, %229 : vector<48x32xf32>
      %cst_104 = arith.constant 9.99999974E-6 : f32
      %231 = vector.broadcast %cst_104 : f32 to vector<48x1xf32>
      %232 = arith.addf %228, %231 : vector<48x1xf32>
      %233 = math.rsqrt %232 : vector<48x1xf32>
      %234 = vector.broadcast %233 : vector<48x1xf32> to vector<48x32xf32>
      %235 = arith.mulf %230, %234 : vector<48x32xf32>
      %236 = vector.broadcast %216 : vector<1x32xf32> to vector<48x32xf32>
      %237 = arith.mulf %235, %236 : vector<48x32xf32>
      %238 = vector.broadcast %217 : vector<1x32xf32> to vector<48x32xf32>
      %239 = arith.addf %237, %238 : vector<48x32xf32>
      %240 = vector.shape_cast %239 : vector<48x32xf32> to vector<2x24x32xf32>
      %c0_105 = arith.constant 0 : index
      %c0_106 = arith.constant 0 : index
      %c0_107 = arith.constant 0 : index
      %241 = vector.load %arg23[%c0_105, %c0_106, %c0_107] : memref<2x24x32xf32, #tpu.memory_space<vmem>>, vector<2x24x32xf32>
      tpu.vector_store %arg23[%c0_105, %c0_106, %c0_107], %240 {strides = array<i32>} : memref<2x24x32xf32, #tpu.memory_space<vmem>>, vector<2x24x32xf32>,
    } else {
    }
    %c0 = arith.constant 0 : index
    %c0_1 = arith.constant 0 : index
    %c0_2 = arith.constant 0 : index
    %3 = vector.load %arg23[%c0, %c0_1, %c0_2] : memref<2x24x32xf32, #tpu.memory_space<vmem>>, vector<2x24x32xf32>
    %4 = vector.shape_cast %3 : vector<2x24x32xf32> to vector<48x32xf32>
    %c0_3 = arith.constant 0 : index
    %c0_4 = arith.constant 0 : index
    %c0_5 = arith.constant 0 : index
    %5 = vector.load %arg5[%c0_3, %c0_4, %c0_5] : memref<1x1x32xf32, #tpu.memory_space<vmem>>, vector<1x1x32xf32>
    %6 = vector.shape_cast %5 : vector<1x1x32xf32> to vector<1x32xf32>
    %c0_6 = arith.constant 0 : index
    %c0_7 = arith.constant 0 : index
    %c0_8 = arith.constant 0 : index
    %7 = vector.load %arg6[%c0_6, %c0_7, %c0_8] : memref<1x1x32xf32, #tpu.memory_space<vmem>>, vector<1x1x32xf32>
    %8 = vector.shape_cast %7 : vector<1x1x32xf32> to vector<1x32xf32>
    %cst = arith.constant dense<0.000000e+00> : vector<48xf32>
    %9 = vector.multi_reduction <add>, %4, %cst [1] : vector<48x32xf32> to vector<48xf32>
    %10 = vector.shape_cast %9 : vector<48xf32> to vector<48x1xf32>
    %cst_9 = arith.constant 3.200000e+01 : f32
    %11 = vector.broadcast %cst_9 : f32 to vector<48x1xf32>
    %12 = arith.divf %10, %11 : vector<48x1xf32>
    %13 = vector.broadcast %12 : vector<48x1xf32> to vector<48x32xf32>
    %14 = arith.subf %4, %13 : vector<48x32xf32>
    %15 = arith.mulf %14, %14 : vector<48x32xf32>
    %cst_10 = arith.constant dense<0.000000e+00> : vector<48xf32>
    %16 = vector.multi_reduction <add>, %15, %cst_10 [1] : vector<48x32xf32> to vector<48xf32>
    %17 = vector.shape_cast %16 : vector<48xf32> to vector<48x1xf32>
    %cst_11 = arith.constant 3.200000e+01 : f32
    %18 = vector.broadcast %cst_11 : f32 to vector<48x1xf32>
    %19 = arith.divf %17, %18 : vector<48x1xf32>
    %20 = vector.broadcast %12 : vector<48x1xf32> to vector<48x32xf32>
    %21 = arith.subf %4, %20 : vector<48x32xf32>
    %cst_12 = arith.constant 9.99999974E-6 : f32
    %22 = vector.broadcast %cst_12 : f32 to vector<48x1xf32>
    %23 = arith.addf %19, %22 : vector<48x1xf32>
    %24 = math.rsqrt %23 : vector<48x1xf32>
    %25 = vector.broadcast %24 : vector<48x1xf32> to vector<48x32xf32>
    %26 = arith.mulf %21, %25 : vector<48x32xf32>
    %27 = vector.broadcast %6 : vector<1x32xf32> to vector<48x32xf32>
    %28 = arith.mulf %26, %27 : vector<48x32xf32>
    %29 = vector.broadcast %8 : vector<1x32xf32> to vector<48x32xf32>
    %30 = arith.addf %28, %29 : vector<48x32xf32>
    %31 = arith.truncf %30 : vector<48x32xf32> to vector<48x32xbf16>
    %c0_13 = arith.constant 0 : index
    %c0_14 = arith.constant 0 : index
    %c0_15 = arith.constant 0 : index
    %32 = vector.load %arg7[%c0_13, %c0_14, %c0_15] : memref<1x32x96xbf16, #tpu.memory_space<vmem>>, vector<1x32x96xbf16>
    %33 = vector.shape_cast %32 : vector<1x32x96xbf16> to vector<32x96xbf16>
    %cst_16 = arith.constant dense<0.000000e+00> : vector<48x96xf32>
    %34 = tpu.matmul %31, %33, %cst_16 {dimension_numbers = #tpu.dot_dimension_numbers<[1], [0], [0], [1], [0, 0, 1, 1], [], []>} : vector<48x32xbf16>, vector<32x96xbf16>, vector<48x96xf32> -> vector<48x96xf32>
    %c0_17 = arith.constant 0 : index
    %c0_18 = arith.constant 0 : index
    %c0_19 = arith.constant 0 : index
    %35 = vector.load %arg8[%c0_17, %c0_18, %c0_19] : memref<1x1x96xf32, #tpu.memory_space<vmem>>, vector<1x1x96xf32>
    %36 = vector.shape_cast %35 : vector<1x1x96xf32> to vector<1x96xf32>
    %37 = vector.broadcast %36 : vector<1x96xf32> to vector<48x96xf32>
    %38 = arith.addf %34, %37 : vector<48x96xf32>
    %39 = vector.shape_cast %38 : vector<48x96xf32> to vector<2x24x96xf32>
    %40 = tpu.iota {dimensions = array<i32: 2>} : vector<2x24x24xi32>
    %c17_i32 = arith.constant 17 : i32
    %41 = vector.broadcast %c17_i32 : i32 to vector<2x24x24xi32>
    %42 = arith.cmpi slt, %40, %41 : vector<2x24x24xi32>
    %43 = vector.extract_strided_slice %39 {offsets = [0, 0, 0], sizes = [2, 24, 8], strides = [1, 1, 1]} : vector<2x24x96xf32> to vector<2x24x8xf32>
    %44 = arith.truncf %43 : vector<2x24x8xf32> to vector<2x24x8xbf16>
    %45 = vector.extract_strided_slice %39 {offsets = [0, 0, 32], sizes = [2, 24, 8], strides = [1, 1, 1]} : vector<2x24x96xf32> to vector<2x24x8xf32>
    %46 = arith.truncf %45 : vector<2x24x8xf32> to vector<2x24x8xbf16>
    %47 = vector.extract_strided_slice %39 {offsets = [0, 0, 64], sizes = [2, 24, 8], strides = [1, 1, 1]} : vector<2x24x96xf32> to vector<2x24x8xf32>
    %48 = arith.truncf %47 : vector<2x24x8xf32> to vector<2x24x8xbf16>
    "tpu.trace_start"() <{level = 10 : i32, message = "bqd,bkd->bqk"}> : () -> ()
    %cst_20 = arith.constant dense<0.000000e+00> : vector<2x24x24xf32>
    %49 = tpu.matmul %44, %46, %cst_20 {dimension_numbers = #tpu.dot_dimension_numbers<[2], [2], [1], [1], [0, 0, 0, 1, 1, 1], [0], [0]>} : vector<2x24x8xbf16>, vector<2x24x8xbf16>, vector<2x24x24xf32> -> vector<2x24x24xf32>
    %cst_21 = arith.constant -1.000000e+30 : f32
    "tpu.trace_stop"() : () -> ()
    %50 = vector.broadcast %cst_21 : f32 to vector<2x24x24xf32>
    %51 = arith.select %42, %49, %50 : vector<2x24x24xi1>, vector<2x24x24xf32>
    %cst_22 = arith.constant dense<0xFF800000> : vector<2x24xf32>
    %52 = vector.multi_reduction <maximumf>, %51, %cst_22 [2] : vector<2x24x24xf32> to vector<2x24xf32>
    %53 = vector.shape_cast %52 : vector<2x24xf32> to vector<2x24x1xf32>
    %54 = vector.broadcast %53 : vector<2x24x1xf32> to vector<2x24x24xf32>
    %55 = arith.subf %51, %54 : vector<2x24x24xf32>
    %56 = math.exp %55 : vector<2x24x24xf32>
    %cst_23 = arith.constant dense<0.000000e+00> : vector<2x24xf32>
    %57 = vector.multi_reduction <add>, %56, %cst_23 [2] : vector<2x24x24xf32> to vector<2x24xf32>
    %58 = vector.shape_cast %57 : vector<2x24xf32> to vector<2x24x1xf32>
    %59 = tpu.reciprocal %58 {approx = true} : vector<2x24x1xf32> -> vector<2x24x1xf32>
    %60 = vector.broadcast %59 : vector<2x24x1xf32> to vector<2x24x24xf32>
    %61 = arith.mulf %56, %60 : vector<2x24x24xf32>
    %62 = arith.truncf %61 : vector<2x24x24xf32> to vector<2x24x24xbf16>
    "tpu.trace_start"() <{level = 10 : i32, message = "bqk,bkd->bqd"}> : () -> ()
    %cst_24 = arith.constant dense<0.000000e+00> : vector<2x24x8xf32>
    %63 = tpu.matmul %62, %48, %cst_24 {dimension_numbers = #tpu.dot_dimension_numbers<[2], [1], [1], [2], [0, 0, 0, 1, 1, 2], [0], [0]>} : vector<2x24x24xbf16>, vector<2x24x8xbf16>, vector<2x24x8xf32> -> vector<2x24x8xf32>
    "tpu.trace_stop"() : () -> ()
    %64 = vector.shape_cast %63 : vector<2x24x8xf32> to vector<48x8xf32>
    %65 = arith.truncf %64 : vector<48x8xf32> to vector<48x8xbf16>
    %c0_25 = arith.constant 0 : index
    %c0_26 = arith.constant 0 : index
    %c0_27 = arith.constant 0 : index
    %c0_28 = arith.constant 0 : index
    %66 = vector.load %arg9[%c0_25, %c0_26, %c0_27, %c0_28] : memref<1x4x8x32xbf16, #tpu.memory_space<vmem>>, vector<1x1x8x32xbf16>
    %67 = vector.shape_cast %66 : vector<1x1x8x32xbf16> to vector<8x32xbf16>
    %cst_29 = arith.constant dense<0.000000e+00> : vector<48x32xf32>
    %68 = tpu.matmul %65, %67, %cst_29 {dimension_numbers = #tpu.dot_dimension_numbers<[1], [0], [0], [1], [0, 0, 1, 1], [], []>} : vector<48x8xbf16>, vector<8x32xbf16>, vector<48x32xf32> -> vector<48x32xf32>
    %69 = vector.extract_strided_slice %39 {offsets = [0, 0, 8], sizes = [2, 24, 8], strides = [1, 1, 1]} : vector<2x24x96xf32> to vector<2x24x8xf32>
    %70 = arith.truncf %69 : vector<2x24x8xf32> to vector<2x24x8xbf16>
    %71 = vector.extract_strided_slice %39 {offsets = [0, 0, 40], sizes = [2, 24, 8], strides = [1, 1, 1]} : vector<2x24x96xf32> to vector<2x24x8xf32>
    %72 = arith.truncf %71 : vector<2x24x8xf32> to vector<2x24x8xbf16>
    %73 = vector.extract_strided_slice %39 {offsets = [0, 0, 72], sizes = [2, 24, 8], strides = [1, 1, 1]} : vector<2x24x96xf32> to vector<2x24x8xf32>
    %74 = arith.truncf %73 : vector<2x24x8xf32> to vector<2x24x8xbf16>
    "tpu.trace_start"() <{level = 10 : i32, message = "bqd,bkd->bqk"}> : () -> ()
    %cst_30 = arith.constant dense<0.000000e+00> : vector<2x24x24xf32>
    %75 = tpu.matmul %70, %72, %cst_30 {dimension_numbers = #tpu.dot_dimension_numbers<[2], [2], [1], [1], [0, 0, 0, 1, 1, 1], [0], [0]>} : vector<2x24x8xbf16>, vector<2x24x8xbf16>, vector<2x24x24xf32> -> vector<2x24x24xf32>
    %cst_31 = arith.constant -1.000000e+30 : f32
    "tpu.trace_stop"() : () -> ()
    %76 = vector.broadcast %cst_31 : f32 to vector<2x24x24xf32>
    %77 = arith.select %42, %75, %76 : vector<2x24x24xi1>, vector<2x24x24xf32>
    %cst_32 = arith.constant dense<0xFF800000> : vector<2x24xf32>
    %78 = vector.multi_reduction <maximumf>, %77, %cst_32 [2] : vector<2x24x24xf32> to vector<2x24xf32>
    %79 = vector.shape_cast %78 : vector<2x24xf32> to vector<2x24x1xf32>
    %80 = vector.broadcast %79 : vector<2x24x1xf32> to vector<2x24x24xf32>
    %81 = arith.subf %77, %80 : vector<2x24x24xf32>
    %82 = math.exp %81 : vector<2x24x24xf32>
    %cst_33 = arith.constant dense<0.000000e+00> : vector<2x24xf32>
    %83 = vector.multi_reduction <add>, %82, %cst_33 [2] : vector<2x24x24xf32> to vector<2x24xf32>
    %84 = vector.shape_cast %83 : vector<2x24xf32> to vector<2x24x1xf32>
    %85 = tpu.reciprocal %84 {approx = true} : vector<2x24x1xf32> -> vector<2x24x1xf32>
    %86 = vector.broadcast %85 : vector<2x24x1xf32> to vector<2x24x24xf32>
    %87 = arith.mulf %82, %86 : vector<2x24x24xf32>
    %88 = arith.truncf %87 : vector<2x24x24xf32> to vector<2x24x24xbf16>
    "tpu.trace_start"() <{level = 10 : i32, message = "bqk,bkd->bqd"}> : () -> ()
    %cst_34 = arith.constant dense<0.000000e+00> : vector<2x24x8xf32>
    %89 = tpu.matmul %88, %74, %cst_34 {dimension_numbers = #tpu.dot_dimension_numbers<[2], [1], [1], [2], [0, 0, 0, 1, 1, 2], [0], [0]>} : vector<2x24x24xbf16>, vector<2x24x8xbf16>, vector<2x24x8xf32> -> vector<2x24x8xf32>
    "tpu.trace_stop"() : () -> ()
    %90 = vector.shape_cast %89 : vector<2x24x8xf32> to vector<48x8xf32>
    %91 = arith.truncf %90 : vector<48x8xf32> to vector<48x8xbf16>
    %c0_35 = arith.constant 0 : index
    %c1 = arith.constant 1 : index
    %c0_36 = arith.constant 0 : index
    %c0_37 = arith.constant 0 : index
    %92 = vector.load %arg9[%c0_35, %c1, %c0_36, %c0_37] : memref<1x4x8x32xbf16, #tpu.memory_space<vmem>>, vector<1x1x8x32xbf16>
    %93 = vector.shape_cast %92 : vector<1x1x8x32xbf16> to vector<8x32xbf16>
    %cst_38 = arith.constant dense<0.000000e+00> : vector<48x32xf32>
    %94 = tpu.matmul %91, %93, %cst_38 {dimension_numbers = #tpu.dot_dimension_numbers<[1], [0], [0], [1], [0, 0, 1, 1], [], []>} : vector<48x8xbf16>, vector<8x32xbf16>, vector<48x32xf32> -> vector<48x32xf32>
    %95 = arith.addf %68, %94 : vector<48x32xf32>
    %96 = vector.extract_strided_slice %39 {offsets = [0, 0, 16], sizes = [2, 24, 8], strides = [1, 1, 1]} : vector<2x24x96xf32> to vector<2x24x8xf32>
    %97 = arith.truncf %96 : vector<2x24x8xf32> to vector<2x24x8xbf16>
    %98 = vector.extract_strided_slice %39 {offsets = [0, 0, 48], sizes = [2, 24, 8], strides = [1, 1, 1]} : vector<2x24x96xf32> to vector<2x24x8xf32>
    %99 = arith.truncf %98 : vector<2x24x8xf32> to vector<2x24x8xbf16>
    %100 = vector.extract_strided_slice %39 {offsets = [0, 0, 80], sizes = [2, 24, 8], strides = [1, 1, 1]} : vector<2x24x96xf32> to vector<2x24x8xf32>
    %101 = arith.truncf %100 : vector<2x24x8xf32> to vector<2x24x8xbf16>
    "tpu.trace_start"() <{level = 10 : i32, message = "bqd,bkd->bqk"}> : () -> ()
    %cst_39 = arith.constant dense<0.000000e+00> : vector<2x24x24xf32>
    %102 = tpu.matmul %97, %99, %cst_39 {dimension_numbers = #tpu.dot_dimension_numbers<[2], [2], [1], [1], [0, 0, 0, 1, 1, 1], [0], [0]>} : vector<2x24x8xbf16>, vector<2x24x8xbf16>, vector<2x24x24xf32> -> vector<2x24x24xf32>
    %cst_40 = arith.constant -1.000000e+30 : f32
    "tpu.trace_stop"() : () -> ()
    %103 = vector.broadcast %cst_40 : f32 to vector<2x24x24xf32>
    %104 = arith.select %42, %102, %103 : vector<2x24x24xi1>, vector<2x24x24xf32>
    %cst_41 = arith.constant dense<0xFF800000> : vector<2x24xf32>
    %105 = vector.multi_reduction <maximumf>, %104, %cst_41 [2] : vector<2x24x24xf32> to vector<2x24xf32>
    %106 = vector.shape_cast %105 : vector<2x24xf32> to vector<2x24x1xf32>
    %107 = vector.broadcast %106 : vector<2x24x1xf32> to vector<2x24x24xf32>
    %108 = arith.subf %104, %107 : vector<2x24x24xf32>
    %109 = math.exp %108 : vector<2x24x24xf32>
    %cst_42 = arith.constant dense<0.000000e+00> : vector<2x24xf32>
    %110 = vector.multi_reduction <add>, %109, %cst_42 [2] : vector<2x24x24xf32> to vector<2x24xf32>
    %111 = vector.shape_cast %110 : vector<2x24xf32> to vector<2x24x1xf32>
    %112 = tpu.reciprocal %111 {approx = true} : vector<2x24x1xf32> -> vector<2x24x1xf32>
    %113 = vector.broadcast %112 : vector<2x24x1xf32> to vector<2x24x24xf32>
    %114 = arith.mulf %109, %113 : vector<2x24x24xf32>
    %115 = arith.truncf %114 : vector<2x24x24xf32> to vector<2x24x24xbf16>
    "tpu.trace_start"() <{level = 10 : i32, message = "bqk,bkd->bqd"}> : () -> ()
    %cst_43 = arith.constant dense<0.000000e+00> : vector<2x24x8xf32>
    %116 = tpu.matmul %115, %101, %cst_43 {dimension_numbers = #tpu.dot_dimension_numbers<[2], [1], [1], [2], [0, 0, 0, 1, 1, 2], [0], [0]>} : vector<2x24x24xbf16>, vector<2x24x8xbf16>, vector<2x24x8xf32> -> vector<2x24x8xf32>
    "tpu.trace_stop"() : () -> ()
    %117 = vector.shape_cast %116 : vector<2x24x8xf32> to vector<48x8xf32>
    %118 = arith.truncf %117 : vector<48x8xf32> to vector<48x8xbf16>
    %c0_44 = arith.constant 0 : index
    %c2 = arith.constant 2 : index
    %c0_45 = arith.constant 0 : index
    %c0_46 = arith.constant 0 : index
    %119 = vector.load %arg9[%c0_44, %c2, %c0_45, %c0_46] : memref<1x4x8x32xbf16, #tpu.memory_space<vmem>>, vector<1x1x8x32xbf16>
    %120 = vector.shape_cast %119 : vector<1x1x8x32xbf16> to vector<8x32xbf16>
    %cst_47 = arith.constant dense<0.000000e+00> : vector<48x32xf32>
    %121 = tpu.matmul %118, %120, %cst_47 {dimension_numbers = #tpu.dot_dimension_numbers<[1], [0], [0], [1], [0, 0, 1, 1], [], []>} : vector<48x8xbf16>, vector<8x32xbf16>, vector<48x32xf32> -> vector<48x32xf32>
    %122 = arith.addf %95, %121 : vector<48x32xf32>
    %123 = vector.extract_strided_slice %39 {offsets = [0, 0, 24], sizes = [2, 24, 8], strides = [1, 1, 1]} : vector<2x24x96xf32> to vector<2x24x8xf32>
    %124 = arith.truncf %123 : vector<2x24x8xf32> to vector<2x24x8xbf16>
    %125 = vector.extract_strided_slice %39 {offsets = [0, 0, 56], sizes = [2, 24, 8], strides = [1, 1, 1]} : vector<2x24x96xf32> to vector<2x24x8xf32>
    %126 = arith.truncf %125 : vector<2x24x8xf32> to vector<2x24x8xbf16>
    %127 = vector.extract_strided_slice %39 {offsets = [0, 0, 88], sizes = [2, 24, 8], strides = [1, 1, 1]} : vector<2x24x96xf32> to vector<2x24x8xf32>
    %128 = arith.truncf %127 : vector<2x24x8xf32> to vector<2x24x8xbf16>
    "tpu.trace_start"() <{level = 10 : i32, message = "bqd,bkd->bqk"}> : () -> ()
    %cst_48 = arith.constant dense<0.000000e+00> : vector<2x24x24xf32>
    %129 = tpu.matmul %124, %126, %cst_48 {dimension_numbers = #tpu.dot_dimension_numbers<[2], [2], [1], [1], [0, 0, 0, 1, 1, 1], [0], [0]>} : vector<2x24x8xbf16>, vector<2x24x8xbf16>, vector<2x24x24xf32> -> vector<2x24x24xf32>
    %cst_49 = arith.constant -1.000000e+30 : f32
    "tpu.trace_stop"() : () -> ()
    %130 = vector.broadcast %cst_49 : f32 to vector<2x24x24xf32>
    %131 = arith.select %42, %129, %130 : vector<2x24x24xi1>, vector<2x24x24xf32>
    %cst_50 = arith.constant dense<0xFF800000> : vector<2x24xf32>
    %132 = vector.multi_reduction <maximumf>, %131, %cst_50 [2] : vector<2x24x24xf32> to vector<2x24xf32>
    %133 = vector.shape_cast %132 : vector<2x24xf32> to vector<2x24x1xf32>
    %134 = vector.broadcast %133 : vector<2x24x1xf32> to vector<2x24x24xf32>
    %135 = arith.subf %131, %134 : vector<2x24x24xf32>
    %136 = math.exp %135 : vector<2x24x24xf32>
    %cst_51 = arith.constant dense<0.000000e+00> : vector<2x24xf32>
    %137 = vector.multi_reduction <add>, %136, %cst_51 [2] : vector<2x24x24xf32> to vector<2x24xf32>
    %138 = vector.shape_cast %137 : vector<2x24xf32> to vector<2x24x1xf32>
    %139 = tpu.reciprocal %138 {approx = true} : vector<2x24x1xf32> -> vector<2x24x1xf32>
    %140 = vector.broadcast %139 : vector<2x24x1xf32> to vector<2x24x24xf32>
    %141 = arith.mulf %136, %140 : vector<2x24x24xf32>
    %142 = arith.truncf %141 : vector<2x24x24xf32> to vector<2x24x24xbf16>
    "tpu.trace_start"() <{level = 10 : i32, message = "bqk,bkd->bqd"}> : () -> ()
    %cst_52 = arith.constant dense<0.000000e+00> : vector<2x24x8xf32>
    %143 = tpu.matmul %142, %128, %cst_52 {dimension_numbers = #tpu.dot_dimension_numbers<[2], [1], [1], [2], [0, 0, 0, 1, 1, 2], [0], [0]>} : vector<2x24x24xbf16>, vector<2x24x8xbf16>, vector<2x24x8xf32> -> vector<2x24x8xf32>
    "tpu.trace_stop"() : () -> ()
    %144 = vector.shape_cast %143 : vector<2x24x8xf32> to vector<48x8xf32>
    %145 = arith.truncf %144 : vector<48x8xf32> to vector<48x8xbf16>
    %c0_53 = arith.constant 0 : index
    %c3 = arith.constant 3 : index
    %c0_54 = arith.constant 0 : index
    %c0_55 = arith.constant 0 : index
    %146 = vector.load %arg9[%c0_53, %c3, %c0_54, %c0_55] : memref<1x4x8x32xbf16, #tpu.memory_space<vmem>>, vector<1x1x8x32xbf16>
    %147 = vector.shape_cast %146 : vector<1x1x8x32xbf16> to vector<8x32xbf16>
    %cst_56 = arith.constant dense<0.000000e+00> : vector<48x32xf32>
    %148 = tpu.matmul %145, %147, %cst_56 {dimension_numbers = #tpu.dot_dimension_numbers<[1], [0], [0], [1], [0, 0, 1, 1], [], []>} : vector<48x8xbf16>, vector<8x32xbf16>, vector<48x32xf32> -> vector<48x32xf32>
    %149 = arith.addf %122, %148 : vector<48x32xf32>
    %150 = arith.addf %4, %149 : vector<48x32xf32>
    %c0_57 = arith.constant 0 : index
    %c0_58 = arith.constant 0 : index
    %c0_59 = arith.constant 0 : index
    %151 = vector.load %arg10[%c0_57, %c0_58, %c0_59] : memref<1x1x32xf32, #tpu.memory_space<vmem>>, vector<1x1x32xf32>
    %152 = vector.shape_cast %151 : vector<1x1x32xf32> to vector<1x32xf32>
    %153 = vector.broadcast %152 : vector<1x32xf32> to vector<48x32xf32>
    %154 = arith.addf %150, %153 : vector<48x32xf32>
    %c0_60 = arith.constant 0 : index
    %c0_61 = arith.constant 0 : index
    %c0_62 = arith.constant 0 : index
    %155 = vector.load %arg11[%c0_60, %c0_61, %c0_62] : memref<1x1x32xf32, #tpu.memory_space<vmem>>, vector<1x1x32xf32>
    %156 = vector.shape_cast %155 : vector<1x1x32xf32> to vector<1x32xf32>
    %c0_63 = arith.constant 0 : index
    %c0_64 = arith.constant 0 : index
    %c0_65 = arith.constant 0 : index
    %157 = vector.load %arg12[%c0_63, %c0_64, %c0_65] : memref<1x1x32xf32, #tpu.memory_space<vmem>>, vector<1x1x32xf32>
    %158 = vector.shape_cast %157 : vector<1x1x32xf32> to vector<1x32xf32>
    %cst_66 = arith.constant dense<0.000000e+00> : vector<48xf32>
    %159 = vector.multi_reduction <add>, %154, %cst_66 [1] : vector<48x32xf32> to vector<48xf32>
    %160 = vector.shape_cast %159 : vector<48xf32> to vector<48x1xf32>
    %cst_67 = arith.constant 3.200000e+01 : f32
    %161 = vector.broadcast %cst_67 : f32 to vector<48x1xf32>
    %162 = arith.divf %160, %161 : vector<48x1xf32>
    %163 = vector.broadcast %162 : vector<48x1xf32> to vector<48x32xf32>
    %164 = arith.subf %154, %163 : vector<48x32xf32>
    %165 = arith.mulf %164, %164 : vector<48x32xf32>
    %cst_68 = arith.constant dense<0.000000e+00> : vector<48xf32>
    %166 = vector.multi_reduction <add>, %165, %cst_68 [1] : vector<48x32xf32> to vector<48xf32>
    %167 = vector.shape_cast %166 : vector<48xf32> to vector<48x1xf32>
    %cst_69 = arith.constant 3.200000e+01 : f32
    %168 = vector.broadcast %cst_69 : f32 to vector<48x1xf32>
    %169 = arith.divf %167, %168 : vector<48x1xf32>
    %170 = vector.broadcast %162 : vector<48x1xf32> to vector<48x32xf32>
    %171 = arith.subf %154, %170 : vector<48x32xf32>
    %cst_70 = arith.constant 9.99999974E-6 : f32
    %172 = vector.broadcast %cst_70 : f32 to vector<48x1xf32>
    %173 = arith.addf %169, %172 : vector<48x1xf32>
    %174 = math.rsqrt %173 : vector<48x1xf32>
    %175 = vector.broadcast %174 : vector<48x1xf32> to vector<48x32xf32>
    %176 = arith.mulf %171, %175 : vector<48x32xf32>
    %177 = vector.broadcast %156 : vector<1x32xf32> to vector<48x32xf32>
    %178 = arith.mulf %176, %177 : vector<48x32xf32>
    %179 = vector.broadcast %158 : vector<1x32xf32> to vector<48x32xf32>
    %180 = arith.addf %178, %179 : vector<48x32xf32>
    %181 = arith.truncf %180 : vector<48x32xf32> to vector<48x32xbf16>
    %c0_71 = arith.constant 0 : index
    %c0_72 = arith.constant 0 : index
    %c0_73 = arith.constant 0 : index
    %182 = vector.load %arg13[%c0_71, %c0_72, %c0_73] : memref<1x32x128xbf16, #tpu.memory_space<vmem>>, vector<1x32x128xbf16>
    %183 = vector.shape_cast %182 : vector<1x32x128xbf16> to vector<32x128xbf16>
    %cst_74 = arith.constant dense<0.000000e+00> : vector<48x128xf32>
    %184 = tpu.matmul %181, %183, %cst_74 {dimension_numbers = #tpu.dot_dimension_numbers<[1], [0], [0], [1], [0, 0, 1, 1], [], []>} : vector<48x32xbf16>, vector<32x128xbf16>, vector<48x128xf32> -> vector<48x128xf32>
    %c0_75 = arith.constant 0 : index
    %c0_76 = arith.constant 0 : index
    %c0_77 = arith.constant 0 : index
    %185 = vector.load %arg14[%c0_75, %c0_76, %c0_77] : memref<1x1x128xf32, #tpu.memory_space<vmem>>, vector<1x1x128xf32>
    %186 = vector.shape_cast %185 : vector<1x1x128xf32> to vector<1x128xf32>
    %187 = vector.broadcast %186 : vector<1x128xf32> to vector<48x128xf32>
    %188 = arith.addf %184, %187 : vector<48x128xf32>
    %189 = arith.truncf %188 : vector<48x128xf32> to vector<48x128xbf16>
    %cst_78 = arith.constant -1.703130e+00 : bf16
    %190 = vector.broadcast %cst_78 : bf16 to vector<48x128xbf16>
    %191 = arith.mulf %189, %190 : vector<48x128xbf16>
    %192 = math.exp %191 : vector<48x128xbf16>
    %cst_79 = arith.constant 1.000000e+00 : bf16
    %193 = vector.broadcast %cst_79 : bf16 to vector<48x128xbf16>
    %194 = arith.addf %193, %192 : vector<48x128xbf16>
    %cst_80 = arith.constant 1.000000e+00 : bf16
    %195 = vector.broadcast %cst_80 : bf16 to vector<48x128xbf16>
    %196 = arith.divf %195, %194 : vector<48x128xbf16>
    %197 = arith.mulf %189, %196 : vector<48x128xbf16>
    %c0_81 = arith.constant 0 : index
    %c0_82 = arith.constant 0 : index
    %c0_83 = arith.constant 0 : index
    %198 = vector.load %arg15[%c0_81, %c0_82, %c0_83] : memref<1x128x32xbf16, #tpu.memory_space<vmem>>, vector<1x128x32xbf16>
    %199 = vector.shape_cast %198 : vector<1x128x32xbf16> to vector<128x32xbf16>
    %cst_84 = arith.constant dense<0.000000e+00> : vector<48x32xf32>
    %200 = tpu.matmul %197, %199, %cst_84 {dimension_numbers = #tpu.dot_dimension_numbers<[1], [0], [0], [1], [0, 0, 1, 1], [], []>} : vector<48x128xbf16>, vector<128x32xbf16>, vector<48x32xf32> -> vector<48x32xf32>
    %c0_85 = arith.constant 0 : index
    %c0_86 = arith.constant 0 : index
    %c0_87 = arith.constant 0 : index
    %201 = vector.load %arg16[%c0_85, %c0_86, %c0_87] : memref<1x1x32xf32, #tpu.memory_space<vmem>>, vector<1x1x32xf32>
    %202 = vector.shape_cast %201 : vector<1x1x32xf32> to vector<1x32xf32>
    %203 = vector.broadcast %202 : vector<1x32xf32> to vector<48x32xf32>
    %204 = arith.addf %200, %203 : vector<48x32xf32>
    %205 = arith.addf %154, %204 : vector<48x32xf32>
    %206 = vector.shape_cast %205 : vector<48x32xf32> to vector<2x24x32xf32>
    %c0_88 = arith.constant 0 : index
    %c0_89 = arith.constant 0 : index
    %c0_90 = arith.constant 0 : index
    %207 = vector.load %arg23[%c0_88, %c0_89, %c0_90] : memref<2x24x32xf32, #tpu.memory_space<vmem>>, vector<2x24x32xf32>
    tpu.vector_store %arg23[%c0_88, %c0_89, %c0_90], %206 {strides = array<i32>} : memref<2x24x32xf32, #tpu.memory_space<vmem>>, vector<2x24x32xf32>,
    %c10_i32 = arith.constant 10 : i32
    %208 = arith.cmpi eq, %arg1, %c10_i32 : i32
    %209 = arith.extui %208 : i1 to i32
    %c0_i32_91 = arith.constant 0 : i32
    %210 = arith.cmpi ne, %209, %c0_i32_91 : i32
    scf.if %210 {
      %214 = vector.shape_cast %205 : vector<48x32xf32> to vector<2x24x32xf32>
      %c0_93 = arith.constant 0 : index
      %c0_94 = arith.constant 0 : index
      %c0_95 = arith.constant 0 : index
      %215 = vector.load %arg20[%c0_93, %c0_94, %c0_95] : memref<2x24x32xf32, #tpu.memory_space<vmem>>, vector<2x24x32xf32>
      tpu.vector_store %arg20[%c0_93, %c0_94, %c0_95], %214 {strides = array<i32>} : memref<2x24x32xf32, #tpu.memory_space<vmem>>, vector<2x24x32xf32>,
    } else {
    }
    %c11_i32 = arith.constant 11 : i32
    %211 = arith.cmpi eq, %arg1, %c11_i32 : i32
    %212 = arith.extui %211 : i1 to i32
    %c0_i32_92 = arith.constant 0 : i32
    %213 = arith.cmpi ne, %212, %c0_i32_92 : i32
    scf.if %213 {
      %c0_93 = arith.constant 0 : index
      %c0_94 = arith.constant 0 : index
      %214 = vector.load %arg17[%c0_93, %c0_94] : memref<1x32xf32, #tpu.memory_space<vmem>>, vector<1x32xf32>
      %c0_95 = arith.constant 0 : index
      %c0_96 = arith.constant 0 : index
      %215 = vector.load %arg18[%c0_95, %c0_96] : memref<1x32xf32, #tpu.memory_space<vmem>>, vector<1x32xf32>
      %cst_97 = arith.constant dense<0.000000e+00> : vector<48xf32>
      %216 = vector.multi_reduction <add>, %205, %cst_97 [1] : vector<48x32xf32> to vector<48xf32>
      %217 = vector.shape_cast %216 : vector<48xf32> to vector<48x1xf32>
      %cst_98 = arith.constant 3.200000e+01 : f32
      %218 = vector.broadcast %cst_98 : f32 to vector<48x1xf32>
      %219 = arith.divf %217, %218 : vector<48x1xf32>
      %220 = vector.broadcast %219 : vector<48x1xf32> to vector<48x32xf32>
      %221 = arith.subf %205, %220 : vector<48x32xf32>
      %222 = arith.mulf %221, %221 : vector<48x32xf32>
      %cst_99 = arith.constant dense<0.000000e+00> : vector<48xf32>
      %223 = vector.multi_reduction <add>, %222, %cst_99 [1] : vector<48x32xf32> to vector<48xf32>
      %224 = vector.shape_cast %223 : vector<48xf32> to vector<48x1xf32>
      %cst_100 = arith.constant 3.200000e+01 : f32
      %225 = vector.broadcast %cst_100 : f32 to vector<48x1xf32>
      %226 = arith.divf %224, %225 : vector<48x1xf32>
      %227 = vector.broadcast %219 : vector<48x1xf32> to vector<48x32xf32>
      %228 = arith.subf %205, %227 : vector<48x32xf32>
      %cst_101 = arith.constant 9.99999974E-6 : f32
      %229 = vector.broadcast %cst_101 : f32 to vector<48x1xf32>
      %230 = arith.addf %226, %229 : vector<48x1xf32>
      %231 = math.rsqrt %230 : vector<48x1xf32>
      %232 = vector.broadcast %231 : vector<48x1xf32> to vector<48x32xf32>
      %233 = arith.mulf %228, %232 : vector<48x32xf32>
      %234 = vector.broadcast %214 : vector<1x32xf32> to vector<48x32xf32>
      %235 = arith.mulf %233, %234 : vector<48x32xf32>
      %236 = vector.broadcast %215 : vector<1x32xf32> to vector<48x32xf32>
      %237 = arith.addf %235, %236 : vector<48x32xf32>
      %238 = vector.shape_cast %237 : vector<48x32xf32> to vector<2x24x32xf32>
      %c0_102 = arith.constant 0 : index
      %c0_103 = arith.constant 0 : index
      %c0_104 = arith.constant 0 : index
      %239 = vector.load %arg21[%c0_102, %c0_103, %c0_104] : memref<2x24x32xf32, #tpu.memory_space<vmem>>, vector<2x24x32xf32>
      tpu.vector_store %arg21[%c0_102, %c0_103, %c0_104], %238 {strides = array<i32>} : memref<2x24x32xf32, #tpu.memory_space<vmem>>, vector<2x24x32xf32>,
      %240 = arith.truncf %237 : vector<48x32xf32> to vector<48x32xbf16>
      %c0_105 = arith.constant 0 : index
      %c0_106 = arith.constant 0 : index
      %241 = vector.load %arg19[%c0_105, %c0_106] : memref<32x16xbf16, #tpu.memory_space<vmem>>, vector<32x16xbf16>
      %cst_107 = arith.constant dense<0.000000e+00> : vector<48x16xf32>
      %242 = tpu.matmul %240, %241, %cst_107 {dimension_numbers = #tpu.dot_dimension_numbers<[1], [0], [0], [1], [0, 0, 1, 1], [], []>} : vector<48x32xbf16>, vector<32x16xbf16>, vector<48x16xf32> -> vector<48x16xf32>
      %243 = vector.shape_cast %242 : vector<48x16xf32> to vector<2x24x16xf32>
      %c0_108 = arith.constant 0 : index
      %c0_109 = arith.constant 0 : index
      %c0_110 = arith.constant 0 : index
      %244 = vector.load %arg22[%c0_108, %c0_109, %c0_110] : memref<2x24x16xf32, #tpu.memory_space<vmem>>, vector<2x24x16xf32>
      tpu.vector_store %arg22[%c0_108, %c0_109, %c0_110], %243 {strides = array<i32>} : memref<2x24x16xf32, #tpu.memory_space<vmem>>, vector<2x24x16xf32>,
    } else {
    }
    return
  }
  func.func @transform_0(%arg0: i32, %arg1: i32) -> (i32, i32, i32) {
    %c0_i32 = arith.constant 0 : i32
    %c0_i32_0 = arith.constant 0 : i32
    %c0_i32_1 = arith.constant 0 : i32
    return %arg0, %c0_i32, %c0_i32_0 : i32, i32, i32
  }
  func.func @transform_1(%arg0: i32, %arg1: i32) -> (i32, i32) {
    %c0_i32 = arith.constant 0 : i32
    %c0_i32_0 = arith.constant 0 : i32
    %c0_i32_1 = arith.constant 0 : i32
    return %c0_i32, %c0_i32_0 : i32, i32
  }
  func.func @transform_2(%arg0: i32, %arg1: i32) -> (i32, i32) {
    %c0_i32 = arith.constant 0 : i32
    %c0_i32_0 = arith.constant 0 : i32
    %c0_i32_1 = arith.constant 0 : i32
    return %c0_i32, %c0_i32_0 : i32, i32
  }
  func.func @transform_3(%arg0: i32, %arg1: i32) -> (i32, i32, i32) {
    %c0_i32 = arith.constant 0 : i32
    %c0_i32_0 = arith.constant 0 : i32
    %c0_i32_1 = arith.constant 0 : i32
    return %arg1, %c0_i32, %c0_i32_0 : i32, i32, i32
  }
  func.func @transform_4(%arg0: i32, %arg1: i32) -> (i32, i32, i32) {
    %c0_i32 = arith.constant 0 : i32
    %c0_i32_0 = arith.constant 0 : i32
    %c0_i32_1 = arith.constant 0 : i32
    return %arg1, %c0_i32, %c0_i32_0 : i32, i32, i32
  }
  func.func @transform_5(%arg0: i32, %arg1: i32) -> (i32, i32, i32) {
    %c0_i32 = arith.constant 0 : i32
    %c0_i32_0 = arith.constant 0 : i32
    %c0_i32_1 = arith.constant 0 : i32
    return %arg1, %c0_i32, %c0_i32_0 : i32, i32, i32
  }
  func.func @transform_6(%arg0: i32, %arg1: i32) -> (i32, i32, i32) {
    %c0_i32 = arith.constant 0 : i32
    %c0_i32_0 = arith.constant 0 : i32
    %c0_i32_1 = arith.constant 0 : i32
    return %arg1, %c0_i32, %c0_i32_0 : i32, i32, i32
  }
  func.func @transform_7(%arg0: i32, %arg1: i32) -> (i32, i32, i32, i32) {
    %c0_i32 = arith.constant 0 : i32
    %c0_i32_0 = arith.constant 0 : i32
    %c0_i32_1 = arith.constant 0 : i32
    %c0_i32_2 = arith.constant 0 : i32
    return %arg1, %c0_i32, %c0_i32_0, %c0_i32_1 : i32, i32, i32, i32
  }
  func.func @transform_8(%arg0: i32, %arg1: i32) -> (i32, i32, i32) {
    %c0_i32 = arith.constant 0 : i32
    %c0_i32_0 = arith.constant 0 : i32
    %c0_i32_1 = arith.constant 0 : i32
    return %arg1, %c0_i32, %c0_i32_0 : i32, i32, i32
  }
  func.func @transform_9(%arg0: i32, %arg1: i32) -> (i32, i32, i32) {
    %c0_i32 = arith.constant 0 : i32
    %c0_i32_0 = arith.constant 0 : i32
    %c0_i32_1 = arith.constant 0 : i32
    return %arg1, %c0_i32, %c0_i32_0 : i32, i32, i32
  }
  func.func @transform_10(%arg0: i32, %arg1: i32) -> (i32, i32, i32) {
    %c0_i32 = arith.constant 0 : i32
    %c0_i32_0 = arith.constant 0 : i32
    %c0_i32_1 = arith.constant 0 : i32
    return %arg1, %c0_i32, %c0_i32_0 : i32, i32, i32
  }
  func.func @transform_11(%arg0: i32, %arg1: i32) -> (i32, i32, i32) {
    %c0_i32 = arith.constant 0 : i32
    %c0_i32_0 = arith.constant 0 : i32
    %c0_i32_1 = arith.constant 0 : i32
    return %arg1, %c0_i32, %c0_i32_0 : i32, i32, i32
  }
  func.func @transform_12(%arg0: i32, %arg1: i32) -> (i32, i32, i32) {
    %c0_i32 = arith.constant 0 : i32
    %c0_i32_0 = arith.constant 0 : i32
    %c0_i32_1 = arith.constant 0 : i32
    return %arg1, %c0_i32, %c0_i32_0 : i32, i32, i32
  }
  func.func @transform_13(%arg0: i32, %arg1: i32) -> (i32, i32, i32) {
    %c0_i32 = arith.constant 0 : i32
    %c0_i32_0 = arith.constant 0 : i32
    %c0_i32_1 = arith.constant 0 : i32
    return %arg1, %c0_i32, %c0_i32_0 : i32, i32, i32
  }
  func.func @transform_14(%arg0: i32, %arg1: i32) -> (i32, i32, i32) {
    %c0_i32 = arith.constant 0 : i32
    %c0_i32_0 = arith.constant 0 : i32
    %c0_i32_1 = arith.constant 0 : i32
    return %arg1, %c0_i32, %c0_i32_0 : i32, i32, i32
  }
  func.func @transform_15(%arg0: i32, %arg1: i32) -> (i32, i32) {
    %c0_i32 = arith.constant 0 : i32
    %c0_i32_0 = arith.constant 0 : i32
    %c0_i32_1 = arith.constant 0 : i32
    return %c0_i32, %c0_i32_0 : i32, i32
  }
  func.func @transform_16(%arg0: i32, %arg1: i32) -> (i32, i32) {
    %c0_i32 = arith.constant 0 : i32
    %c0_i32_0 = arith.constant 0 : i32
    %c0_i32_1 = arith.constant 0 : i32
    return %c0_i32, %c0_i32_0 : i32, i32
  }
  func.func @transform_17(%arg0: i32, %arg1: i32) -> (i32, i32) {
    %c0_i32 = arith.constant 0 : i32
    %c0_i32_0 = arith.constant 0 : i32
    %c0_i32_1 = arith.constant 0 : i32
    return %c0_i32, %c0_i32_0 : i32, i32
  }
  func.func @transform_18(%arg0: i32, %arg1: i32) -> (i32, i32, i32) {
    %c0_i32 = arith.constant 0 : i32
    %c0_i32_0 = arith.constant 0 : i32
    %c0_i32_1 = arith.constant 0 : i32
    return %arg0, %c0_i32, %c0_i32_0 : i32, i32, i32
  }
  func.func @transform_19(%arg0: i32, %arg1: i32) -> (i32, i32, i32) {
    %c0_i32 = arith.constant 0 : i32
    %c0_i32_0 = arith.constant 0 : i32
    %c0_i32_1 = arith.constant 0 : i32
    return %arg0, %c0_i32, %c0_i32_0 : i32, i32, i32
  }
  func.func @transform_20(%arg0: i32, %arg1: i32) -> (i32, i32, i32) {
    %c0_i32 = arith.constant 0 : i32
    %c0_i32_0 = arith.constant 0 : i32
    %c0_i32_1 = arith.constant 0 : i32
    return %arg0, %c0_i32, %c0_i32_0 : i32, i32, i32
  }
}

</mosaic_0001>

<llo_original>
// kernel: vision_transformer_forward.2
$region0: #{vision_transformer_forward.2}
  #allocation0 [shape = 'u32[]', space=smem, size = 0x4, offset = 0x4, fixed_abs, tag = 'smem constant byte address 0x4 - core index']
  #allocation1 [shape = 'u32[144,128]{1,0:T(1,128)}', space=vmem, size = 0x12000, scoped, tag = 'internal scratch']
  #allocation2 [shape = 'f32[32,128]{1,0:T(8,128)}', space=vmem, size = 0x4000, scoped, tag = 'scratch operand']
  %s0 = inlined_call_operand.vmem [shape: bf16[32,128], index: 0, kind: input, shape index: {}]
  %s1 = inlined_call_operand.vmem [shape: bf16[128,128], index: 1, kind: input, shape index: {}]
  %s2 = inlined_call_operand.vmem [shape: f32[32,128], index: 2, kind: output, shape index: {}]
  %s3 = sld [smem:[#allocation0]]
  $region26: #{vision_transformer_forward.2} parent=0
    _
  %s5 = ssub.s32 1, %s3
  %s6 = scalar_select 0, %s5, %s3
  // Predicated region
  $region2: #{vision_transformer_forward.2} parent=0 // pred_check
    _
  $region3: #{vision_transformer_forward.2} parent=0 // pred_check_branch
    %8 = sbr.rel (0) target = $region5
  $region4: #{vision_transformer_forward.2} parent=0 // pred_region
    _
  $region5: #{vision_transformer_forward.2} parent=0 // pred_fallthru
    _
  // Predicated region
  $region6: #{vision_transformer_forward.2} parent=0 // pred_check
    _
  $region7: #{vision_transformer_forward.2} parent=0 // pred_check_branch
    %10 = sbr.rel (0) target = $region9
  $region8: #{vision_transformer_forward.2} parent=0 // pred_region
    _
  $region9: #{vision_transformer_forward.2} parent=0 // pred_fallthru
    _
  %p12 = scmp.eq.s32.totalorder 0, 0
  // Predicated region
  $region10: #{vision_transformer_forward.2} parent=0 // pred_check
    %p13 = pneg %p12
  $region11: #{vision_transformer_forward.2} parent=0 // pred_check_branch
    %15 = sbr.rel (%p13) target = $region13
  $region12: #{vision_transformer_forward.2} parent=0 // pred_region
    %16 = vst [vmem:[#allocation2] sm:$0xff] 0.0
    %17 = vst [vmem:[#allocation2 + $0x8] sm:$0xff] 0.0
    %18 = vst [vmem:[#allocation2 + $0x10] sm:$0xff] 0.0
    %19 = vst [vmem:[#allocation2 + $0x18] sm:$0xff] 0.0
  $region13: #{vision_transformer_forward.2} parent=0 // pred_fallthru
    _
  %v20 = vld [vmem:[#allocation2] sm:$0xff]
  %v21 = vld [vmem:[#allocation2 + $0x8] sm:$0xff]
  %v22 = vld [vmem:[#allocation2 + $0x10] sm:$0xff]
  %v23 = vld [vmem:[#allocation2 + $0x18] sm:$0xff]
  %v24 = vld [vmem:[%s0] sm:$0xf]
  %v25 = vld [vmem:[%s0 + $0x4] sm:$0xf]
  %v26 = vld [vmem:[%s0 + $0x8] sm:$0xf]
  %v27 = vld [vmem:[%s0 + $0xc] sm:$0xf]
  %v28 = vld [vmem:[%s1] sm:$0xf]
  %v29 = vld [vmem:[%s1 + $0x4] sm:$0xf]
  %v30 = vld [vmem:[%s1 + $0x8] sm:$0xf]
  %v31 = vld [vmem:[%s1 + $0xc] sm:$0xf]
  %v32 = vld [vmem:[%s1 + $0x10] sm:$0xf]
  %v33 = vld [vmem:[%s1 + $0x14] sm:$0xf]
  %v34 = vld [vmem:[%s1 + $0x18] sm:$0xf]
  %v35 = vld [vmem:[%s1 + $0x1c] sm:$0xf]
  %v36 = vld [vmem:[%s1 + $0x20] sm:$0xf]
  %v37 = vld [vmem:[%s1 + $0x24] sm:$0xf]
  %v38 = vld [vmem:[%s1 + $0x28] sm:$0xf]
  %v39 = vld [vmem:[%s1 + $0x2c] sm:$0xf]
  %v40 = vld [vmem:[%s1 + $0x30] sm:$0xf]
  %v41 = vld [vmem:[%s1 + $0x34] sm:$0xf]
  %v42 = vld [vmem:[%s1 + $0x38] sm:$0xf]
  %v43 = vld [vmem:[%s1 + $0x3c] sm:$0xf]
  %v48 = vunpack.c.l.b16 %v24
  %v49 = vunpack.c.l.b16 %v25
  %v50 = vunpack.c.l.b16 %v26
  %v51 = vunpack.c.l.b16 %v27
  %v52 = vpack.c.b16 %v49, %v48
  %v53 = vpack.c.b16 %v51, %v50
  %v72 = vunpack.c.l.b16 %v28
  %v73 = vunpack.c.l.b16 %v29
  %v74 = vunpack.c.l.b16 %v30
  %v75 = vunpack.c.l.b16 %v31
  %v76 = vunpack.c.l.b16 %v32
  %v77 = vunpack.c.l.b16 %v33
  %v78 = vunpack.c.l.b16 %v34
  %v79 = vunpack.c.l.b16 %v35
  %v80 = vunpack.c.l.b16 %v36
  %v81 = vunpack.c.l.b16 %v37
  %v82 = vunpack.c.l.b16 %v38
  %v83 = vunpack.c.l.b16 %v39
  %v84 = vunpack.c.l.b16 %v40
  %v85 = vunpack.c.l.b16 %v41
  %v86 = vunpack.c.l.b16 %v42
  %v87 = vunpack.c.l.b16 %v43
  %v88 = vpack.c.b16 %v73, %v72
  %v89 = vpack.c.b16 %v75, %v74
  %v90 = vpack.c.b16 %v77, %v76
  %v91 = vpack.c.b16 %v79, %v78
  %v92 = vpack.c.b16 %v81, %v80
  %v93 = vpack.c.b16 %v83, %v82
  %v94 = vpack.c.b16 %v85, %v84
  %v95 = vpack.c.b16 %v87, %v86
  %104 = vmatprep.subr.bf16.mxu0 0
  %105 = vmatpush1.bf16.msra.mxu0 %v95
  %106 = vmatprep.subr.bf16.mxu0 0
  %107 = vmatpush1.bf16.msra.mxu0 %v94
  %108 = vmatprep.subr.bf16.mxu0 0
  %109 = vmatpush1.bf16.msra.mxu0 %v93
  %110 = vmatprep.subr.bf16.mxu0 0
  %111 = vmatpush1.bf16.msra.mxu0 %v92
  %112 = vmatprep.subr.bf16.mxu0 0
  %113 = vmatpush1.bf16.msra.mxu0 %v91
  %114 = vmatprep.subr.bf16.mxu0 0
  %115 = vmatpush1.bf16.msra.mxu0 %v90
  %116 = vmatprep.subr.bf16.mxu0 0
  %117 = vmatpush1.bf16.msra.mxu0 %v89
  %118 = vmatprep.subr.bf16.mxu0 0
  %119 = vmatpush1.bf16.msra.mxu0 %v88
  %120 = vmatprep.subr.bf16.mxu0 0
  %121 = vmatpush2.bf16.msra.mxu0 0
  %122 = vmatprep.subr.bf16.mxu0 0
  %123 = vmatpush2.bf16.msra.mxu0 0
  %124 = vmatprep.subr.bf16.mxu0 0
  %125 = vmatpush2.bf16.msra.mxu0 0
  %126 = vmatprep.subr.bf16.mxu0 0
  %127 = vmatpush2.bf16.msra.mxu0 0
  %128 = vmatprep.subr.bf16.mxu0 0
  %129 = vmatpush2.bf16.msra.mxu0 0
  %130 = vmatprep.subr.bf16.mxu0 0
  %131 = vmatpush2.bf16.msra.mxu0 0
  %132 = vmatprep.subr.bf16.mxu0 0
  %133 = vmatpush2.bf16.msra.mxu0 0
  %134 = vmatprep.subr.bf16.mxu0 0
  %135 = vmatpush2.bf16.msra.mxu0 0
  %136 = vmatprep.mubr.bf16.mxu0 0
  %137 = vmatmul.mubr.bf16.gmra.mxu0 %v52
  %v138 = vpop.f32.mrf.mxu0
  %v139 = vadd.f32 0.0, %v138
  %v140 = vpop.f32.mrf.mxu0
  %v141 = vpop.f32.mrf.mxu0
  %v142 = vadd.f32 0.0, %v141
  %v143 = vpop.f32.mrf.mxu0
  %144 = vmatprep.mubr.bf16.mxu0 0
  %145 = vmatmul.mubr.bf16.gmra.mxu0 %v53
  %v146 = vpop.f32.mrf.mxu0
  %v147 = vadd.f32 0.0, %v146
  %v148 = vpop.f32.mrf.mxu0
  %v149 = vpop.f32.mrf.mxu0
  %v150 = vadd.f32 0.0, %v149
  %v151 = vpop.f32.mrf.mxu0
  %152 = vdwg.mxu0
  %v153 = vadd.f32 %v20, %v139
  %v154 = vadd.f32 %v21, %v142
  %v155 = vadd.f32 %v22, %v147
  %v156 = vadd.f32 %v23, %v150
  %157 = vst [vmem:[#allocation2] sm:$0xff] %v153
  %158 = vst [vmem:[#allocation2 + $0x8] sm:$0xff] %v154
  %159 = vst [vmem:[#allocation2 + $0x10] sm:$0xff] %v155
  %160 = vst [vmem:[#allocation2 + $0x18] sm:$0xff] %v156
  // Predicated region
  $region14: #{vision_transformer_forward.2} parent=0 // pred_check
    %p161 = pneg %p12
  $region15: #{vision_transformer_forward.2} parent=0 // pred_check_branch
    %163 = sbr.rel (%p161) target = $region17
  $region16: #{vision_transformer_forward.2} parent=0 // pred_region
    %v164 = vld [vmem:[#allocation2] sm:$0xff]
    %v165 = vld [vmem:[#allocation2 + $0x8] sm:$0xff]
    %v166 = vld [vmem:[#allocation2 + $0x10] sm:$0xff]
    %v167 = vld [vmem:[#allocation2 + $0x18] sm:$0xff]
    %168 = vst [vmem:[%s2] sm:$0xff] %v164
    %169 = vst [vmem:[%s2 + $0x8] sm:$0xff] %v165
    %170 = vst [vmem:[%s2 + $0x10] sm:$0xff] %v166
    %171 = vst [vmem:[%s2 + $0x18] sm:$0xff] %v167
  $region17: #{vision_transformer_forward.2} parent=0 // pred_fallthru
    _
  // Predicated region
  $region18: #{vision_transformer_forward.2} parent=0 // pred_check
    _
  $region19: #{vision_transformer_forward.2} parent=0 // pred_check_branch
    %173 = sbr.rel (0) target = $region21
  $region20: #{vision_transformer_forward.2} parent=0 // pred_region
    _
  $region21: #{vision_transformer_forward.2} parent=0 // pred_fallthru
    _
  // Predicated region
  $region22: #{vision_transformer_forward.2} parent=0 // pred_check
    _
  $region23: #{vision_transformer_forward.2} parent=0 // pred_check_branch
    %175 = sbr.rel (0) target = $region25
  $region24: #{vision_transformer_forward.2} parent=0 // pred_region
    _
  $region25: #{vision_transformer_forward.2} parent=0 // pred_fallthru
    _

// kernel: vision_transformer_forward.3
$region0: #{vision_transformer_forward.3}
  #allocation0 [shape = 'u32[]', space=smem, size = 0x4, offset = 0x4, fixed_abs, tag = 'smem constant byte address 0x4 - core index']
  #allocation1 [shape = 'u32[144,128]{1,0:T(1,128)}', space=vmem, size = 0x12000, scoped, tag = 'internal scratch']
  #allocation2 [shape = 'f32[2,24,32]{2,1,0:T(8,128)}', space=vmem, size = 0x6000, scoped, tag = 'scratch operand']
  %s0 = inlined_call_operand.vmem [shape: f32[2,24,32], index: 0, kind: input, shape index: {}]
  %s1 = inlined_call_operand.vmem [shape: f32[1,32], index: 1, kind: input, shape index: {}]
  %s2 = inlined_call_operand.vmem [shape: f32[1,32], index: 2, kind: input, shape index: {}]
  %s3 = inlined_call_operand.vmem [shape: f32[12,1,32], index: 3, kind: input, shape index: {}]
  %s4 = inlined_call_operand.vmem [shape: f32[12,1,32], index: 4, kind: input, shape index: {}]
  %s5 = inlined_call_operand.vmem [shape: bf16[12,32,96], index: 5, kind: input, shape index: {}]
  %s6 = inlined_call_operand.vmem [shape: f32[12,1,96], index: 6, kind: input, shape index: {}]
  %s7 = inlined_call_operand.vmem [shape: bf16[12,4,8,32], index: 7, kind: input, shape index: {}]
  %s8 = inlined_call_operand.vmem [shape: f32[12,1,32], index: 8, kind: input, shape index: {}]
  %s9 = inlined_call_operand.vmem [shape: f32[12,1,32], index: 9, kind: input, shape index: {}]
  %s10 = inlined_call_operand.vmem [shape: f32[12,1,32], index: 10, kind: input, shape index: {}]
  %s11 = inlined_call_operand.vmem [shape: bf16[12,32,128], index: 11, kind: input, shape index: {}]
  %s12 = inlined_call_operand.vmem [shape: f32[12,1,128], index: 12, kind: input, shape index: {}]
  %s13 = inlined_call_operand.vmem [shape: bf16[12,128,32], index: 13, kind: input, shape index: {}]
  %s14 = inlined_call_operand.vmem [shape: f32[12,1,32], index: 14, kind: input, shape index: {}]
  %s15 = inlined_call_operand.vmem [shape: f32[1,32], index: 15, kind: input, shape index: {}]
  %s16 = inlined_call_operand.vmem [shape: f32[1,32], index: 16, kind: input, shape index: {}]
  %s17 = inlined_call_operand.vmem [shape: bf16[32,16], index: 17, kind: input, shape index: {}]
  %s18 = inlined_call_operand.vmem [shape: f32[2,24,32], index: 18, kind: output, shape index: {0}]
  %s19 = inlined_call_operand.vmem [shape: f32[2,24,32], index: 19, kind: output, shape index: {1}]
  %s20 = inlined_call_operand.vmem [shape: f32[2,24,16], index: 20, kind: output, shape index: {2}]
  %21 = xla_tuple %s18, %s19, %s20
  %s22 = sld [smem:[#allocation0]]
  $region133: #{vision_transformer_forward.3} parent=0
    _
  %s24 = ssub.s32 1, %s22
  %s25 = scalar_select 0, %s24, %s22
  loop: start=0, step=1, limit=14
  $region2: #{vision_transformer_forward.3} parent=0 // loop_pre_header
    _
  $region3: #{vision_transformer_forward.3} parent=0 // loop_header
    %s27 = sphi 0, %s31
    %p28 = scmp.ge.s32.totalorder %s27, 14
    %s34 = sphi 0, %s46
    %s35 = sphi 0, %s42
    %s36 = sphi 0, %s34
    %s37 = sphi 0, %s35
    %s38 = sphi 0, %s36
    %s39 = sphi 0, %s37
    %s49 = sphi 0, %s51
    %s52 = sphi 0, %s49
    %s53 = sphi 0, %s52
    %s69 = sphi 0, %s53
    %s73 = sphi 0, %s73
    %s75 = sphi 0, %s73
    %s76 = sphi 0, %s75
    %s90 = sphi 0, %s76
    %s94 = sphi 0, %s94
    %s96 = sphi 0, %s94
    %s97 = sphi 0, %s96
    %s111 = sphi 0, %s97
    %s117 = sphi 0, %s119
    %s120 = sphi 0, %s117
    %s121 = sphi 0, %s120
    %s137 = sphi 0, %s121
    %s143 = sphi 0, %s145
    %s146 = sphi 0, %s143
    %s147 = sphi 0, %s146
    %s163 = sphi 0, %s147
    %s169 = sphi 0, %s171
    %s172 = sphi 0, %s169
    %s173 = sphi 0, %s172
    %s189 = sphi 0, %s173
    %s195 = sphi 0, %s197
    %s198 = sphi 0, %s195
    %s199 = sphi 0, %s198
    %s215 = sphi 0, %s199
    %s221 = sphi 0, %s223
    %s224 = sphi 0, %s221
    %s225 = sphi 0, %s224
    %s241 = sphi 0, %s225
    %s247 = sphi 0, %s249
    %s250 = sphi 0, %s247
    %s251 = sphi 0, %s250
    %s267 = sphi 0, %s251
    %s273 = sphi 0, %s275
    %s276 = sphi 0, %s273
    %s277 = sphi 0, %s276
    %s293 = sphi 0, %s277
    %s299 = sphi 0, %s301
    %s302 = sphi 0, %s299
    %s303 = sphi 0, %s302
    %s319 = sphi 0, %s303
    %s325 = sphi 0, %s327
    %s328 = sphi 0, %s325
    %s329 = sphi 0, %s328
    %s345 = sphi 0, %s329
    %s351 = sphi 0, %s353
    %s354 = sphi 0, %s351
    %s355 = sphi 0, %s354
    %s371 = sphi 0, %s355
    %s377 = sphi 0, %s379
    %s380 = sphi 0, %s377
    %s381 = sphi 0, %s380
    %s397 = sphi 0, %s381
    %s403 = sphi 0, %s405
    %s406 = sphi 0, %s403
    %s407 = sphi 0, %s406
    %s423 = sphi 0, %s407
    %s427 = sphi 0, %s427
    %s429 = sphi 0, %s427
    %s430 = sphi 0, %s429
    %s444 = sphi 0, %s430
    %s448 = sphi 0, %s448
    %s450 = sphi 0, %s448
    %s451 = sphi 0, %s450
    %s465 = sphi 0, %s451
    %s469 = sphi 0, %s469
    %s471 = sphi 0, %s469
    %s472 = sphi 0, %s471
    %s486 = sphi 0, %s472
    %s492 = sphi 0, %s494
    %s495 = sphi 0, %s492
    %s496 = sphi 0, %s495
    %s512 = sphi 0, %s496
    %s518 = sphi 0, %s520
    %s521 = sphi 0, %s518
    %s522 = sphi 0, %s521
    %s538 = sphi 0, %s522
    %s544 = sphi 0, %s546
    %s547 = sphi 0, %s544
    %s548 = sphi 0, %s547
    %s564 = sphi 0, %s548
  $region4: #{vision_transformer_forward.3} parent=0 // loop_header_branch
    %30 = sbr.rel (%p28) target = $region8
  $region5: #{vision_transformer_forward.3} parent=0 // loop_body
    %s32 = ssub.s32 %s27, 1
    %s33 = ssub.s32 %s27, 2
    %s40 = sadd.s32 1, %s35
    %p41 = scmp.ge.s32.totalorder %s40, 12
    %s42 = scalar_select %p41, 0, %s40
    %s43 = sadd.s32 1, %s34
    %s44 = scalar_select %p41, %s43, %s34
    %p45 = scmp.ge.s32.totalorder %s44, 1
    %s46 = scalar_select %p45, 0, %s44
    %s47 = ssub.s32 %s34, %s46
    %p48 = scmp.eq.s32.totalorder %s47, 0
    %s50 = sadd.s32 %s49, 1
    %s51 = scalar_select %p48, %s49, %s50
    %p54 = pneg %p48
    %p55 = scmp.eq.s32.totalorder %s27, 11
    %p56 = por %p54, %p55
    %p57 = scmp.ne.s32.totalorder %s49, %s52
    %p58 = scmp.eq.s32.totalorder %s27, 0
    %p59 = por %p57, %p58
    %p60 = scmp.ne.s32.totalorder %s49, %s52
    %p61 = scmp.eq.s32.totalorder %s32, 11
    %p62 = por %p60, %p61
    %p63 = scmp.ne.s32.totalorder %s52, %s53
    %p64 = scmp.eq.s32.totalorder %s32, 0
    %p65 = por %p63, %p64
    %p66 = scmp.ne.s32.totalorder %s52, %s53
    %p67 = scmp.eq.s32.totalorder %s33, 11
    %p68 = por %p66, %p67
    %p70 = scmp.ne.s32.totalorder %s53, %s69
    %p71 = scmp.eq.s32.totalorder %s33, 0
    %p72 = por %p70, %p71
    %s74 = sadd.s32 %s73, 1
    %p77 = scmp.eq.s32.totalorder %s27, 11
    %p78 = scmp.ne.s32.totalorder %s73, %s75
    %p79 = scmp.eq.s32.totalorder %s27, 0
    %p80 = por %p78, %p79
    %p81 = scmp.ne.s32.totalorder %s73, %s75
    %p82 = scmp.eq.s32.totalorder %s32, 11
    %p83 = por %p81, %p82
    %p84 = scmp.ne.s32.totalorder %s75, %s76
    %p85 = scmp.eq.s32.totalorder %s32, 0
    %p86 = por %p84, %p85
    %p87 = scmp.ne.s32.totalorder %s75, %s76
    %p88 = scmp.eq.s32.totalorder %s33, 11
    %p89 = por %p87, %p88
    %p91 = scmp.ne.s32.totalorder %s76, %s90
    %p92 = scmp.eq.s32.totalorder %s33, 0
    %p93 = por %p91, %p92
    %s95 = sadd.s32 %s94, 1
    %p98 = scmp.eq.s32.totalorder %s27, 11
    %p99 = scmp.ne.s32.totalorder %s94, %s96
    %p100 = scmp.eq.s32.totalorder %s27, 0
    %p101 = por %p99, %p100
    %p102 = scmp.ne.s32.totalorder %s94, %s96
    %p103 = scmp.eq.s32.totalorder %s32, 11
    %p104 = por %p102, %p103
    %p105 = scmp.ne.s32.totalorder %s96, %s97
    %p106 = scmp.eq.s32.totalorder %s32, 0
    %p107 = por %p105, %p106
    %p108 = scmp.ne.s32.totalorder %s96, %s97
    %p109 = scmp.eq.s32.totalorder %s33, 11
    %p110 = por %p108, %p109
    %p112 = scmp.ne.s32.totalorder %s97, %s111
    %p113 = scmp.eq.s32.totalorder %s33, 0
    %p114 = por %p112, %p113
    %s115 = ssub.s32 %s35, %s42
    %p116 = scmp.eq.s32.totalorder %s115, 0
    %s118 = sadd.s32 %s117, 1
    %s119 = scalar_select %p116, %s117, %s118
    %p122 = pneg %p116
    %p123 = scmp.eq.s32.totalorder %s27, 11
    %p124 = por %p122, %p123
    %p125 = scmp.ne.s32.totalorder %s117, %s120
    %p126 = scmp.eq.s32.totalorder %s27, 0
    %p127 = por %p125, %p126
    %p128 = scmp.ne.s32.totalorder %s117, %s120
    %p129 = scmp.eq.s32.totalorder %s32, 11
    %p130 = por %p128, %p129
    %p131 = scmp.ne.s32.totalorder %s120, %s121
    %p132 = scmp.eq.s32.totalorder %s32, 0
    %p133 = por %p131, %p132
    %p134 = scmp.ne.s32.totalorder %s120, %s121
    %p135 = scmp.eq.s32.totalorder %s33, 11
    %p136 = por %p134, %p135
    %p138 = scmp.ne.s32.totalorder %s121, %s137
    %p139 = scmp.eq.s32.totalorder %s33, 0
    %p140 = por %p138, %p139
    %s141 = ssub.s32 %s35, %s42
    %p142 = scmp.eq.s32.totalorder %s141, 0
    %s144 = sadd.s32 %s143, 1
    %s145 = scalar_select %p142, %s143, %s144
    %p148 = pneg %p142
    %p149 = scmp.eq.s32.totalorder %s27, 11
    %p150 = por %p148, %p149
    %p151 = scmp.ne.s32.totalorder %s143, %s146
    %p152 = scmp.eq.s32.totalorder %s27, 0
    %p153 = por %p151, %p152
    %p154 = scmp.ne.s32.totalorder %s143, %s146
    %p155 = scmp.eq.s32.totalorder %s32, 11
    %p156 = por %p154, %p155
    %p157 = scmp.ne.s32.totalorder %s146, %s147
    %p158 = scmp.eq.s32.totalorder %s32, 0
    %p159 = por %p157, %p158
    %p160 = scmp.ne.s32.totalorder %s146, %s147
    %p161 = scmp.eq.s32.totalorder %s33, 11
    %p162 = por %p160, %p161
    %p164 = scmp.ne.s32.totalorder %s147, %s163
    %p165 = scmp.eq.s32.totalorder %s33, 0
    %p166 = por %p164, %p165
    %s167 = ssub.s32 %s35, %s42
    %p168 = scmp.eq.s32.totalorder %s167, 0
    %s170 = sadd.s32 %s169, 1
    %s171 = scalar_select %p168, %s169, %s170
    %p174 = pneg %p168
    %p175 = scmp.eq.s32.totalorder %s27, 11
    %p176 = por %p174, %p175
    %p177 = scmp.ne.s32.totalorder %s169, %s172
    %p178 = scmp.eq.s32.totalorder %s27, 0
    %p179 = por %p177, %p178
    %p180 = scmp.ne.s32.totalorder %s169, %s172
    %p181 = scmp.eq.s32.totalorder %s32, 11
    %p182 = por %p180, %p181
    %p183 = scmp.ne.s32.totalorder %s172, %s173
    %p184 = scmp.eq.s32.totalorder %s32, 0
    %p185 = por %p183, %p184
    %p186 = scmp.ne.s32.totalorder %s172, %s173
    %p187 = scmp.eq.s32.totalorder %s33, 11
    %p188 = por %p186, %p187
    %p190 = scmp.ne.s32.totalorder %s173, %s189
    %p191 = scmp.eq.s32.totalorder %s33, 0
    %p192 = por %p190, %p191
    %s193 = ssub.s32 %s35, %s42
    %p194 = scmp.eq.s32.totalorder %s193, 0
    %s196 = sadd.s32 %s195, 1
    %s197 = scalar_select %p194, %s195, %s196
    %p200 = pneg %p194
    %p201 = scmp.eq.s32.totalorder %s27, 11
    %p202 = por %p200, %p201
    %p203 = scmp.ne.s32.totalorder %s195, %s198
    %p204 = scmp.eq.s32.totalorder %s27, 0
    %p205 = por %p203, %p204
    %p206 = scmp.ne.s32.totalorder %s195, %s198
    %p207 = scmp.eq.s32.totalorder %s32, 11
    %p208 = por %p206, %p207
    %p209 = scmp.ne.s32.totalorder %s198, %s199
    %p210 = scmp.eq.s32.totalorder %s32, 0
    %p211 = por %p209, %p210
    %p212 = scmp.ne.s32.totalorder %s198, %s199
    %p213 = scmp.eq.s32.totalorder %s33, 11
    %p214 = por %p212, %p213
    %p216 = scmp.ne.s32.totalorder %s199, %s215
    %p217 = scmp.eq.s32.totalorder %s33, 0
    %p218 = por %p216, %p217
    %s219 = ssub.s32 %s35, %s42
    %p220 = scmp.eq.s32.totalorder %s219, 0
    %s222 = sadd.s32 %s221, 1
    %s223 = scalar_select %p220, %s221, %s222
    %p226 = pneg %p220
    %p227 = scmp.eq.s32.totalorder %s27, 11
    %p228 = por %p226, %p227
    %p229 = scmp.ne.s32.totalorder %s221, %s224
    %p230 = scmp.eq.s32.totalorder %s27, 0
    %p231 = por %p229, %p230
    %p232 = scmp.ne.s32.totalorder %s221, %s224
    %p233 = scmp.eq.s32.totalorder %s32, 11
    %p234 = por %p232, %p233
    %p235 = scmp.ne.s32.totalorder %s224, %s225
    %p236 = scmp.eq.s32.totalorder %s32, 0
    %p237 = por %p235, %p236
    %p238 = scmp.ne.s32.totalorder %s224, %s225
    %p239 = scmp.eq.s32.totalorder %s33, 11
    %p240 = por %p238, %p239
    %p242 = scmp.ne.s32.totalorder %s225, %s241
    %p243 = scmp.eq.s32.totalorder %s33, 0
    %p244 = por %p242, %p243
    %s245 = ssub.s32 %s35, %s42
    %p246 = scmp.eq.s32.totalorder %s245, 0
    %s248 = sadd.s32 %s247, 1
    %s249 = scalar_select %p246, %s247, %s248
    %p252 = pneg %p246
    %p253 = scmp.eq.s32.totalorder %s27, 11
    %p254 = por %p252, %p253
    %p255 = scmp.ne.s32.totalorder %s247, %s250
    %p256 = scmp.eq.s32.totalorder %s27, 0
    %p257 = por %p255, %p256
    %p258 = scmp.ne.s32.totalorder %s247, %s250
    %p259 = scmp.eq.s32.totalorder %s32, 11
    %p260 = por %p258, %p259
    %p261 = scmp.ne.s32.totalorder %s250, %s251
    %p262 = scmp.eq.s32.totalorder %s32, 0
    %p263 = por %p261, %p262
    %p264 = scmp.ne.s32.totalorder %s250, %s251
    %p265 = scmp.eq.s32.totalorder %s33, 11
    %p266 = por %p264, %p265
    %p268 = scmp.ne.s32.totalorder %s251, %s267
    %p269 = scmp.eq.s32.totalorder %s33, 0
    %p270 = por %p268, %p269
    %s271 = ssub.s32 %s35, %s42
    %p272 = scmp.eq.s32.totalorder %s271, 0
    %s274 = sadd.s32 %s273, 1
    %s275 = scalar_select %p272, %s273, %s274
    %p278 = pneg %p272
    %p279 = scmp.eq.s32.totalorder %s27, 11
    %p280 = por %p278, %p279
    %p281 = scmp.ne.s32.totalorder %s273, %s276
    %p282 = scmp.eq.s32.totalorder %s27, 0
    %p283 = por %p281, %p282
    %p284 = scmp.ne.s32.totalorder %s273, %s276
    %p285 = scmp.eq.s32.totalorder %s32, 11
    %p286 = por %p284, %p285
    %p287 = scmp.ne.s32.totalorder %s276, %s277
    %p288 = scmp.eq.s32.totalorder %s32, 0
    %p289 = por %p287, %p288
    %p290 = scmp.ne.s32.totalorder %s276, %s277
    %p291 = scmp.eq.s32.totalorder %s33, 11
    %p292 = por %p290, %p291
    %p294 = scmp.ne.s32.totalorder %s277, %s293
    %p295 = scmp.eq.s32.totalorder %s33, 0
    %p296 = por %p294, %p295
    %s297 = ssub.s32 %s35, %s42
    %p298 = scmp.eq.s32.totalorder %s297, 0
    %s300 = sadd.s32 %s299, 1
    %s301 = scalar_select %p298, %s299, %s300
    %p304 = pneg %p298
    %p305 = scmp.eq.s32.totalorder %s27, 11
    %p306 = por %p304, %p305
    %p307 = scmp.ne.s32.totalorder %s299, %s302
    %p308 = scmp.eq.s32.totalorder %s27, 0
    %p309 = por %p307, %p308
    %p310 = scmp.ne.s32.totalorder %s299, %s302
    %p311 = scmp.eq.s32.totalorder %s32, 11
    %p312 = por %p310, %p311
    %p313 = scmp.ne.s32.totalorder %s302, %s303
    %p314 = scmp.eq.s32.totalorder %s32, 0
    %p315 = por %p313, %p314
    %p316 = scmp.ne.s32.totalorder %s302, %s303
    %p317 = scmp.eq.s32.totalorder %s33, 11
    %p318 = por %p316, %p317
    %p320 = scmp.ne.s32.totalorder %s303, %s319
    %p321 = scmp.eq.s32.totalorder %s33, 0
    %p322 = por %p320, %p321
    %s323 = ssub.s32 %s35, %s42
    %p324 = scmp.eq.s32.totalorder %s323, 0
    %s326 = sadd.s32 %s325, 1
    %s327 = scalar_select %p324, %s325, %s326
    %p330 = pneg %p324
    %p331 = scmp.eq.s32.totalorder %s27, 11
    %p332 = por %p330, %p331
    %p333 = scmp.ne.s32.totalorder %s325, %s328
    %p334 = scmp.eq.s32.totalorder %s27, 0
    %p335 = por %p333, %p334
    %p336 = scmp.ne.s32.totalorder %s325, %s328
    %p337 = scmp.eq.s32.totalorder %s32, 11
    %p338 = por %p336, %p337
    %p339 = scmp.ne.s32.totalorder %s328, %s329
    %p340 = scmp.eq.s32.totalorder %s32, 0
    %p341 = por %p339, %p340
    %p342 = scmp.ne.s32.totalorder %s328, %s329
    %p343 = scmp.eq.s32.totalorder %s33, 11
    %p344 = por %p342, %p343
    %p346 = scmp.ne.s32.totalorder %s329, %s345
    %p347 = scmp.eq.s32.totalorder %s33, 0
    %p348 = por %p346, %p347
    %s349 = ssub.s32 %s35, %s42
    %p350 = scmp.eq.s32.totalorder %s349, 0
    %s352 = sadd.s32 %s351, 1
    %s353 = scalar_select %p350, %s351, %s352
    %p356 = pneg %p350
    %p357 = scmp.eq.s32.totalorder %s27, 11
    %p358 = por %p356, %p357
    %p359 = scmp.ne.s32.totalorder %s351, %s354
    %p360 = scmp.eq.s32.totalorder %s27, 0
    %p361 = por %p359, %p360
    %p362 = scmp.ne.s32.totalorder %s351, %s354
    %p363 = scmp.eq.s32.totalorder %s32, 11
    %p364 = por %p362, %p363
    %p365 = scmp.ne.s32.totalorder %s354, %s355
    %p366 = scmp.eq.s32.totalorder %s32, 0
    %p367 = por %p365, %p366
    %p368 = scmp.ne.s32.totalorder %s354, %s355
    %p369 = scmp.eq.s32.totalorder %s33, 11
    %p370 = por %p368, %p369
    %p372 = scmp.ne.s32.totalorder %s355, %s371
    %p373 = scmp.eq.s32.totalorder %s33, 0
    %p374 = por %p372, %p373
    %s375 = ssub.s32 %s35, %s42
    %p376 = scmp.eq.s32.totalorder %s375, 0
    %s378 = sadd.s32 %s377, 1
    %s379 = scalar_select %p376, %s377, %s378
    %p382 = pneg %p376
    %p383 = scmp.eq.s32.totalorder %s27, 11
    %p384 = por %p382, %p383
    %p385 = scmp.ne.s32.totalorder %s377, %s380
    %p386 = scmp.eq.s32.totalorder %s27, 0
    %p387 = por %p385, %p386
    %p388 = scmp.ne.s32.totalorder %s377, %s380
    %p389 = scmp.eq.s32.totalorder %s32, 11
    %p390 = por %p388, %p389
    %p391 = scmp.ne.s32.totalorder %s380, %s381
    %p392 = scmp.eq.s32.totalorder %s32, 0
    %p393 = por %p391, %p392
    %p394 = scmp.ne.s32.totalorder %s380, %s381
    %p395 = scmp.eq.s32.totalorder %s33, 11
    %p396 = por %p394, %p395
    %p398 = scmp.ne.s32.totalorder %s381, %s397
    %p399 = scmp.eq.s32.totalorder %s33, 0
    %p400 = por %p398, %p399
    %s401 = ssub.s32 %s35, %s42
    %p402 = scmp.eq.s32.totalorder %s401, 0
    %s404 = sadd.s32 %s403, 1
    %s405 = scalar_select %p402, %s403, %s404
    %p408 = pneg %p402
    %p409 = scmp.eq.s32.totalorder %s27, 11
    %p410 = por %p408, %p409
    %p411 = scmp.ne.s32.totalorder %s403, %s406
    %p412 = scmp.eq.s32.totalorder %s27, 0
    %p413 = por %p411, %p412
    %p414 = scmp.ne.s32.totalorder %s403, %s406
    %p415 = scmp.eq.s32.totalorder %s32, 11
    %p416 = por %p414, %p415
    %p417 = scmp.ne.s32.totalorder %s406, %s407
    %p418 = scmp.eq.s32.totalorder %s32, 0
    %p419 = por %p417, %p418
    %p420 = scmp.ne.s32.totalorder %s406, %s407
    %p421 = scmp.eq.s32.totalorder %s33, 11
    %p422 = por %p420, %p421
    %p424 = scmp.ne.s32.totalorder %s407, %s423
    %p425 = scmp.eq.s32.totalorder %s33, 0
    %p426 = por %p424, %p425
    %s428 = sadd.s32 %s427, 1
    %p431 = scmp.eq.s32.totalorder %s27, 11
    %p432 = scmp.ne.s32.totalorder %s427, %s429
    %p433 = scmp.eq.s32.totalorder %s27, 0
    %p434 = por %p432, %p433
    %p435 = scmp.ne.s32.totalorder %s427, %s429
    %p436 = scmp.eq.s32.totalorder %s32, 11
    %p437 = por %p435, %p436
    %p438 = scmp.ne.s32.totalorder %s429, %s430
    %p439 = scmp.eq.s32.totalorder %s32, 0
    %p440 = por %p438, %p439
    %p441 = scmp.ne.s32.totalorder %s429, %s430
    %p442 = scmp.eq.s32.totalorder %s33, 11
    %p443 = por %p441, %p442
    %p445 = scmp.ne.s32.totalorder %s430, %s444
    %p446 = scmp.eq.s32.totalorder %s33, 0
    %p447 = por %p445, %p446
    %s449 = sadd.s32 %s448, 1
    %p452 = scmp.eq.s32.totalorder %s27, 11
    %p453 = scmp.ne.s32.totalorder %s448, %s450
    %p454 = scmp.eq.s32.totalorder %s27, 0
    %p455 = por %p453, %p454
    %p456 = scmp.ne.s32.totalorder %s448, %s450
    %p457 = scmp.eq.s32.totalorder %s32, 11
    %p458 = por %p456, %p457
    %p459 = scmp.ne.s32.totalorder %s450, %s451
    %p460 = scmp.eq.s32.totalorder %s32, 0
    %p461 = por %p459, %p460
    %p462 = scmp.ne.s32.totalorder %s450, %s451
    %p463 = scmp.eq.s32.totalorder %s33, 11
    %p464 = por %p462, %p463
    %p466 = scmp.ne.s32.totalorder %s451, %s465
    %p467 = scmp.eq.s32.totalorder %s33, 0
    %p468 = por %p466, %p467
    %s470 = sadd.s32 %s469, 1
    %p473 = scmp.eq.s32.totalorder %s27, 11
    %p474 = scmp.ne.s32.totalorder %s469, %s471
    %p475 = scmp.eq.s32.totalorder %s27, 0
    %p476 = por %p474, %p475
    %p477 = scmp.ne.s32.totalorder %s469, %s471
    %p478 = scmp.eq.s32.totalorder %s32, 11
    %p479 = por %p477, %p478
    %p480 = scmp.ne.s32.totalorder %s471, %s472
    %p481 = scmp.eq.s32.totalorder %s32, 0
    %p482 = por %p480, %p481
    %p483 = scmp.ne.s32.totalorder %s471, %s472
    %p484 = scmp.eq.s32.totalorder %s33, 11
    %p485 = por %p483, %p484
    %p487 = scmp.ne.s32.totalorder %s472, %s486
    %p488 = scmp.eq.s32.totalorder %s33, 0
    %p489 = por %p487, %p488
    %s490 = ssub.s32 %s34, %s46
    %p491 = scmp.eq.s32.totalorder %s490, 0
    %s493 = sadd.s32 %s492, 1
    %s494 = scalar_select %p491, %s492, %s493
    %p497 = pneg %p491
    %p498 = scmp.eq.s32.totalorder %s27, 11
    %p499 = por %p497, %p498
    %p500 = scmp.ne.s32.totalorder %s492, %s495
    %p501 = scmp.eq.s32.totalorder %s27, 0
    %p502 = por %p500, %p501
    %p503 = scmp.ne.s32.totalorder %s492, %s495
    %p504 = scmp.eq.s32.totalorder %s32, 11
    %p505 = por %p503, %p504
    %p506 = scmp.ne.s32.totalorder %s495, %s496
    %p507 = scmp.eq.s32.totalorder %s32, 0
    %p508 = por %p506, %p507
    %p509 = scmp.ne.s32.totalorder %s495, %s496
    %p510 = scmp.eq.s32.totalorder %s33, 11
    %p511 = por %p509, %p510
    %p513 = scmp.ne.s32.totalorder %s496, %s512
    %p514 = scmp.eq.s32.totalorder %s33, 0
    %p515 = por %p513, %p514
    %s516 = ssub.s32 %s34, %s46
    %p517 = scmp.eq.s32.totalorder %s516, 0
    %s519 = sadd.s32 %s518, 1
    %s520 = scalar_select %p517, %s518, %s519
    %p523 = pneg %p517
    %p524 = scmp.eq.s32.totalorder %s27, 11
    %p525 = por %p523, %p524
    %p526 = scmp.ne.s32.totalorder %s518, %s521
    %p527 = scmp.eq.s32.totalorder %s27, 0
    %p528 = por %p526, %p527
    %p529 = scmp.ne.s32.totalorder %s518, %s521
    %p530 = scmp.eq.s32.totalorder %s32, 11
    %p531 = por %p529, %p530
    %p532 = scmp.ne.s32.totalorder %s521, %s522
    %p533 = scmp.eq.s32.totalorder %s32, 0
    %p534 = por %p532, %p533
    %p535 = scmp.ne.s32.totalorder %s521, %s522
    %p536 = scmp.eq.s32.totalorder %s33, 11
    %p537 = por %p535, %p536
    %p539 = scmp.ne.s32.totalorder %s522, %s538
    %p540 = scmp.eq.s32.totalorder %s33, 0
    %p541 = por %p539, %p540
    %s542 = ssub.s32 %s34, %s46
    %p543 = scmp.eq.s32.totalorder %s542, 0
    %s545 = sadd.s32 %s544, 1
    %s546 = scalar_select %p543, %s544, %s545
    %p549 = pneg %p543
    %p550 = scmp.eq.s32.totalorder %s27, 11
    %p551 = por %p549, %p550
    %p552 = scmp.ne.s32.totalorder %s544, %s547
    %p553 = scmp.eq.s32.totalorder %s27, 0
    %p554 = por %p552, %p553
    %p555 = scmp.ne.s32.totalorder %s544, %s547
    %p556 = scmp.eq.s32.totalorder %s32, 11
    %p557 = por %p555, %p556
    %p558 = scmp.ne.s32.totalorder %s547, %s548
    %p559 = scmp.eq.s32.totalorder %s32, 0
    %p560 = por %p558, %p559
    %p561 = scmp.ne.s32.totalorder %s547, %s548
    %p562 = scmp.eq.s32.totalorder %s33, 11
    %p563 = por %p561, %p562
    %p565 = scmp.ne.s32.totalorder %s548, %s564
    %p566 = scmp.eq.s32.totalorder %s33, 0
    %p567 = por %p565, %p566
    %p568 = scmp.le.s32.totalorder 1, %s27
    %p569 = scmp.lt.s32.totalorder %s27, 13
    %p570 = pnand %p568, %p569
    %p571 = pneg %p570
    // Predicated region
    $region9: #{vision_transformer_forward.3} parent=5 // pred_check
      _
    $region10: #{vision_transformer_forward.3} parent=5 // pred_check_branch
      %573 = sbr.rel (%p570) target = $region12
    $region11: #{vision_transformer_forward.3} parent=5 // pred_region
      %s574 = ssub.s32 %s27, 1
      // Predicated region
      $region13: #{vision_transformer_forward.3} parent=11 // pred_check
        %p575 = pneg %p65
      $region14: #{vision_transformer_forward.3} parent=11 // pred_check_branch
        %577 = sbr.rel (%p575) target = $region16
      $region15: #{vision_transformer_forward.3} parent=11 // pred_region
        %s578 = smul.u32 2, %s36
        %p579 = scmp.lt.s32.totalorder %s578, 1
        %s580 = scalar_select %p579, %s578, 1
        %s581 = smul.addr %s580, 3
        %s582 = smul.addr %s581, 8
        %s583 = scalar_lea.vmem %s0, %s582
        %s584 = smul.u32 2, %s36
      $region16: #{vision_transformer_forward.3} parent=11 // pred_fallthru
        _
      // Predicated region
      $region17: #{vision_transformer_forward.3} parent=11 // pred_check
        %p585 = pneg %p86
      $region18: #{vision_transformer_forward.3} parent=11 // pred_check_branch
        %587 = sbr.rel (%p585) target = $region20
      $region19: #{vision_transformer_forward.3} parent=11 // pred_region
        _
      $region20: #{vision_transformer_forward.3} parent=11 // pred_fallthru
        _
      // Predicated region
      $region21: #{vision_transformer_forward.3} parent=11 // pred_check
        %p588 = pneg %p107
      $region22: #{vision_transformer_forward.3} parent=11 // pred_check_branch
        %590 = sbr.rel (%p588) target = $region24
      $region23: #{vision_transformer_forward.3} parent=11 // pred_region
        _
      $region24: #{vision_transformer_forward.3} parent=11 // pred_fallthru
        _
      // Predicated region
      $region25: #{vision_transformer_forward.3} parent=11 // pred_check
        %p591 = pneg %p440
      $region26: #{vision_transformer_forward.3} parent=11 // pred_check_branch
        %593 = sbr.rel (%p591) target = $region28
      $region27: #{vision_transformer_forward.3} parent=11 // pred_region
        _
      $region28: #{vision_transformer_forward.3} parent=11 // pred_fallthru
        _
      // Predicated region
      $region29: #{vision_transformer_forward.3} parent=11 // pred_check
        %p594 = pneg %p461
      $region30: #{vision_transformer_forward.3} parent=11 // pred_check_branch
        %596 = sbr.rel (%p594) target = $region32
      $region31: #{vision_transformer_forward.3} parent=11 // pred_region
        _
      $region32: #{vision_transformer_forward.3} parent=11 // pred_fallthru
        _
      // Predicated region
      $region33: #{vision_transformer_forward.3} parent=11 // pred_check
        %p597 = pneg %p482
      $region34: #{vision_transformer_forward.3} parent=11 // pred_check_branch
        %599 = sbr.rel (%p597) target = $region36
      $region35: #{vision_transformer_forward.3} parent=11 // pred_region
        _
      $region36: #{vision_transformer_forward.3} parent=11 // pred_fallthru
        _
    $region12: #{vision_transformer_forward.3} parent=5 // pred_fallthru
      _
    %p600 = scmp.lt.s32.totalorder %s27, 12
    // Predicated region
    $region37: #{vision_transformer_forward.3} parent=5 // pred_check
      %p601 = pneg %p600
    $region38: #{vision_transformer_forward.3} parent=5 // pred_check_branch
      %603 = sbr.rel (%p601) target = $region40
    $region39: #{vision_transformer_forward.3} parent=5 // pred_region
      // Predicated region
      $region41: #{vision_transformer_forward.3} parent=39 // pred_check
        %p604 = pneg %p127
      $region42: #{vision_transformer_forward.3} parent=39 // pred_check_branch
        %606 = sbr.rel (%p604) target = $region44
      $region43: #{vision_transformer_forward.3} parent=39 // pred_region
        %p607 = scmp.lt.s32.totalorder %s35, 11
        %s608 = scalar_select %p607, %s35, 11
        %s609 = scalar_lea.vmem %s3, %s608
      $region44: #{vision_transformer_forward.3} parent=39 // pred_fallthru
        _
      // Predicated region
      $region45: #{vision_transformer_forward.3} parent=39 // pred_check
        %p610 = pneg %p153
      $region46: #{vision_transformer_forward.3} parent=39 // pred_check_branch
        %612 = sbr.rel (%p610) target = $region48
      $region47: #{vision_transformer_forward.3} parent=39 // pred_region
        %p613 = scmp.lt.s32.totalorder %s35, 11
        %s614 = scalar_select %p613, %s35, 11
        %s615 = scalar_lea.vmem %s4, %s614
      $region48: #{vision_transformer_forward.3} parent=39 // pred_fallthru
        _
      // Predicated region
      $region49: #{vision_transformer_forward.3} parent=39 // pred_check
        %p616 = pneg %p179
      $region50: #{vision_transformer_forward.3} parent=39 // pred_check_branch
        %618 = sbr.rel (%p616) target = $region52
      $region51: #{vision_transformer_forward.3} parent=39 // pred_region
        %p619 = scmp.lt.s32.totalorder %s35, 11
        %s620 = scalar_select %p619, %s35, 11
        %s621 = smul.addr %s620, 4
        %s622 = smul.addr %s621, 4
        %s623 = scalar_lea.vmem %s5, %s622
      $region52: #{vision_transformer_forward.3} parent=39 // pred_fallthru
        _
      // Predicated region
      $region53: #{vision_transformer_forward.3} parent=39 // pred_check
        %p624 = pneg %p205
      $region54: #{vision_transformer_forward.3} parent=39 // pred_check_branch
        %626 = sbr.rel (%p624) target = $region56
      $region55: #{vision_transformer_forward.3} parent=39 // pred_region
        %p627 = scmp.lt.s32.totalorder %s35, 11
        %s628 = scalar_select %p627, %s35, 11
        %s629 = scalar_lea.vmem %s6, %s628
      $region56: #{vision_transformer_forward.3} parent=39 // pred_fallthru
        _
      // Predicated region
      $region57: #{vision_transformer_forward.3} parent=39 // pred_check
        %p630 = pneg %p231
      $region58: #{vision_transformer_forward.3} parent=39 // pred_check_branch
        %632 = sbr.rel (%p630) target = $region60
      $region59: #{vision_transformer_forward.3} parent=39 // pred_region
        %p633 = scmp.lt.s32.totalorder %s35, 11
        %s634 = scalar_select %p633, %s35, 11
        %s635 = smul.addr %s634, 4
        %s636 = smul.addr %s635, 4
        %s637 = scalar_lea.vmem %s7, %s636
      $region60: #{vision_transformer_forward.3} parent=39 // pred_fallthru
        _
      // Predicated region
      $region61: #{vision_transformer_forward.3} parent=39 // pred_check
        %p638 = pneg %p257
      $region62: #{vision_transformer_forward.3} parent=39 // pred_check_branch
        %640 = sbr.rel (%p638) target = $region64
      $region63: #{vision_transformer_forward.3} parent=39 // pred_region
        %p641 = scmp.lt.s32.totalorder %s35, 11
        %s642 = scalar_select %p641, %s35, 11
        %s643 = scalar_lea.vmem %s8, %s642
      $region64: #{vision_transformer_forward.3} parent=39 // pred_fallthru
        _
      // Predicated region
      $region65: #{vision_transformer_forward.3} parent=39 // pred_check
        %p644 = pneg %p283
      $region66: #{vision_transformer_forward.3} parent=39 // pred_check_branch
        %646 = sbr.rel (%p644) target = $region68
      $region67: #{vision_transformer_forward.3} parent=39 // pred_region
        %p647 = scmp.lt.s32.totalorder %s35, 11
        %s648 = scalar_select %p647, %s35, 11
        %s649 = scalar_lea.vmem %s9, %s648
      $region68: #{vision_transformer_forward.3} parent=39 // pred_fallthru
        _
      // Predicated region
      $region69: #{vision_transformer_forward.3} parent=39 // pred_check
        %p650 = pneg %p309
      $region70: #{vision_transformer_forward.3} parent=39 // pred_check_branch
        %652 = sbr.rel (%p650) target = $region72
      $region71: #{vision_transformer_forward.3} parent=39 // pred_region
        %p653 = scmp.lt.s32.totalorder %s35, 11
        %s654 = scalar_select %p653, %s35, 11
        %s655 = scalar_lea.vmem %s10, %s654
      $region72: #{vision_transformer_forward.3} parent=39 // pred_fallthru
        _
      // Predicated region
      $region73: #{vision_transformer_forward.3} parent=39 // pred_check
        %p656 = pneg %p335
      $region74: #{vision_transformer_forward.3} parent=39 // pred_check_branch
        %658 = sbr.rel (%p656) target = $region76
      $region75: #{vision_transformer_forward.3} parent=39 // pred_region
        %p659 = scmp.lt.s32.totalorder %s35, 11
        %s660 = scalar_select %p659, %s35, 11
        %s661 = smul.addr %s660, 4
        %s662 = smul.addr %s661, 4
        %s663 = scalar_lea.vmem %s11, %s662
      $region76: #{vision_transformer_forward.3} parent=39 // pred_fallthru
        _
      // Predicated region
      $region77: #{vision_transformer_forward.3} parent=39 // pred_check
        %p664 = pneg %p361
      $region78: #{vision_transformer_forward.3} parent=39 // pred_check_branch
        %666 = sbr.rel (%p664) target = $region80
      $region79: #{vision_transformer_forward.3} parent=39 // pred_region
        %p667 = scmp.lt.s32.totalorder %s35, 11
        %s668 = scalar_select %p667, %s35, 11
        %s669 = scalar_lea.vmem %s12, %s668
      $region80: #{vision_transformer_forward.3} parent=39 // pred_fallthru
        _
      // Predicated region
      $region81: #{vision_transformer_forward.3} parent=39 // pred_check
        %p670 = pneg %p387
      $region82: #{vision_transformer_forward.3} parent=39 // pred_check_branch
        %672 = sbr.rel (%p670) target = $region84
      $region83: #{vision_transformer_forward.3} parent=39 // pred_region
        %p673 = scmp.lt.s32.totalorder %s35, 11
        %s674 = scalar_select %p673, %s35, 11
        %s675 = smul.addr %s674, 16
        %s676 = smul.addr %s675, 4
        %s677 = scalar_lea.vmem %s13, %s676
      $region84: #{vision_transformer_forward.3} parent=39 // pred_fallthru
        _
      // Predicated region
      $region85: #{vision_transformer_forward.3} parent=39 // pred_check
        %p678 = pneg %p413
      $region86: #{vision_transformer_forward.3} parent=39 // pred_check_branch
        %680 = sbr.rel (%p678) target = $region88
      $region87: #{vision_transformer_forward.3} parent=39 // pred_region
        %p681 = scmp.lt.s32.totalorder %s35, 11
        %s682 = scalar_select %p681, %s35, 11
        %s683 = scalar_lea.vmem %s14, %s682
      $region88: #{vision_transformer_forward.3} parent=39 // pred_fallthru
        _
    $region40: #{vision_transformer_forward.3} parent=5 // pred_fallthru
      _
    %p684 = scmp.le.s32.totalorder 1, %s27
    %p685 = scmp.lt.s32.totalorder %s27, 13
    %p686 = pnand %p684, %p685
    %p687 = pneg %p686
    // Predicated region
    $region89: #{vision_transformer_forward.3} parent=5 // pred_check
      _
    $region90: #{vision_transformer_forward.3} parent=5 // pred_check_branch
      %689 = sbr.rel (%p686) target = $region92
    $region91: #{vision_transformer_forward.3} parent=5 // pred_region
      %s690 = ssub.s32 %s27, 1
      %s691 = smul.u32 2, %s36
      %p692 = scmp.lt.s32.totalorder %s691, 1
      %s693 = scalar_select %p692, %s691, 1
      %s694 = smul.addr %s693, 3
      %s695 = smul.addr %s694, 8
      %s696 = scalar_lea.vmem %s0, %s695
      %p697 = pneg %p65
      %p698 = pneg %p62
      %p699 = pneg %p86
      %p700 = pneg %p83
      %p701 = pneg %p107
      %p702 = pneg %p104
      %p703 = scmp.lt.s32.totalorder %s37, 11
      %s704 = scalar_select %p703, %s37, 11
      %s705 = scalar_lea.vmem %s3, %s704
      %p706 = pneg %p133
      %p707 = pneg %p130
      %p708 = scmp.lt.s32.totalorder %s37, 11
      %s709 = scalar_select %p708, %s37, 11
      %s710 = scalar_lea.vmem %s4, %s709
      %p711 = pneg %p159
      %p712 = pneg %p156
      %p713 = scmp.lt.s32.totalorder %s37, 11
      %s714 = scalar_select %p713, %s37, 11
      %s715 = smul.addr %s714, 4
      %s716 = smul.addr %s715, 4
      %s717 = scalar_lea.vmem %s5, %s716
      %p718 = pneg %p185
      %p719 = pneg %p182
      %p720 = scmp.lt.s32.totalorder %s37, 11
      %s721 = scalar_select %p720, %s37, 11
      %s722 = scalar_lea.vmem %s6, %s721
      %p723 = pneg %p211
      %p724 = pneg %p208
      %p725 = scmp.lt.s32.totalorder %s37, 11
      %s726 = scalar_select %p725, %s37, 11
      %s727 = smul.addr %s726, 4
      %s728 = smul.addr %s727, 4
      %s729 = scalar_lea.vmem %s7, %s728
      %p730 = pneg %p237
      %p731 = pneg %p234
      %p732 = scmp.lt.s32.totalorder %s37, 11
      %s733 = scalar_select %p732, %s37, 11
      %s734 = scalar_lea.vmem %s8, %s733
      %p735 = pneg %p263
      %p736 = pneg %p260
      %p737 = scmp.lt.s32.totalorder %s37, 11
      %s738 = scalar_select %p737, %s37, 11
      %s739 = scalar_lea.vmem %s9, %s738
      %p740 = pneg %p289
      %p741 = pneg %p286
      %p742 = scmp.lt.s32.totalorder %s37, 11
      %s743 = scalar_select %p742, %s37, 11
      %s744 = scalar_lea.vmem %s10, %s743
      %p745 = pneg %p315
      %p746 = pneg %p312
      %p747 = scmp.lt.s32.totalorder %s37, 11
      %s748 = scalar_select %p747, %s37, 11
      %s749 = smul.addr %s748, 4
      %s750 = smul.addr %s749, 4
      %s751 = scalar_lea.vmem %s11, %s750
      %p752 = pneg %p341
      %p753 = pneg %p338
      %p754 = scmp.lt.s32.totalorder %s37, 11
      %s755 = scalar_select %p754, %s37, 11
      %s756 = scalar_lea.vmem %s12, %s755
      %p757 = pneg %p367
      %p758 = pneg %p364
      %p759 = scmp.lt.s32.totalorder %s37, 11
      %s760 = scalar_select %p759, %s37, 11
      %s761 = smul.addr %s760, 16
      %s762 = smul.addr %s761, 4
      %s763 = scalar_lea.vmem %s13, %s762
      %p764 = pneg %p393
      %p765 = pneg %p390
      %p766 = scmp.lt.s32.totalorder %s37, 11
      %s767 = scalar_select %p766, %s37, 11
      %s768 = scalar_lea.vmem %s14, %s767
      %p769 = pneg %p419
      %p770 = pneg %p416
      %p771 = pneg %p440
      %p772 = pneg %p437
      %p773 = pneg %p461
      %p774 = pneg %p458
      %p775 = pneg %p482
      %p776 = pneg %p479
      %p777 = pneg %p508
      %p778 = pneg %p505
      %s779 = smul.u32 2, %s36
      %p780 = scmp.lt.s32.totalorder %s779, 1
      %s781 = scalar_select %p780, %s779, 1
      %s782 = smul.addr %s781, 3
      %s783 = smul.addr %s782, 8
      %s784 = scalar_lea.vmem %s18, %s783
      %p785 = pneg %p534
      %p786 = pneg %p531
      %s787 = smul.u32 2, %s36
      %p788 = scmp.lt.s32.totalorder %s787, 1
      %s789 = scalar_select %p788, %s787, 1
      %s790 = smul.addr %s789, 3
      %s791 = smul.addr %s790, 8
      %s792 = scalar_lea.vmem %s19, %s791
      %p793 = pneg %p560
      %p794 = pneg %p557
      %s795 = smul.u32 2, %s36
      %p796 = scmp.lt.s32.totalorder %s795, 1
      %s797 = scalar_select %p796, %s795, 1
      %s798 = smul.addr %s797, 3
      %s799 = smul.addr %s798, 8
      %s800 = scalar_lea.vmem %s20, %s799
      %s801 = smul.u32 2, %s36
      %p802 = scmp.lt.s32.totalorder %s801, 1
      %s803 = scalar_select %p802, %s801, 1
      %s804 = smul.addr %s803, 3
      %s805 = smul.addr %s804, 8
      %s806 = scalar_lea.vmem %s0, %s805
      %s807 = smul.u32 2, %s36
      %p808 = scmp.lt.s32.totalorder %s37, 11
      %s809 = scalar_select %p808, %s37, 11
      %s810 = scalar_lea.vmem %s3, %s809
      %p811 = scmp.lt.s32.totalorder %s37, 11
      %s812 = scalar_select %p811, %s37, 11
      %s813 = scalar_lea.vmem %s4, %s812
      %p814 = scmp.lt.s32.totalorder %s37, 11
      %s815 = scalar_select %p814, %s37, 11
      %s816 = smul.addr %s815, 4
      %s817 = smul.addr %s816, 4
      %s818 = scalar_lea.vmem %s5, %s817
      %p819 = scmp.lt.s32.totalorder %s37, 11
      %s820 = scalar_select %p819, %s37, 11
      %s821 = scalar_lea.vmem %s6, %s820
      %p822 = scmp.lt.s32.totalorder %s37, 11
      %s823 = scalar_select %p822, %s37, 11
      %s824 = smul.addr %s823, 4
      %s825 = smul.addr %s824, 4
      %s826 = scalar_lea.vmem %s7, %s825
      %p827 = scmp.lt.s32.totalorder %s37, 11
      %s828 = scalar_select %p827, %s37, 11
      %s829 = scalar_lea.vmem %s8, %s828
      %p830 = scmp.lt.s32.totalorder %s37, 11
      %s831 = scalar_select %p830, %s37, 11
      %s832 = scalar_lea.vmem %s9, %s831
      %p833 = scmp.lt.s32.totalorder %s37, 11
      %s834 = scalar_select %p833, %s37, 11
      %s835 = scalar_lea.vmem %s10, %s834
      %p836 = scmp.lt.s32.totalorder %s37, 11
      %s837 = scalar_select %p836, %s37, 11
      %s838 = smul.addr %s837, 4
      %s839 = smul.addr %s838, 4
      %s840 = scalar_lea.vmem %s11, %s839
      %p841 = scmp.lt.s32.totalorder %s37, 11
      %s842 = scalar_select %p841, %s37, 11
      %s843 = scalar_lea.vmem %s12, %s842
      %p844 = scmp.lt.s32.totalorder %s37, 11
      %s845 = scalar_select %p844, %s37, 11
      %s846 = smul.addr %s845, 16
      %s847 = smul.addr %s846, 4
      %s848 = scalar_lea.vmem %s13, %s847
      %p849 = scmp.lt.s32.totalorder %s37, 11
      %s850 = scalar_select %p849, %s37, 11
      %s851 = scalar_lea.vmem %s14, %s850
      %s852 = smul.u32 2, %s36
      %p853 = scmp.lt.s32.totalorder %s852, 1
      %s854 = scalar_select %p853, %s852, 1
      %s855 = smul.addr %s854, 3
      %s856 = smul.addr %s855, 8
      %s857 = scalar_lea.vmem %s18, %s856
      %s858 = smul.u32 2, %s36
      %s859 = smul.u32 2, %s36
      %p860 = scmp.lt.s32.totalorder %s859, 1
      %s861 = scalar_select %p860, %s859, 1
      %s862 = smul.addr %s861, 3
      %s863 = smul.addr %s862, 8
      %s864 = scalar_lea.vmem %s19, %s863
      %s865 = smul.u32 2, %s36
      %s866 = smul.u32 2, %s36
      %p867 = scmp.lt.s32.totalorder %s866, 1
      %s868 = scalar_select %p867, %s866, 1
      %s869 = smul.addr %s868, 3
      %s870 = smul.addr %s869, 8
      %s871 = scalar_lea.vmem %s20, %s870
      %s872 = smul.u32 2, %s36
      %p876 = scmp.eq.s32.totalorder %s37, 0
      // Predicated region
      $region93: #{vision_transformer_forward.3} parent=91 // pred_check
        %p877 = pneg %p876
      $region94: #{vision_transformer_forward.3} parent=91 // pred_check_branch
        %879 = sbr.rel (%p877) target = $region96
      $region95: #{vision_transformer_forward.3} parent=91 // pred_region
        %v880 = vld [vmem:[%s806] sm:$0xff]
        %v881 = vld [vmem:[%s806 + $0x8] sm:$0xff]
        %v882 = vld [vmem:[%s806 + $0x10] sm:$0xff]
        %v883 = vld [vmem:[%s806 + $0x18] sm:$0xff]
        %v884 = vld [vmem:[%s806 + $0x20] sm:$0xff]
        %v885 = vld [vmem:[%s806 + $0x28] sm:$0xff]
        %v886 = vld [vmem:[%s1] sm:$0x1]
        %v887 = vld [vmem:[%s2] sm:$0x1]
        %vm888 = vcmask 261120
        %v889 = vsel %vm888, %v880, 0.0
        %890 = vadd.xlane.f32.xlu0 %v889
        %v891 = vpop.xlane.xlu0 %890
        %v892 = vsel %vm888, %v881, 0.0
        %893 = vadd.xlane.f32.xlu0 %v892
        %v894 = vpop.xlane.xlu0 %893
        %v895 = vsel %vm888, %v882, 0.0
        %896 = vadd.xlane.f32.xlu0 %v895
        %v897 = vpop.xlane.xlu0 %896
        %v898 = vsel %vm888, %v883, 0.0
        %899 = vadd.xlane.f32.xlu0 %v898
        %v900 = vpop.xlane.xlu0 %899
        %v901 = vsel %vm888, %v884, 0.0
        %902 = vadd.xlane.f32.xlu0 %v901
        %v903 = vpop.xlane.xlu0 %902
        %v904 = vsel %vm888, %v885, 0.0
        %905 = vadd.xlane.f32.xlu0 %v904
        %v906 = vpop.xlane.xlu0 %905
        %v907 = vrcp.pop 32.0
        %v908 = vmul.f32 %v891, %v907
        %v909 = vmul.f32 %v894, %v907
        %v910 = vmul.f32 %v897, %v907
        %v911 = vmul.f32 %v900, %v907
        %v912 = vmul.f32 %v903, %v907
        %v913 = vmul.f32 %v906, %v907
        %v914 = vsub.f32 %v880, %v908
        %v915 = vsub.f32 %v881, %v909
        %v916 = vsub.f32 %v882, %v910
        %v917 = vsub.f32 %v883, %v911
        %v918 = vsub.f32 %v884, %v912
        %v919 = vsub.f32 %v885, %v913
        %v920 = vmul.f32 %v914, %v914
        %v921 = vmul.f32 %v915, %v915
        %v922 = vmul.f32 %v916, %v916
        %v923 = vmul.f32 %v917, %v917
        %v924 = vmul.f32 %v918, %v918
        %v925 = vmul.f32 %v919, %v919
        %v926 = vsel %vm888, %v920, 0.0
        %927 = vadd.xlane.f32.xlu0 %v926
        %v928 = vpop.xlane.xlu0 %927
        %v929 = vsel %vm888, %v921, 0.0
        %930 = vadd.xlane.f32.xlu0 %v929
        %v931 = vpop.xlane.xlu0 %930
        %v932 = vsel %vm888, %v922, 0.0
        %933 = vadd.xlane.f32.xlu0 %v932
        %v934 = vpop.xlane.xlu0 %933
        %v935 = vsel %vm888, %v923, 0.0
        %936 = vadd.xlane.f32.xlu0 %v935
        %v937 = vpop.xlane.xlu0 %936
        %v938 = vsel %vm888, %v924, 0.0
        %939 = vadd.xlane.f32.xlu0 %v938
        %v940 = vpop.xlane.xlu0 %939
        %v941 = vsel %vm888, %v925, 0.0
        %942 = vadd.xlane.f32.xlu0 %v941
        %v943 = vpop.xlane.xlu0 %942
        %v944 = vmul.f32 %v928, %v907
        %v945 = vmul.f32 %v931, %v907
        %v946 = vmul.f32 %v934, %v907
        %v947 = vmul.f32 %v937, %v907
        %v948 = vmul.f32 %v940, %v907
        %v949 = vmul.f32 %v943, %v907
        %v950 = vadd.f32 %v944, 1e-05
        %v951 = vadd.f32 %v945, 1e-05
        %v952 = vadd.f32 %v946, 1e-05
        %v953 = vadd.f32 %v947, 1e-05
        %v954 = vadd.f32 %v948, 1e-05
        %v955 = vadd.f32 %v949, 1e-05
        %v956 = vrsqrt.pop %v950
        %v957 = vrsqrt.pop %v951
        %v958 = vrsqrt.pop %v952
        %v959 = vrsqrt.pop %v953
        %v960 = vrsqrt.pop %v954
        %v961 = vrsqrt.pop %v955
        %v962 = vmul.f32 %v914, %v956
        %v963 = vmul.f32 %v915, %v957
        %v964 = vmul.f32 %v916, %v958
        %v965 = vmul.f32 %v917, %v959
        %v966 = vmul.f32 %v918, %v960
        %v967 = vmul.f32 %v919, %v961
        %v969 = vlaneseq
        %v970 = vshrl.u32 %v969, 7
        %v971 = vsub.s32 0, %v970
        %v972 = vrot.slane %v886, %v971
        %v974 = vmul.f32 %v962, %v972
        %v975 = vmul.f32 %v963, %v972
        %v976 = vmul.f32 %v964, %v972
        %v977 = vmul.f32 %v965, %v972
        %v978 = vmul.f32 %v966, %v972
        %v979 = vmul.f32 %v967, %v972
        %v981 = vlaneseq
        %v982 = vshrl.u32 %v981, 7
        %v983 = vsub.s32 0, %v982
        %v984 = vrot.slane %v887, %v983
        %v986 = vadd.f32 %v974, %v984
        %v987 = vadd.f32 %v975, %v984
        %v988 = vadd.f32 %v976, %v984
        %v989 = vadd.f32 %v977, %v984
        %v990 = vadd.f32 %v978, %v984
        %v991 = vadd.f32 %v979, %v984
        %992 = vst.msk [vmem:[#allocation2] sm:$0xff] %vm888, %v986
        %993 = vst.msk [vmem:[#allocation2 + $0x8] sm:$0xff] %vm888, %v987
        %994 = vst.msk [vmem:[#allocation2 + $0x10] sm:$0xff] %vm888, %v988
        %995 = vst.msk [vmem:[#allocation2 + $0x18] sm:$0xff] %vm888, %v989
        %996 = vst.msk [vmem:[#allocation2 + $0x20] sm:$0xff] %vm888, %v990
        %997 = vst.msk [vmem:[#allocation2 + $0x28] sm:$0xff] %vm888, %v991
      $region96: #{vision_transformer_forward.3} parent=91 // pred_fallthru
        _
      %v998 = vld [vmem:[#allocation2] sm:$0xff]
      %v999 = vld [vmem:[#allocation2 + $0x8] sm:$0xff]
      %v1000 = vld [vmem:[#allocation2 + $0x10] sm:$0xff]
      %v1001 = vld [vmem:[#allocation2 + $0x18] sm:$0xff]
      %v1002 = vld [vmem:[#allocation2 + $0x20] sm:$0xff]
      %v1003 = vld [vmem:[#allocation2 + $0x28] sm:$0xff]
      %v1004 = vld [vmem:[%s810] sm:$0x1]
      %v1005 = vld [vmem:[%s813] sm:$0x1]
      %vm1006 = vcmask 261120
      %v1007 = vsel %vm1006, %v998, 0.0
      %1008 = vadd.xlane.f32.xlu0 %v1007
      %v1009 = vpop.xlane.xlu0 %1008
      %v1010 = vsel %vm1006, %v999, 0.0
      %1011 = vadd.xlane.f32.xlu0 %v1010
      %v1012 = vpop.xlane.xlu0 %1011
      %v1013 = vsel %vm1006, %v1000, 0.0
      %1014 = vadd.xlane.f32.xlu0 %v1013
      %v1015 = vpop.xlane.xlu0 %1014
      %v1016 = vsel %vm1006, %v1001, 0.0
      %1017 = vadd.xlane.f32.xlu0 %v1016
      %v1018 = vpop.xlane.xlu0 %1017
      %v1019 = vsel %vm1006, %v1002, 0.0
      %1020 = vadd.xlane.f32.xlu0 %v1019
      %v1021 = vpop.xlane.xlu0 %1020
      %v1022 = vsel %vm1006, %v1003, 0.0
      %1023 = vadd.xlane.f32.xlu0 %v1022
      %v1024 = vpop.xlane.xlu0 %1023
      %v1025 = vrcp.pop 32.0
      %v1026 = vmul.f32 %v1009, %v1025
      %v1027 = vmul.f32 %v1012, %v1025
      %v1028 = vmul.f32 %v1015, %v1025
      %v1029 = vmul.f32 %v1018, %v1025
      %v1030 = vmul.f32 %v1021, %v1025
      %v1031 = vmul.f32 %v1024, %v1025
      %v1032 = vsub.f32 %v998, %v1026
      %v1033 = vsub.f32 %v999, %v1027
      %v1034 = vsub.f32 %v1000, %v1028
      %v1035 = vsub.f32 %v1001, %v1029
      %v1036 = vsub.f32 %v1002, %v1030
      %v1037 = vsub.f32 %v1003, %v1031
      %v1038 = vmul.f32 %v1032, %v1032
      %v1039 = vmul.f32 %v1033, %v1033
      %v1040 = vmul.f32 %v1034, %v1034
      %v1041 = vmul.f32 %v1035, %v1035
      %v1042 = vmul.f32 %v1036, %v1036
      %v1043 = vmul.f32 %v1037, %v1037
      %v1044 = vsel %vm1006, %v1038, 0.0
      %1045 = vadd.xlane.f32.xlu0 %v1044
      %v1046 = vpop.xlane.xlu0 %1045
      %v1047 = vsel %vm1006, %v1039, 0.0
      %1048 = vadd.xlane.f32.xlu0 %v1047
      %v1049 = vpop.xlane.xlu0 %1048
      %v1050 = vsel %vm1006, %v1040, 0.0
      %1051 = vadd.xlane.f32.xlu0 %v1050
      %v1052 = vpop.xlane.xlu0 %1051
      %v1053 = vsel %vm1006, %v1041, 0.0
      %1054 = vadd.xlane.f32.xlu0 %v1053
      %v1055 = vpop.xlane.xlu0 %1054
      %v1056 = vsel %vm1006, %v1042, 0.0
      %1057 = vadd.xlane.f32.xlu0 %v1056
      %v1058 = vpop.xlane.xlu0 %1057
      %v1059 = vsel %vm1006, %v1043, 0.0
      %1060 = vadd.xlane.f32.xlu0 %v1059
      %v1061 = vpop.xlane.xlu0 %1060
      %v1062 = vmul.f32 %v1046, %v1025
      %v1063 = vmul.f32 %v1049, %v1025
      %v1064 = vmul.f32 %v1052, %v1025
      %v1065 = vmul.f32 %v1055, %v1025
      %v1066 = vmul.f32 %v1058, %v1025
      %v1067 = vmul.f32 %v1061, %v1025
      %v1068 = vadd.f32 %v1062, 1e-05
      %v1069 = vadd.f32 %v1063, 1e-05
      %v1070 = vadd.f32 %v1064, 1e-05
      %v1071 = vadd.f32 %v1065, 1e-05
      %v1072 = vadd.f32 %v1066, 1e-05
      %v1073 = vadd.f32 %v1067, 1e-05
      %v1074 = vrsqrt.pop %v1068
      %v1075 = vrsqrt.pop %v1069
      %v1076 = vrsqrt.pop %v1070
      %v1077 = vrsqrt.pop %v1071
      %v1078 = vrsqrt.pop %v1072
      %v1079 = vrsqrt.pop %v1073
      %v1080 = vmul.f32 %v1032, %v1074
      %v1081 = vmul.f32 %v1033, %v1075
      %v1082 = vmul.f32 %v1034, %v1076
      %v1083 = vmul.f32 %v1035, %v1077
      %v1084 = vmul.f32 %v1036, %v1078
      %v1085 = vmul.f32 %v1037, %v1079
      %v1087 = vlaneseq
      %v1088 = vshrl.u32 %v1087, 7
      %v1089 = vsub.s32 0, %v1088
      %v1090 = vrot.slane %v1004, %v1089
      %v1092 = vmul.f32 %v1080, %v1090
      %v1093 = vmul.f32 %v1081, %v1090
      %v1094 = vmul.f32 %v1082, %v1090
      %v1095 = vmul.f32 %v1083, %v1090
      %v1096 = vmul.f32 %v1084, %v1090
      %v1097 = vmul.f32 %v1085, %v1090
      %v1099 = vlaneseq
      %v1100 = vshrl.u32 %v1099, 7
      %v1101 = vsub.s32 0, %v1100
      %v1102 = vrot.slane %v1005, %v1101
      %v1104 = vadd.f32 %v1092, %v1102
      %v1105 = vadd.f32 %v1093, %v1102
      %v1106 = vadd.f32 %v1094, %v1102
      %v1107 = vadd.f32 %v1095, %v1102
      %v1108 = vadd.f32 %v1096, %v1102
      %v1109 = vadd.f32 %v1097, %v1102
      %v1110 = vpack.c.bf16 %v1105, %v1104
      %v1111 = vpack.c.bf16 %v1107, %v1106
      %v1112 = vpack.c.bf16 %v1109, %v1108
      %v1113 = vld [vmem:[%s818] sm:$0xf]
      %v1114 = vld [vmem:[%s818 + $0x4] sm:$0xf]
      %v1115 = vld [vmem:[%s818 + $0x8] sm:$0xf]
      %v1116 = vld [vmem:[%s818 + $0xc] sm:$0xf]
      %v1117 = vld [vmem:[%s821] sm:$0x1]
      %v1119 = vlaneseq
      %v1120 = vshrl.u32 %v1119, 7
      %v1121 = vsub.s32 0, %v1120
      %v1122 = vrot.slane %v1117, %v1121
      %v1128 = vunpack.c.l.b16 %v1113
      %v1129 = vunpack.c.l.b16 %v1114
      %v1130 = vunpack.c.l.b16 %v1115
      %v1131 = vunpack.c.l.b16 %v1116
      %v1132 = vpack.c.b16 %v1129, %v1128
      %v1133 = vpack.c.b16 %v1131, %v1130
      %v1137 = vsel %vm1006, %v1110, 0
      %v1140 = vsel %vm1006, %v1111, 0
      %v1143 = vsel %vm1006, %v1112, 0
      %1145 = vmatprep.subr.bf16.mxu0 0
      %1146 = vmatpush1.bf16.msra.mxu0 0
      %1147 = vmatprep.subr.bf16.mxu0 0
      %1148 = vmatpush1.bf16.msra.mxu0 0
      %1149 = vmatprep.subr.bf16.mxu0 0
      %1150 = vmatpush1.bf16.msra.mxu0 0
      %1151 = vmatprep.subr.bf16.mxu0 0
      %1152 = vmatpush1.bf16.msra.mxu0 0
      %1153 = vmatprep.subr.bf16.mxu0 0
      %1154 = vmatpush1.bf16.msra.mxu0 0
      %1155 = vmatprep.subr.bf16.mxu0 0
      %1156 = vmatpush1.bf16.msra.mxu0 0
      %1157 = vmatprep.subr.bf16.mxu0 0
      %1158 = vmatpush1.bf16.msra.mxu0 %v1133
      %1159 = vmatprep.subr.bf16.mxu0 0
      %1160 = vmatpush1.bf16.msra.mxu0 %v1132
      %1161 = vmatprep.subr.bf16.mxu0 0
      %1162 = vmatpush2.bf16.msra.mxu0 0
      %1163 = vmatprep.subr.bf16.mxu0 0
      %1164 = vmatpush2.bf16.msra.mxu0 0
      %1165 = vmatprep.subr.bf16.mxu0 0
      %1166 = vmatpush2.bf16.msra.mxu0 0
      %1167 = vmatprep.subr.bf16.mxu0 0
      %1168 = vmatpush2.bf16.msra.mxu0 0
      %1169 = vmatprep.subr.bf16.mxu0 0
      %1170 = vmatpush2.bf16.msra.mxu0 0
      %1171 = vmatprep.subr.bf16.mxu0 0
      %1172 = vmatpush2.bf16.msra.mxu0 0
      %1173 = vmatprep.subr.bf16.mxu0 0
      %1174 = vmatpush2.bf16.msra.mxu0 0
      %1175 = vmatprep.subr.bf16.mxu0 0
      %1176 = vmatpush2.bf16.msra.mxu0 0
      %1177 = vmatprep.mubr.bf16.mxu0 0
      %1178 = vmatmul.mubr.bf16.gmra.mxu0 %v1137
      %v1179 = vpop.f32.mrf.mxu0
      %v1180 = vadd.f32 %v1122, %v1179
      %v1181 = vpop.f32.mrf.mxu0
      %v1182 = vpop.f32.mrf.mxu0
      %v1183 = vadd.f32 %v1122, %v1182
      %v1184 = vpop.f32.mrf.mxu0
      %1185 = vmatprep.mubr.bf16.mxu0 0
      %1186 = vmatmul.mubr.bf16.gmra.mxu0 %v1140
      %v1187 = vpop.f32.mrf.mxu0
      %v1188 = vadd.f32 %v1122, %v1187
      %v1189 = vpop.f32.mrf.mxu0
      %v1190 = vpop.f32.mrf.mxu0
      %v1191 = vadd.f32 %v1122, %v1190
      %v1192 = vpop.f32.mrf.mxu0
      %1193 = vmatprep.mubr.bf16.mxu0 0
      %1194 = vmatmul.mubr.bf16.gmra.mxu0 %v1143
      %v1195 = vpop.f32.mrf.mxu0
      %v1196 = vadd.f32 %v1122, %v1195
      %v1197 = vpop.f32.mrf.mxu0
      %v1198 = vpop.f32.mrf.mxu0
      %v1199 = vadd.f32 %v1122, %v1198
      %v1200 = vpop.f32.mrf.mxu0
      %1201 = vdwg.mxu0
      %v1202 = vlaneseq
      %v1203 = vand.u32 %v1202, 127
      %vm1204 = vcmp.lt.s32.totalorder %v1203, 17
      %v1205 = vpack.c.bf16 %v1183, %v1180
      %v1206 = vpack.c.bf16 %v1188, %v1188
      %v1207 = vpack.c.bf16 %v1196, %v1191
      %v1208 = vpack.c.bf16 %v1199, %v1199
      %1211 = vrot.lane.b32.xlu0 %v1205, 96
      %v1212 = vpop.permute.xlu0 %1211
      %1213 = vrot.lane.b32.xlu0 %v1206, 96
      %v1214 = vpop.permute.xlu0 %1213
      %vm1215 = vcmask 64512
      %v1217 = vsel %vm1215, %v1205, 0
      %v1220 = vsel %vm1215, %v1206, 0
      %v1223 = vsel %vm1215, %v1212, 0
      %v1226 = vsel %vm1215, %v1214, 0
      %1228 = vmatprep.subr.bf16.mxu0 0
      %1229 = vmatpush1.bf16.xpose.msra.mxu0 0
      %1230 = vmatprep.subr.bf16.mxu0 0
      %1231 = vmatpush1.bf16.xpose.msra.mxu0 0
      %1232 = vmatprep.subr.bf16.mxu0 0
      %1233 = vmatpush1.bf16.xpose.msra.mxu0 0
      %1234 = vmatprep.subr.bf16.mxu0 0
      %1235 = vmatpush1.bf16.xpose.msra.mxu0 0
      %1236 = vmatprep.subr.bf16.mxu0 0
      %1237 = vmatpush1.bf16.xpose.msra.mxu0 0
      %1238 = vmatprep.subr.bf16.mxu0 0
      %1239 = vmatpush1.bf16.xpose.msra.mxu0 0
      %1240 = vmatprep.subr.bf16.mxu0 0
      %1241 = vmatpush1.bf16.xpose.msra.mxu0 %v1226
      %1242 = vmatprep.subr.bf16.mxu0 0
      %1243 = vmatpush1.bf16.xpose.msra.mxu0 %v1223
      %1244 = vmatprep.subr.bf16.mxu0 0
      %1245 = vmatpush2.bf16.xpose.msra.mxu0 0
      %1246 = vmatprep.subr.bf16.mxu0 0
      %1247 = vmatpush2.bf16.xpose.msra.mxu0 0
      %1248 = vmatprep.subr.bf16.mxu0 0
      %1249 = vmatpush2.bf16.xpose.msra.mxu0 0
      %1250 = vmatprep.subr.bf16.mxu0 0
      %1251 = vmatpush2.bf16.xpose.msra.mxu0 0
      %1252 = vmatprep.subr.bf16.mxu0 0
      %1253 = vmatpush2.bf16.xpose.msra.mxu0 0
      %1254 = vmatprep.subr.bf16.mxu0 0
      %1255 = vmatpush2.bf16.xpose.msra.mxu0 0
      %1256 = vmatprep.subr.bf16.mxu0 0
      %1257 = vmatpush2.bf16.xpose.msra.mxu0 0
      %1258 = vmatprep.subr.bf16.mxu0 0
      %1259 = vmatpush2.bf16.xpose.msra.mxu0 0
      %1260 = vmatprep.mubr.bf16.mxu0 0
      %1261 = vmatmul.mubr.bf16.gmra.mxu0 %v1217
      %v1262 = vpop.f32.mrf.mxu0
      %v1263 = vadd.f32 0.0, %v1262
      %v1264 = vpop.f32.mrf.mxu0
      %v1265 = vpop.f32.mrf.mxu0
      %v1266 = vadd.f32 0.0, %v1265
      %v1267 = vpop.f32.mrf.mxu0
      %1268 = vmatprep.mubr.bf16.mxu0 0
      %1269 = vmatmul.mubr.bf16.gmra.mxu0 %v1220
      %v1270 = vpop.f32.mrf.mxu0
      %v1271 = vadd.f32 0.0, %v1270
      %v1272 = vpop.f32.mrf.mxu0
      %v1273 = vpop.f32.mrf.mxu0
      %v1274 = vpop.f32.mrf.mxu0
      %1275 = vdwg.mxu0
      %1278 = vrot.lane.b32.xlu0 %v1207, 96
      %v1279 = vpop.permute.xlu0 %1278
      %1280 = vrot.lane.b32.xlu0 %v1208, 96
      %v1281 = vpop.permute.xlu0 %1280
      %v1283 = vsel %vm1215, %v1207, 0
      %v1286 = vsel %vm1215, %v1208, 0
      %v1289 = vsel %vm1215, %v1279, 0
      %v1292 = vsel %vm1215, %v1281, 0
      %1294 = vmatprep.subr.bf16.mxu0 0
      %1295 = vmatpush1.bf16.xpose.msra.mxu0 0
      %1296 = vmatprep.subr.bf16.mxu0 0
      %1297 = vmatpush1.bf16.xpose.msra.mxu0 0
      %1298 = vmatprep.subr.bf16.mxu0 0
      %1299 = vmatpush1.bf16.xpose.msra.mxu0 0
      %1300 = vmatprep.subr.bf16.mxu0 0
      %1301 = vmatpush1.bf16.xpose.msra.mxu0 0
      %1302 = vmatprep.subr.bf16.mxu0 0
      %1303 = vmatpush1.bf16.xpose.msra.mxu0 0
      %1304 = vmatprep.subr.bf16.mxu0 0
      %1305 = vmatpush1.bf16.xpose.msra.mxu0 0
      %1306 = vmatprep.subr.bf16.mxu0 0
      %1307 = vmatpush1.bf16.xpose.msra.mxu0 %v1292
      %1308 = vmatprep.subr.bf16.mxu0 0
      %1309 = vmatpush1.bf16.xpose.msra.mxu0 %v1289
      %1310 = vmatprep.subr.bf16.mxu0 0
      %1311 = vmatpush2.bf16.xpose.msra.mxu0 0
      %1312 = vmatprep.subr.bf16.mxu0 0
      %1313 = vmatpush2.bf16.xpose.msra.mxu0 0
      %1314 = vmatprep.subr.bf16.mxu0 0
      %1315 = vmatpush2.bf16.xpose.msra.mxu0 0
      %1316 = vmatprep.subr.bf16.mxu0 0
      %1317 = vmatpush2.bf16.xpose.msra.mxu0 0
      %1318 = vmatprep.subr.bf16.mxu0 0
      %1319 = vmatpush2.bf16.xpose.msra.mxu0 0
      %1320 = vmatprep.subr.bf16.mxu0 0
      %1321 = vmatpush2.bf16.xpose.msra.mxu0 0
      %1322 = vmatprep.subr.bf16.mxu0 0
      %1323 = vmatpush2.bf16.xpose.msra.mxu0 0
      %1324 = vmatprep.subr.bf16.mxu0 0
      %1325 = vmatpush2.bf16.xpose.msra.mxu0 0
      %1326 = vmatprep.mubr.bf16.mxu0 0
      %1327 = vmatmul.mubr.bf16.gmra.mxu0 %v1283
      %v1328 = vpop.f32.mrf.mxu0
      %v1329 = vadd.f32 0.0, %v1328
      %v1330 = vpop.f32.mrf.mxu0
      %v1331 = vpop.f32.mrf.mxu0
      %v1332 = vadd.f32 0.0, %v1331
      %v1333 = vpop.f32.mrf.mxu0
      %1334 = vmatprep.mubr.bf16.mxu0 0
      %1335 = vmatmul.mubr.bf16.gmra.mxu0 %v1286
      %v1336 = vpop.f32.mrf.mxu0
      %v1337 = vadd.f32 0.0, %v1336
      %v1338 = vpop.f32.mrf.mxu0
      %v1339 = vpop.f32.mrf.mxu0
      %v1340 = vpop.f32.mrf.mxu0
      %1341 = vdwg.mxu0
      %v1342 = vsel %vm1204, %v1263, -1e+30
      %v1343 = vsel %vm1204, %v1266, -1e+30
      %v1344 = vsel %vm1204, %v1271, -1e+30
      %v1345 = vsel %vm1204, %v1329, -1e+30
      %v1346 = vsel %vm1204, %v1332, -1e+30
      %v1347 = vsel %vm1204, %v1337, -1e+30
      %vm1348 = vcmask 195584
      %v1349 = vsel %vm1348, %v1342, -inf
      %1350 = vmax.xlane.f32.xlu0 %v1349
      %v1351 = vpop.xlane.xlu0 %1350
      %v1352 = vsel %vm1348, %v1343, -inf
      %1353 = vmax.xlane.f32.xlu0 %v1352
      %v1354 = vpop.xlane.xlu0 %1353
      %v1355 = vsel %vm1348, %v1344, -inf
      %1356 = vmax.xlane.f32.xlu0 %v1355
      %v1357 = vpop.xlane.xlu0 %1356
      %v1358 = vsel %vm1348, %v1345, -inf
      %1359 = vmax.xlane.f32.xlu0 %v1358
      %v1360 = vpop.xlane.xlu0 %1359
      %v1361 = vsel %vm1348, %v1346, -inf
      %1362 = vmax.xlane.f32.xlu0 %v1361
      %v1363 = vpop.xlane.xlu0 %1362
      %v1364 = vsel %vm1348, %v1347, -inf
      %1365 = vmax.xlane.f32.xlu0 %v1364
      %v1366 = vpop.xlane.xlu0 %1365
      %v1367 = vsub.f32 %v1342, %v1351
      %v1368 = vsub.f32 %v1343, %v1354
      %v1369 = vsub.f32 %v1344, %v1357
      %v1370 = vsub.f32 %v1345, %v1360
      %v1371 = vsub.f32 %v1346, %v1363
      %v1372 = vsub.f32 %v1347, %v1366
      %v1373 = vmul.f32 %v1367, 1.442695
      %v1374 = vpow.pop %v1373
      %v1375 = vmul.f32 %v1368, 1.442695
      %v1376 = vpow.pop %v1375
      %v1377 = vmul.f32 %v1369, 1.442695
      %v1378 = vpow.pop %v1377
      %v1379 = vmul.f32 %v1370, 1.442695
      %v1380 = vpow.pop %v1379
      %v1381 = vmul.f32 %v1371, 1.442695
      %v1382 = vpow.pop %v1381
      %v1383 = vmul.f32 %v1372, 1.442695
      %v1384 = vpow.pop %v1383
      %v1385 = vsel %vm1348, %v1374, 0.0
      %1386 = vadd.xlane.f32.xlu0 %v1385
      %v1387 = vpop.xlane.xlu0 %1386
      %v1388 = vsel %vm1348, %v1376, 0.0
      %1389 = vadd.xlane.f32.xlu0 %v1388
      %v1390 = vpop.xlane.xlu0 %1389
      %v1391 = vsel %vm1348, %v1378, 0.0
      %1392 = vadd.xlane.f32.xlu0 %v1391
      %v1393 = vpop.xlane.xlu0 %1392
      %v1394 = vsel %vm1348, %v1380, 0.0
      %1395 = vadd.xlane.f32.xlu0 %v1394
      %v1396 = vpop.xlane.xlu0 %1395
      %v1397 = vsel %vm1348, %v1382, 0.0
      %1398 = vadd.xlane.f32.xlu0 %v1397
      %v1399 = vpop.xlane.xlu0 %1398
      %v1400 = vsel %vm1348, %v1384, 0.0
      %1401 = vadd.xlane.f32.xlu0 %v1400
      %v1402 = vpop.xlane.xlu0 %1401
      %v1403 = vrcp.pop %v1387
      %v1404 = vrcp.pop %v1390
      %v1405 = vrcp.pop %v1393
      %v1406 = vrcp.pop %v1396
      %v1407 = vrcp.pop %v1399
      %v1408 = vrcp.pop %v1402
      %v1409 = vmul.f32 %v1374, %v1403
      %v1410 = vmul.f32 %v1376, %v1404
      %v1411 = vmul.f32 %v1378, %v1405
      %v1412 = vmul.f32 %v1380, %v1406
      %v1413 = vmul.f32 %v1382, %v1407
      %v1414 = vmul.f32 %v1384, %v1408
      %v1415 = vpack.c.bf16 %v1410, %v1409
      %v1416 = vpack.c.bf16 %v1411, %v1411
      %v1417 = vpack.c.bf16 %v1413, %v1412
      %v1418 = vpack.c.bf16 %v1414, %v1414
      %1419 = vrot.lane.b32.xlu0 %v1205, 64
      %v1420 = vpop.permute.xlu0 %1419
      %1421 = vrot.lane.b32.xlu0 %v1206, 64
      %v1422 = vpop.permute.xlu0 %1421
      %v1425 = vsel %vm1348, %v1415, 0
      %v1428 = vsel %vm1348, %v1416, 0
      %vm1430 = vcmask 1043456
      %v1432 = vsel %vm1430, %v1422, 0
      %1434 = vmatprep.subr.bf16.mxu0 0
      %1435 = vmatpush1.bf16.msra.mxu0 0
      %1436 = vmatprep.subr.bf16.mxu0 0
      %1437 = vmatpush1.bf16.msra.mxu0 0
      %1438 = vmatprep.subr.bf16.mxu0 0
      %1439 = vmatpush1.bf16.msra.mxu0 0
      %1440 = vmatprep.subr.bf16.mxu0 0
      %1441 = vmatpush1.bf16.msra.mxu0 0
      %1442 = vmatprep.subr.bf16.mxu0 0
      %1443 = vmatpush1.bf16.msra.mxu0 0
      %1444 = vmatprep.subr.bf16.mxu0 0
      %1445 = vmatpush1.bf16.msra.mxu0 0
      %1446 = vmatprep.subr.bf16.mxu0 0
      %1447 = vmatpush1.bf16.msra.mxu0 %v1432
      %1448 = vmatprep.subr.bf16.mxu0 0
      %1449 = vmatpush1.bf16.msra.mxu0 %v1420
      %1450 = vmatprep.subr.bf16.mxu0 0
      %1451 = vmatpush2.bf16.msra.mxu0 0
      %1452 = vmatprep.subr.bf16.mxu0 0
      %1453 = vmatpush2.bf16.msra.mxu0 0
      %1454 = vmatprep.subr.bf16.mxu0 0
      %1455 = vmatpush2.bf16.msra.mxu0 0
      %1456 = vmatprep.subr.bf16.mxu0 0
      %1457 = vmatpush2.bf16.msra.mxu0 0
      %1458 = vmatprep.subr.bf16.mxu0 0
      %1459 = vmatpush2.bf16.msra.mxu0 0
      %1460 = vmatprep.subr.bf16.mxu0 0
      %1461 = vmatpush2.bf16.msra.mxu0 0
      %1462 = vmatprep.subr.bf16.mxu0 0
      %1463 = vmatpush2.bf16.msra.mxu0 0
      %1464 = vmatprep.subr.bf16.mxu0 0
      %1465 = vmatpush2.bf16.msra.mxu0 0
      %1466 = vmatprep.mubr.bf16.mxu0 0
      %1467 = vmatmul.mubr.bf16.gmra.mxu0 %v1425
      %v1468 = vpop.f32.mrf.mxu0
      %v1469 = vadd.f32 0.0, %v1468
      %v1470 = vpop.f32.mrf.mxu0
      %v1471 = vpop.f32.mrf.mxu0
      %v1472 = vadd.f32 0.0, %v1471
      %v1473 = vpop.f32.mrf.mxu0
      %1474 = vmatprep.mubr.bf16.mxu0 0
      %1475 = vmatmul.mubr.bf16.gmra.mxu0 %v1428
      %v1476 = vpop.f32.mrf.mxu0
      %v1477 = vadd.f32 0.0, %v1476
      %v1478 = vpop.f32.mrf.mxu0
      %v1479 = vpop.f32.mrf.mxu0
      %v1480 = vpop.f32.mrf.mxu0
      %1481 = vdwg.mxu0
      %1482 = vrot.lane.b32.xlu0 %v1207, 64
      %v1483 = vpop.permute.xlu0 %1482
      %1484 = vrot.lane.b32.xlu0 %v1208, 64
      %v1485 = vpop.permute.xlu0 %1484
      %v1488 = vsel %vm1348, %v1417, 0
      %v1491 = vsel %vm1348, %v1418, 0
      %v1494 = vsel %vm1430, %v1485, 0
      %1496 = vmatprep.subr.bf16.mxu0 0
      %1497 = vmatpush1.bf16.msra.mxu0 0
      %1498 = vmatprep.subr.bf16.mxu0 0
      %1499 = vmatpush1.bf16.msra.mxu0 0
      %1500 = vmatprep.subr.bf16.mxu0 0
      %1501 = vmatpush1.bf16.msra.mxu0 0
      %1502 = vmatprep.subr.bf16.mxu0 0
      %1503 = vmatpush1.bf16.msra.mxu0 0
      %1504 = vmatprep.subr.bf16.mxu0 0
      %1505 = vmatpush1.bf16.msra.mxu0 0
      %1506 = vmatprep.subr.bf16.mxu0 0
      %1507 = vmatpush1.bf16.msra.mxu0 0
      %1508 = vmatprep.subr.bf16.mxu0 0
      %1509 = vmatpush1.bf16.msra.mxu0 %v1494
      %1510 = vmatprep.subr.bf16.mxu0 0
      %1511 = vmatpush1.bf16.msra.mxu0 %v1483
      %1512 = vmatprep.subr.bf16.mxu0 0
      %1513 = vmatpush2.bf16.msra.mxu0 0
      %1514 = vmatprep.subr.bf16.mxu0 0
      %1515 = vmatpush2.bf16.msra.mxu0 0
      %1516 = vmatprep.subr.bf16.mxu0 0
      %1517 = vmatpush2.bf16.msra.mxu0 0
      %1518 = vmatprep.subr.bf16.mxu0 0
      %1519 = vmatpush2.bf16.msra.mxu0 0
      %1520 = vmatprep.subr.bf16.mxu0 0
      %1521 = vmatpush2.bf16.msra.mxu0 0
      %1522 = vmatprep.subr.bf16.mxu0 0
      %1523 = vmatpush2.bf16.msra.mxu0 0
      %1524 = vmatprep.subr.bf16.mxu0 0
      %1525 = vmatpush2.bf16.msra.mxu0 0
      %1526 = vmatprep.subr.bf16.mxu0 0
      %1527 = vmatpush2.bf16.msra.mxu0 0
      %1528 = vmatprep.mubr.bf16.mxu0 0
      %1529 = vmatmul.mubr.bf16.gmra.mxu0 %v1488
      %v1530 = vpop.f32.mrf.mxu0
      %v1531 = vadd.f32 0.0, %v1530
      %v1532 = vpop.f32.mrf.mxu0
      %v1533 = vpop.f32.mrf.mxu0
      %v1534 = vadd.f32 0.0, %v1533
      %v1535 = vpop.f32.mrf.mxu0
      %1536 = vmatprep.mubr.bf16.mxu0 0
      %1537 = vmatmul.mubr.bf16.gmra.mxu0 %v1491
      %v1538 = vpop.f32.mrf.mxu0
      %v1539 = vadd.f32 0.0, %v1538
      %v1540 = vpop.f32.mrf.mxu0
      %v1541 = vpop.f32.mrf.mxu0
      %v1542 = vpop.f32.mrf.mxu0
      %1543 = vdwg.mxu0
      %v1544 = vpack.c.bf16 %v1472, %v1469
      %v1545 = vpack.c.bf16 %v1531, %v1477
      %v1546 = vpack.c.bf16 %v1539, %v1534
      %v1547 = vld [vmem:[%s826] sm:$0xf]
      %1548 = vrot.lane.b32.xlu0 %v1205, 120
      %v1549 = vpop.permute.xlu0 %1548
      %1550 = vrot.lane.b32.xlu0 %v1206, 120
      %v1551 = vpop.permute.xlu0 %1550
      %1552 = vrot.lane.b32.xlu0 %v1205, 88
      %v1553 = vpop.permute.xlu0 %1552
      %1554 = vrot.lane.b32.xlu0 %v1206, 88
      %v1555 = vpop.permute.xlu0 %1554
      %v1557 = vsel %vm1215, %v1549, 0
      %v1560 = vsel %vm1215, %v1551, 0
      %v1563 = vsel %vm1215, %v1553, 0
      %v1566 = vsel %vm1215, %v1555, 0
      %1568 = vmatprep.subr.bf16.mxu0 0
      %1569 = vmatpush1.bf16.xpose.msra.mxu0 0
      %1570 = vmatprep.subr.bf16.mxu0 0
      %1571 = vmatpush1.bf16.xpose.msra.mxu0 0
      %1572 = vmatprep.subr.bf16.mxu0 0
      %1573 = vmatpush1.bf16.xpose.msra.mxu0 0
      %1574 = vmatprep.subr.bf16.mxu0 0
      %1575 = vmatpush1.bf16.xpose.msra.mxu0 0
      %1576 = vmatprep.subr.bf16.mxu0 0
      %1577 = vmatpush1.bf16.xpose.msra.mxu0 0
      %1578 = vmatprep.subr.bf16.mxu0 0
      %1579 = vmatpush1.bf16.xpose.msra.mxu0 0
      %1580 = vmatprep.subr.bf16.mxu0 0
      %1581 = vmatpush1.bf16.xpose.msra.mxu0 %v1566
      %1582 = vmatprep.subr.bf16.mxu0 0
      %1583 = vmatpush1.bf16.xpose.msra.mxu0 %v1563
      %1584 = vmatprep.subr.bf16.mxu0 0
      %1585 = vmatpush2.bf16.xpose.msra.mxu0 0
      %1586 = vmatprep.subr.bf16.mxu0 0
      %1587 = vmatpush2.bf16.xpose.msra.mxu0 0
      %1588 = vmatprep.subr.bf16.mxu0 0
      %1589 = vmatpush2.bf16.xpose.msra.mxu0 0
      %1590 = vmatprep.subr.bf16.mxu0 0
      %1591 = vmatpush2.bf16.xpose.msra.mxu0 0
      %1592 = vmatprep.subr.bf16.mxu0 0
      %1593 = vmatpush2.bf16.xpose.msra.mxu0 0
      %1594 = vmatprep.subr.bf16.mxu0 0
      %1595 = vmatpush2.bf16.xpose.msra.mxu0 0
      %1596 = vmatprep.subr.bf16.mxu0 0
      %1597 = vmatpush2.bf16.xpose.msra.mxu0 0
      %1598 = vmatprep.subr.bf16.mxu0 0
      %1599 = vmatpush2.bf16.xpose.msra.mxu0 0
      %1600 = vmatprep.mubr.bf16.mxu0 0
      %1601 = vmatmul.mubr.bf16.gmra.mxu0 %v1557
      %v1602 = vpop.f32.mrf.mxu0
      %v1603 = vadd.f32 0.0, %v1602
      %v1604 = vpop.f32.mrf.mxu0
      %v1605 = vpop.f32.mrf.mxu0
      %v1606 = vadd.f32 0.0, %v1605
      %v1607 = vpop.f32.mrf.mxu0
      %1608 = vmatprep.mubr.bf16.mxu0 0
      %1609 = vmatmul.mubr.bf16.gmra.mxu0 %v1560
      %v1610 = vpop.f32.mrf.mxu0
      %v1611 = vadd.f32 0.0, %v1610
      %v1612 = vpop.f32.mrf.mxu0
      %v1613 = vpop.f32.mrf.mxu0
      %v1614 = vpop.f32.mrf.mxu0
      %1615 = vdwg.mxu0
      %1616 = vrot.lane.b32.xlu0 %v1207, 120
      %v1617 = vpop.permute.xlu0 %1616
      %1618 = vrot.lane.b32.xlu0 %v1208, 120
      %v1619 = vpop.permute.xlu0 %1618
      %1620 = vrot.lane.b32.xlu0 %v1207, 88
      %v1621 = vpop.permute.xlu0 %1620
      %1622 = vrot.lane.b32.xlu0 %v1208, 88
      %v1623 = vpop.permute.xlu0 %1622
      %v1625 = vsel %vm1215, %v1617, 0
      %v1628 = vsel %vm1215, %v1619, 0
      %v1631 = vsel %vm1215, %v1621, 0
      %v1634 = vsel %vm1215, %v1623, 0
      %1636 = vmatprep.subr.bf16.mxu0 0
      %1637 = vmatpush1.bf16.xpose.msra.mxu0 0
      %1638 = vmatprep.subr.bf16.mxu0 0
      %1639 = vmatpush1.bf16.xpose.msra.mxu0 0
      %1640 = vmatprep.subr.bf16.mxu0 0
      %1641 = vmatpush1.bf16.xpose.msra.mxu0 0
      %1642 = vmatprep.subr.bf16.mxu0 0
      %1643 = vmatpush1.bf16.xpose.msra.mxu0 0
      %1644 = vmatprep.subr.bf16.mxu0 0
      %1645 = vmatpush1.bf16.xpose.msra.mxu0 0
      %1646 = vmatprep.subr.bf16.mxu0 0
      %1647 = vmatpush1.bf16.xpose.msra.mxu0 0
      %1648 = vmatprep.subr.bf16.mxu0 0
      %1649 = vmatpush1.bf16.xpose.msra.mxu0 %v1634
      %1650 = vmatprep.subr.bf16.mxu0 0
      %1651 = vmatpush1.bf16.xpose.msra.mxu0 %v1631
      %1652 = vmatprep.subr.bf16.mxu0 0
      %1653 = vmatpush2.bf16.xpose.msra.mxu0 0
      %1654 = vmatprep.subr.bf16.mxu0 0
      %1655 = vmatpush2.bf16.xpose.msra.mxu0 0
      %1656 = vmatprep.subr.bf16.mxu0 0
      %1657 = vmatpush2.bf16.xpose.msra.mxu0 0
      %1658 = vmatprep.subr.bf16.mxu0 0
      %1659 = vmatpush2.bf16.xpose.msra.mxu0 0
      %1660 = vmatprep.subr.bf16.mxu0 0
      %1661 = vmatpush2.bf16.xpose.msra.mxu0 0
      %1662 = vmatprep.subr.bf16.mxu0 0
      %1663 = vmatpush2.bf16.xpose.msra.mxu0 0
      %1664 = vmatprep.subr.bf16.mxu0 0
      %1665 = vmatpush2.bf16.xpose.msra.mxu0 0
      %1666 = vmatprep.subr.bf16.mxu0 0
      %1667 = vmatpush2.bf16.xpose.msra.mxu0 0
      %1668 = vmatprep.mubr.bf16.mxu0 0
      %1669 = vmatmul.mubr.bf16.gmra.mxu0 %v1625
      %v1670 = vpop.f32.mrf.mxu0
      %v1671 = vadd.f32 0.0, %v1670
      %v1672 = vpop.f32.mrf.mxu0
      %v1673 = vpop.f32.mrf.mxu0
      %v1674 = vadd.f32 0.0, %v1673
      %v1675 = vpop.f32.mrf.mxu0
      %1676 = vmatprep.mubr.bf16.mxu0 0
      %1677 = vmatmul.mubr.bf16.gmra.mxu0 %v1628
      %v1678 = vpop.f32.mrf.mxu0
      %v1679 = vadd.f32 0.0, %v1678
      %v1680 = vpop.f32.mrf.mxu0
      %v1681 = vpop.f32.mrf.mxu0
      %v1682 = vpop.f32.mrf.mxu0
      %1683 = vdwg.mxu0
      %v1684 = vsel %vm1204, %v1603, -1e+30
      %v1685 = vsel %vm1204, %v1606, -1e+30
      %v1686 = vsel %vm1204, %v1611, -1e+30
      %v1687 = vsel %vm1204, %v1671, -1e+30
      %v1688 = vsel %vm1204, %v1674, -1e+30
      %v1689 = vsel %vm1204, %v1679, -1e+30
      %v1690 = vsel %vm1348, %v1684, -inf
      %1691 = vmax.xlane.f32.xlu0 %v1690
      %v1692 = vpop.xlane.xlu0 %1691
      %v1693 = vsel %vm1348, %v1685, -inf
      %1694 = vmax.xlane.f32.xlu0 %v1693
      %v1695 = vpop.xlane.xlu0 %1694
      %v1696 = vsel %vm1348, %v1686, -inf
      %1697 = vmax.xlane.f32.xlu0 %v1696
      %v1698 = vpop.xlane.xlu0 %1697
      %v1699 = vsel %vm1348, %v1687, -inf
      %1700 = vmax.xlane.f32.xlu0 %v1699
      %v1701 = vpop.xlane.xlu0 %1700
      %v1702 = vsel %vm1348, %v1688, -inf
      %1703 = vmax.xlane.f32.xlu0 %v1702
      %v1704 = vpop.xlane.xlu0 %1703
      %v1705 = vsel %vm1348, %v1689, -inf
      %1706 = vmax.xlane.f32.xlu0 %v1705
      %v1707 = vpop.xlane.xlu0 %1706
      %v1708 = vsub.f32 %v1684, %v1692
      %v1709 = vsub.f32 %v1685, %v1695
      %v1710 = vsub.f32 %v1686, %v1698
      %v1711 = vsub.f32 %v1687, %v1701
      %v1712 = vsub.f32 %v1688, %v1704
      %v1713 = vsub.f32 %v1689, %v1707
      %v1714 = vmul.f32 %v1708, 1.442695
      %v1715 = vpow.pop %v1714
      %v1716 = vmul.f32 %v1709, 1.442695
      %v1717 = vpow.pop %v1716
      %v1718 = vmul.f32 %v1710, 1.442695
      %v1719 = vpow.pop %v1718
      %v1720 = vmul.f32 %v1711, 1.442695
      %v1721 = vpow.pop %v1720
      %v1722 = vmul.f32 %v1712, 1.442695
      %v1723 = vpow.pop %v1722
      %v1724 = vmul.f32 %v1713, 1.442695
      %v1725 = vpow.pop %v1724
      %v1726 = vsel %vm1348, %v1715, 0.0
      %1727 = vadd.xlane.f32.xlu0 %v1726
      %v1728 = vpop.xlane.xlu0 %1727
      %v1729 = vsel %vm1348, %v1717, 0.0
      %1730 = vadd.xlane.f32.xlu0 %v1729
      %v1731 = vpop.xlane.xlu0 %1730
      %v1732 = vsel %vm1348, %v1719, 0.0
      %1733 = vadd.xlane.f32.xlu0 %v1732
      %v1734 = vpop.xlane.xlu0 %1733
      %v1735 = vsel %vm1348, %v1721, 0.0
      %1736 = vadd.xlane.f32.xlu0 %v1735
      %v1737 = vpop.xlane.xlu0 %1736
      %v1738 = vsel %vm1348, %v1723, 0.0
      %1739 = vadd.xlane.f32.xlu0 %v1738
      %v1740 = vpop.xlane.xlu0 %1739
      %v1741 = vsel %vm1348, %v1725, 0.0
      %1742 = vadd.xlane.f32.xlu0 %v1741
      %v1743 = vpop.xlane.xlu0 %1742
      %v1744 = vrcp.pop %v1728
      %v1745 = vrcp.pop %v1731
      %v1746 = vrcp.pop %v1734
      %v1747 = vrcp.pop %v1737
      %v1748 = vrcp.pop %v1740
      %v1749 = vrcp.pop %v1743
      %v1750 = vmul.f32 %v1715, %v1744
      %v1751 = vmul.f32 %v1717, %v1745
      %v1752 = vmul.f32 %v1719, %v1746
      %v1753 = vmul.f32 %v1721, %v1747
      %v1754 = vmul.f32 %v1723, %v1748
      %v1755 = vmul.f32 %v1725, %v1749
      %v1756 = vpack.c.bf16 %v1751, %v1750
      %v1757 = vpack.c.bf16 %v1752, %v1752
      %v1758 = vpack.c.bf16 %v1754, %v1753
      %v1759 = vpack.c.bf16 %v1755, %v1755
      %1760 = vrot.lane.b32.xlu0 %v1205, 56
      %v1761 = vpop.permute.xlu0 %1760
      %1762 = vrot.lane.b32.xlu0 %v1206, 56
      %v1763 = vpop.permute.xlu0 %1762
      %v1766 = vsel %vm1348, %v1756, 0
      %v1769 = vsel %vm1348, %v1757, 0
      %v1772 = vsel %vm1430, %v1763, 0
      %1774 = vmatprep.subr.bf16.mxu0 0
      %1775 = vmatpush1.bf16.msra.mxu0 0
      %1776 = vmatprep.subr.bf16.mxu0 0
      %1777 = vmatpush1.bf16.msra.mxu0 0
      %1778 = vmatprep.subr.bf16.mxu0 0
      %1779 = vmatpush1.bf16.msra.mxu0 0
      %1780 = vmatprep.subr.bf16.mxu0 0
      %1781 = vmatpush1.bf16.msra.mxu0 0
      %1782 = vmatprep.subr.bf16.mxu0 0
      %1783 = vmatpush1.bf16.msra.mxu0 0
      %1784 = vmatprep.subr.bf16.mxu0 0
      %1785 = vmatpush1.bf16.msra.mxu0 0
      %1786 = vmatprep.subr.bf16.mxu0 0
      %1787 = vmatpush1.bf16.msra.mxu0 %v1772
      %1788 = vmatprep.subr.bf16.mxu0 0
      %1789 = vmatpush1.bf16.msra.mxu0 %v1761
      %1790 = vmatprep.subr.bf16.mxu0 0
      %1791 = vmatpush2.bf16.msra.mxu0 0
      %1792 = vmatprep.subr.bf16.mxu0 0
      %1793 = vmatpush2.bf16.msra.mxu0 0
      %1794 = vmatprep.subr.bf16.mxu0 0
      %1795 = vmatpush2.bf16.msra.mxu0 0
      %1796 = vmatprep.subr.bf16.mxu0 0
      %1797 = vmatpush2.bf16.msra.mxu0 0
      %1798 = vmatprep.subr.bf16.mxu0 0
      %1799 = vmatpush2.bf16.msra.mxu0 0
      %1800 = vmatprep.subr.bf16.mxu0 0
      %1801 = vmatpush2.bf16.msra.mxu0 0
      %1802 = vmatprep.subr.bf16.mxu0 0
      %1803 = vmatpush2.bf16.msra.mxu0 0
      %1804 = vmatprep.subr.bf16.mxu0 0
      %1805 = vmatpush2.bf16.msra.mxu0 0
      %1806 = vmatprep.mubr.bf16.mxu0 0
      %1807 = vmatmul.mubr.bf16.gmra.mxu0 %v1766
      %v1808 = vpop.f32.mrf.mxu0
      %v1809 = vadd.f32 0.0, %v1808
      %v1810 = vpop.f32.mrf.mxu0
      %v1811 = vpop.f32.mrf.mxu0
      %v1812 = vadd.f32 0.0, %v1811
      %v1813 = vpop.f32.mrf.mxu0
      %1814 = vmatprep.mubr.bf16.mxu0 0
      %1815 = vmatmul.mubr.bf16.gmra.mxu0 %v1769
      %v1816 = vpop.f32.mrf.mxu0
      %v1817 = vadd.f32 0.0, %v1816
      %v1818 = vpop.f32.mrf.mxu0
      %v1819 = vpop.f32.mrf.mxu0
      %v1820 = vpop.f32.mrf.mxu0
      %1821 = vdwg.mxu0
      %1822 = vrot.lane.b32.xlu0 %v1207, 56
      %v1823 = vpop.permute.xlu0 %1822
      %1824 = vrot.lane.b32.xlu0 %v1208, 56
      %v1825 = vpop.permute.xlu0 %1824
      %v1828 = vsel %vm1348, %v1758, 0
      %v1831 = vsel %vm1348, %v1759, 0
      %v1834 = vsel %vm1430, %v1825, 0
      %1836 = vmatprep.subr.bf16.mxu0 0
      %1837 = vmatpush1.bf16.msra.mxu0 0
      %1838 = vmatprep.subr.bf16.mxu0 0
      %1839 = vmatpush1.bf16.msra.mxu0 0
      %1840 = vmatprep.subr.bf16.mxu0 0
      %1841 = vmatpush1.bf16.msra.mxu0 0
      %1842 = vmatprep.subr.bf16.mxu0 0
      %1843 = vmatpush1.bf16.msra.mxu0 0
      %1844 = vmatprep.subr.bf16.mxu0 0
      %1845 = vmatpush1.bf16.msra.mxu0 0
      %1846 = vmatprep.subr.bf16.mxu0 0
      %1847 = vmatpush1.bf16.msra.mxu0 0
      %1848 = vmatprep.subr.bf16.mxu0 0
      %1849 = vmatpush1.bf16.msra.mxu0 %v1834
      %1850 = vmatprep.subr.bf16.mxu0 0
      %1851 = vmatpush1.bf16.msra.mxu0 %v1823
      %1852 = vmatprep.subr.bf16.mxu0 0
      %1853 = vmatpush2.bf16.msra.mxu0 0
      %1854 = vmatprep.subr.bf16.mxu0 0
      %1855 = vmatpush2.bf16.msra.mxu0 0
      %1856 = vmatprep.subr.bf16.mxu0 0
      %1857 = vmatpush2.bf16.msra.mxu0 0
      %1858 = vmatprep.subr.bf16.mxu0 0
      %1859 = vmatpush2.bf16.msra.mxu0 0
      %1860 = vmatprep.subr.bf16.mxu0 0
      %1861 = vmatpush2.bf16.msra.mxu0 0
      %1862 = vmatprep.subr.bf16.mxu0 0
      %1863 = vmatpush2.bf16.msra.mxu0 0
      %1864 = vmatprep.subr.bf16.mxu0 0
      %1865 = vmatpush2.bf16.msra.mxu0 0
      %1866 = vmatprep.subr.bf16.mxu0 0
      %1867 = vmatpush2.bf16.msra.mxu0 0
      %1868 = vmatprep.mubr.bf16.mxu0 0
      %1869 = vmatmul.mubr.bf16.gmra.mxu0 %v1828
      %v1870 = vpop.f32.mrf.mxu0
      %v1871 = vadd.f32 0.0, %v1870
      %v1872 = vpop.f32.mrf.mxu0
      %v1873 = vpop.f32.mrf.mxu0
      %v1874 = vadd.f32 0.0, %v1873
      %v1875 = vpop.f32.mrf.mxu0
      %1876 = vmatprep.mubr.bf16.mxu0 0
      %1877 = vmatmul.mubr.bf16.gmra.mxu0 %v1831
      %v1878 = vpop.f32.mrf.mxu0
      %v1879 = vadd.f32 0.0, %v1878
      %v1880 = vpop.f32.mrf.mxu0
      %v1881 = vpop.f32.mrf.mxu0
      %v1882 = vpop.f32.mrf.mxu0
      %1883 = vdwg.mxu0
      %v1884 = vpack.c.bf16 %v1812, %v1809
      %v1885 = vpack.c.bf16 %v1871, %v1817
      %v1886 = vpack.c.bf16 %v1879, %v1874
      %s1887 = scalar_lea.vmem %s826, 4
      %v1888 = vld [vmem:[%s1887] sm:$0xf]
      %v1890 = vsel %vm1215, %v1884, 0
      %v1893 = vsel %vm1215, %v1885, 0
      %v1896 = vsel %vm1215, %v1886, 0
      %v1899 = vsel %vm1430, %v1888, 0
      %1901 = vmatprep.subr.bf16.mxu0 0
      %1902 = vmatpush1.bf16.msra.mxu0 0
      %1903 = vmatprep.subr.bf16.mxu0 0
      %1904 = vmatpush1.bf16.msra.mxu0 0
      %1905 = vmatprep.subr.bf16.mxu0 0
      %1906 = vmatpush1.bf16.msra.mxu0 0
      %1907 = vmatprep.subr.bf16.mxu0 0
      %1908 = vmatpush1.bf16.msra.mxu0 0
      %1909 = vmatprep.subr.bf16.mxu0 0
      %1910 = vmatpush1.bf16.msra.mxu0 0
      %1911 = vmatprep.subr.bf16.mxu0 0
      %1912 = vmatpush1.bf16.msra.mxu0 0
      %1913 = vmatprep.subr.bf16.mxu0 0
      %1914 = vmatpush1.bf16.msra.mxu0 0
      %1915 = vmatprep.subr.bf16.mxu0 0
      %1916 = vmatpush1.bf16.msra.mxu0 %v1899
      %1917 = vmatprep.subr.bf16.mxu0 0
      %1918 = vmatpush2.bf16.msra.mxu0 0
      %1919 = vmatprep.subr.bf16.mxu0 0
      %1920 = vmatpush2.bf16.msra.mxu0 0
      %1921 = vmatprep.subr.bf16.mxu0 0
      %1922 = vmatpush2.bf16.msra.mxu0 0
      %1923 = vmatprep.subr.bf16.mxu0 0
      %1924 = vmatpush2.bf16.msra.mxu0 0
      %1925 = vmatprep.subr.bf16.mxu0 0
      %1926 = vmatpush2.bf16.msra.mxu0 0
      %1927 = vmatprep.subr.bf16.mxu0 0
      %1928 = vmatpush2.bf16.msra.mxu0 0
      %1929 = vmatprep.subr.bf16.mxu0 0
      %1930 = vmatpush2.bf16.msra.mxu0 0
      %1931 = vmatprep.subr.bf16.mxu0 0
      %1932 = vmatpush2.bf16.msra.mxu0 0
      %1933 = vmatprep.mubr.bf16.mxu0 0
      %1934 = vmatmul.mubr.bf16.gmra.mxu0 %v1890
      %v1935 = vpop.f32.mrf.mxu0
      %v1936 = vadd.f32 0.0, %v1935
      %v1937 = vpop.f32.mrf.mxu0
      %v1938 = vpop.f32.mrf.mxu0
      %v1939 = vadd.f32 0.0, %v1938
      %v1940 = vpop.f32.mrf.mxu0
      %1941 = vmatprep.mubr.bf16.mxu0 0
      %1942 = vmatmul.mubr.bf16.gmra.mxu0 %v1893
      %v1943 = vpop.f32.mrf.mxu0
      %v1944 = vadd.f32 0.0, %v1943
      %v1945 = vpop.f32.mrf.mxu0
      %v1946 = vpop.f32.mrf.mxu0
      %v1947 = vadd.f32 0.0, %v1946
      %v1948 = vpop.f32.mrf.mxu0
      %1949 = vmatprep.mubr.bf16.mxu0 0
      %1950 = vmatmul.mubr.bf16.gmra.mxu0 %v1896
      %v1951 = vpop.f32.mrf.mxu0
      %v1952 = vadd.f32 0.0, %v1951
      %v1953 = vpop.f32.mrf.mxu0
      %v1954 = vpop.f32.mrf.mxu0
      %v1955 = vadd.f32 0.0, %v1954
      %v1956 = vpop.f32.mrf.mxu0
      %1957 = vdwg.mxu0
      %v1959 = vsel %vm1215, %v1544, 0
      %v1962 = vsel %vm1215, %v1545, 0
      %v1965 = vsel %vm1215, %v1546, 0
      %v1968 = vsel %vm1430, %v1547, 0
      %1970 = vmatprep.subr.bf16.mxu0 0
      %1971 = vmatpush1.bf16.msra.mxu0 0
      %1972 = vmatprep.subr.bf16.mxu0 0
      %1973 = vmatpush1.bf16.msra.mxu0 0
      %1974 = vmatprep.subr.bf16.mxu0 0
      %1975 = vmatpush1.bf16.msra.mxu0 0
      %1976 = vmatprep.subr.bf16.mxu0 0
      %1977 = vmatpush1.bf16.msra.mxu0 0
      %1978 = vmatprep.subr.bf16.mxu0 0
      %1979 = vmatpush1.bf16.msra.mxu0 0
      %1980 = vmatprep.subr.bf16.mxu0 0
      %1981 = vmatpush1.bf16.msra.mxu0 0
      %1982 = vmatprep.subr.bf16.mxu0 0
      %1983 = vmatpush1.bf16.msra.mxu0 0
      %1984 = vmatprep.subr.bf16.mxu0 0
      %1985 = vmatpush1.bf16.msra.mxu0 %v1968
      %1986 = vmatprep.subr.bf16.mxu0 0
      %1987 = vmatpush2.bf16.msra.mxu0 0
      %1988 = vmatprep.subr.bf16.mxu0 0
      %1989 = vmatpush2.bf16.msra.mxu0 0
      %1990 = vmatprep.subr.bf16.mxu0 0
      %1991 = vmatpush2.bf16.msra.mxu0 0
      %1992 = vmatprep.subr.bf16.mxu0 0
      %1993 = vmatpush2.bf16.msra.mxu0 0
      %1994 = vmatprep.subr.bf16.mxu0 0
      %1995 = vmatpush2.bf16.msra.mxu0 0
      %1996 = vmatprep.subr.bf16.mxu0 0
      %1997 = vmatpush2.bf16.msra.mxu0 0
      %1998 = vmatprep.subr.bf16.mxu0 0
      %1999 = vmatpush2.bf16.msra.mxu0 0
      %2000 = vmatprep.subr.bf16.mxu0 0
      %2001 = vmatpush2.bf16.msra.mxu0 0
      %2002 = vmatprep.mubr.bf16.mxu0 0
      %2003 = vmatmul.mubr.bf16.gmra.mxu0 %v1959
      %v2004 = vpop.f32.mrf.mxu0
      %v2005 = vadd.f32 %v1936, %v2004
      %v2006 = vpop.f32.mrf.mxu0
      %v2007 = vpop.f32.mrf.mxu0
      %v2008 = vadd.f32 %v1939, %v2007
      %v2009 = vpop.f32.mrf.mxu0
      %2010 = vmatprep.mubr.bf16.mxu0 0
      %2011 = vmatmul.mubr.bf16.gmra.mxu0 %v1962
      %v2012 = vpop.f32.mrf.mxu0
      %v2013 = vadd.f32 %v1944, %v2012
      %v2014 = vpop.f32.mrf.mxu0
      %v2015 = vpop.f32.mrf.mxu0
      %v2016 = vadd.f32 %v1947, %v2015
      %v2017 = vpop.f32.mrf.mxu0
      %2018 = vmatprep.mubr.bf16.mxu0 0
      %2019 = vmatmul.mubr.bf16.gmra.mxu0 %v1965
      %v2020 = vpop.f32.mrf.mxu0
      %v2021 = vadd.f32 %v1952, %v2020
      %v2022 = vpop.f32.mrf.mxu0
      %v2023 = vpop.f32.mrf.mxu0
      %v2024 = vadd.f32 %v1955, %v2023
      %v2025 = vpop.f32.mrf.mxu0
      %2026 = vdwg.mxu0
      %2027 = vrot.lane.b32.xlu0 %v1205, 112
      %v2028 = vpop.permute.xlu0 %2027
      %2029 = vrot.lane.b32.xlu0 %v1206, 112
      %v2030 = vpop.permute.xlu0 %2029
      %2031 = vrot.lane.b32.xlu0 %v1205, 80
      %v2032 = vpop.permute.xlu0 %2031
      %2033 = vrot.lane.b32.xlu0 %v1206, 80
      %v2034 = vpop.permute.xlu0 %2033
      %v2036 = vsel %vm1215, %v2028, 0
      %v2039 = vsel %vm1215, %v2030, 0
      %v2042 = vsel %vm1215, %v2032, 0
      %v2045 = vsel %vm1215, %v2034, 0
      %2047 = vmatprep.subr.bf16.mxu0 0
      %2048 = vmatpush1.bf16.xpose.msra.mxu0 0
      %2049 = vmatprep.subr.bf16.mxu0 0
      %2050 = vmatpush1.bf16.xpose.msra.mxu0 0
      %2051 = vmatprep.subr.bf16.mxu0 0
      %2052 = vmatpush1.bf16.xpose.msra.mxu0 0
      %2053 = vmatprep.subr.bf16.mxu0 0
      %2054 = vmatpush1.bf16.xpose.msra.mxu0 0
      %2055 = vmatprep.subr.bf16.mxu0 0
      %2056 = vmatpush1.bf16.xpose.msra.mxu0 0
      %2057 = vmatprep.subr.bf16.mxu0 0
      %2058 = vmatpush1.bf16.xpose.msra.mxu0 0
      %2059 = vmatprep.subr.bf16.mxu0 0
      %2060 = vmatpush1.bf16.xpose.msra.mxu0 %v2045
      %2061 = vmatprep.subr.bf16.mxu0 0
      %2062 = vmatpush1.bf16.xpose.msra.mxu0 %v2042
      %2063 = vmatprep.subr.bf16.mxu0 0
      %2064 = vmatpush2.bf16.xpose.msra.mxu0 0
      %2065 = vmatprep.subr.bf16.mxu0 0
      %2066 = vmatpush2.bf16.xpose.msra.mxu0 0
      %2067 = vmatprep.subr.bf16.mxu0 0
      %2068 = vmatpush2.bf16.xpose.msra.mxu0 0
      %2069 = vmatprep.subr.bf16.mxu0 0
      %2070 = vmatpush2.bf16.xpose.msra.mxu0 0
      %2071 = vmatprep.subr.bf16.mxu0 0
      %2072 = vmatpush2.bf16.xpose.msra.mxu0 0
      %2073 = vmatprep.subr.bf16.mxu0 0
      %2074 = vmatpush2.bf16.xpose.msra.mxu0 0
      %2075 = vmatprep.subr.bf16.mxu0 0
      %2076 = vmatpush2.bf16.xpose.msra.mxu0 0
      %2077 = vmatprep.subr.bf16.mxu0 0
      %2078 = vmatpush2.bf16.xpose.msra.mxu0 0
      %2079 = vmatprep.mubr.bf16.mxu0 0
      %2080 = vmatmul.mubr.bf16.gmra.mxu0 %v2036
      %v2081 = vpop.f32.mrf.mxu0
      %v2082 = vadd.f32 0.0, %v2081
      %v2083 = vpop.f32.mrf.mxu0
      %v2084 = vpop.f32.mrf.mxu0
      %v2085 = vadd.f32 0.0, %v2084
      %v2086 = vpop.f32.mrf.mxu0
      %2087 = vmatprep.mubr.bf16.mxu0 0
      %2088 = vmatmul.mubr.bf16.gmra.mxu0 %v2039
      %v2089 = vpop.f32.mrf.mxu0
      %v2090 = vadd.f32 0.0, %v2089
      %v2091 = vpop.f32.mrf.mxu0
      %v2092 = vpop.f32.mrf.mxu0
      %v2093 = vpop.f32.mrf.mxu0
      %2094 = vdwg.mxu0
      %2095 = vrot.lane.b32.xlu0 %v1207, 112
      %v2096 = vpop.permute.xlu0 %2095
      %2097 = vrot.lane.b32.xlu0 %v1208, 112
      %v2098 = vpop.permute.xlu0 %2097
      %2099 = vrot.lane.b32.xlu0 %v1207, 80
      %v2100 = vpop.permute.xlu0 %2099
      %2101 = vrot.lane.b32.xlu0 %v1208, 80
      %v2102 = vpop.permute.xlu0 %2101
      %v2104 = vsel %vm1215, %v2096, 0
      %v2107 = vsel %vm1215, %v2098, 0
      %v2110 = vsel %vm1215, %v2100, 0
      %v2113 = vsel %vm1215, %v2102, 0
      %2115 = vmatprep.subr.bf16.mxu0 0
      %2116 = vmatpush1.bf16.xpose.msra.mxu0 0
      %2117 = vmatprep.subr.bf16.mxu0 0
      %2118 = vmatpush1.bf16.xpose.msra.mxu0 0
      %2119 = vmatprep.subr.bf16.mxu0 0
      %2120 = vmatpush1.bf16.xpose.msra.mxu0 0
      %2121 = vmatprep.subr.bf16.mxu0 0
      %2122 = vmatpush1.bf16.xpose.msra.mxu0 0
      %2123 = vmatprep.subr.bf16.mxu0 0
      %2124 = vmatpush1.bf16.xpose.msra.mxu0 0
      %2125 = vmatprep.subr.bf16.mxu0 0
      %2126 = vmatpush1.bf16.xpose.msra.mxu0 0
      %2127 = vmatprep.subr.bf16.mxu0 0
      %2128 = vmatpush1.bf16.xpose.msra.mxu0 %v2113
      %2129 = vmatprep.subr.bf16.mxu0 0
      %2130 = vmatpush1.bf16.xpose.msra.mxu0 %v2110
      %2131 = vmatprep.subr.bf16.mxu0 0
      %2132 = vmatpush2.bf16.xpose.msra.mxu0 0
      %2133 = vmatprep.subr.bf16.mxu0 0
      %2134 = vmatpush2.bf16.xpose.msra.mxu0 0
      %2135 = vmatprep.subr.bf16.mxu0 0
      %2136 = vmatpush2.bf16.xpose.msra.mxu0 0
      %2137 = vmatprep.subr.bf16.mxu0 0
      %2138 = vmatpush2.bf16.xpose.msra.mxu0 0
      %2139 = vmatprep.subr.bf16.mxu0 0
      %2140 = vmatpush2.bf16.xpose.msra.mxu0 0
      %2141 = vmatprep.subr.bf16.mxu0 0
      %2142 = vmatpush2.bf16.xpose.msra.mxu0 0
      %2143 = vmatprep.subr.bf16.mxu0 0
      %2144 = vmatpush2.bf16.xpose.msra.mxu0 0
      %2145 = vmatprep.subr.bf16.mxu0 0
      %2146 = vmatpush2.bf16.xpose.msra.mxu0 0
      %2147 = vmatprep.mubr.bf16.mxu0 0
      %2148 = vmatmul.mubr.bf16.gmra.mxu0 %v2104
      %v2149 = vpop.f32.mrf.mxu0
      %v2150 = vadd.f32 0.0, %v2149
      %v2151 = vpop.f32.mrf.mxu0
      %v2152 = vpop.f32.mrf.mxu0
      %v2153 = vadd.f32 0.0, %v2152
      %v2154 = vpop.f32.mrf.mxu0
      %2155 = vmatprep.mubr.bf16.mxu0 0
      %2156 = vmatmul.mubr.bf16.gmra.mxu0 %v2107
      %v2157 = vpop.f32.mrf.mxu0
      %v2158 = vadd.f32 0.0, %v2157
      %v2159 = vpop.f32.mrf.mxu0
      %v2160 = vpop.f32.mrf.mxu0
      %v2161 = vpop.f32.mrf.mxu0
      %2162 = vdwg.mxu0
      %v2163 = vsel %vm1204, %v2082, -1e+30
      %v2164 = vsel %vm1204, %v2085, -1e+30
      %v2165 = vsel %vm1204, %v2090, -1e+30
      %v2166 = vsel %vm1204, %v2150, -1e+30
      %v2167 = vsel %vm1204, %v2153, -1e+30
      %v2168 = vsel %vm1204, %v2158, -1e+30
      %v2169 = vsel %vm1348, %v2163, -inf
      %2170 = vmax.xlane.f32.xlu0 %v2169
      %v2171 = vpop.xlane.xlu0 %2170
      %v2172 = vsel %vm1348, %v2164, -inf
      %2173 = vmax.xlane.f32.xlu0 %v2172
      %v2174 = vpop.xlane.xlu0 %2173
      %v2175 = vsel %vm1348, %v2165, -inf
      %2176 = vmax.xlane.f32.xlu0 %v2175
      %v2177 = vpop.xlane.xlu0 %2176
      %v2178 = vsel %vm1348, %v2166, -inf
      %2179 = vmax.xlane.f32.xlu0 %v2178
      %v2180 = vpop.xlane.xlu0 %2179
      %v2181 = vsel %vm1348, %v2167, -inf
      %2182 = vmax.xlane.f32.xlu0 %v2181
      %v2183 = vpop.xlane.xlu0 %2182
      %v2184 = vsel %vm1348, %v2168, -inf
      %2185 = vmax.xlane.f32.xlu0 %v2184
      %v2186 = vpop.xlane.xlu0 %2185
      %v2187 = vsub.f32 %v2163, %v2171
      %v2188 = vsub.f32 %v2164, %v2174
      %v2189 = vsub.f32 %v2165, %v2177
      %v2190 = vsub.f32 %v2166, %v2180
      %v2191 = vsub.f32 %v2167, %v2183
      %v2192 = vsub.f32 %v2168, %v2186
      %v2193 = vmul.f32 %v2187, 1.442695
      %v2194 = vpow.pop %v2193
      %v2195 = vmul.f32 %v2188, 1.442695
      %v2196 = vpow.pop %v2195
      %v2197 = vmul.f32 %v2189, 1.442695
      %v2198 = vpow.pop %v2197
      %v2199 = vmul.f32 %v2190, 1.442695
      %v2200 = vpow.pop %v2199
      %v2201 = vmul.f32 %v2191, 1.442695
      %v2202 = vpow.pop %v2201
      %v2203 = vmul.f32 %v2192, 1.442695
      %v2204 = vpow.pop %v2203
      %v2205 = vsel %vm1348, %v2194, 0.0
      %2206 = vadd.xlane.f32.xlu0 %v2205
      %v2207 = vpop.xlane.xlu0 %2206
      %v2208 = vsel %vm1348, %v2196, 0.0
      %2209 = vadd.xlane.f32.xlu0 %v2208
      %v2210 = vpop.xlane.xlu0 %2209
      %v2211 = vsel %vm1348, %v2198, 0.0
      %2212 = vadd.xlane.f32.xlu0 %v2211
      %v2213 = vpop.xlane.xlu0 %2212
      %v2214 = vsel %vm1348, %v2200, 0.0
      %2215 = vadd.xlane.f32.xlu0 %v2214
      %v2216 = vpop.xlane.xlu0 %2215
      %v2217 = vsel %vm1348, %v2202, 0.0
      %2218 = vadd.xlane.f32.xlu0 %v2217
      %v2219 = vpop.xlane.xlu0 %2218
      %v2220 = vsel %vm1348, %v2204, 0.0
      %2221 = vadd.xlane.f32.xlu0 %v2220
      %v2222 = vpop.xlane.xlu0 %2221
      %v2223 = vrcp.pop %v2207
      %v2224 = vrcp.pop %v2210
      %v2225 = vrcp.pop %v2213
      %v2226 = vrcp.pop %v2216
      %v2227 = vrcp.pop %v2219
      %v2228 = vrcp.pop %v2222
      %v2229 = vmul.f32 %v2194, %v2223
      %v2230 = vmul.f32 %v2196, %v2224
      %v2231 = vmul.f32 %v2198, %v2225
      %v2232 = vmul.f32 %v2200, %v2226
      %v2233 = vmul.f32 %v2202, %v2227
      %v2234 = vmul.f32 %v2204, %v2228
      %v2235 = vpack.c.bf16 %v2230, %v2229
      %v2236 = vpack.c.bf16 %v2231, %v2231
      %v2237 = vpack.c.bf16 %v2233, %v2232
      %v2238 = vpack.c.bf16 %v2234, %v2234
      %2239 = vrot.lane.b32.xlu0 %v1205, 48
      %v2240 = vpop.permute.xlu0 %2239
      %2241 = vrot.lane.b32.xlu0 %v1206, 48
      %v2242 = vpop.permute.xlu0 %2241
      %v2245 = vsel %vm1348, %v2235, 0
      %v2248 = vsel %vm1348, %v2236, 0
      %v2251 = vsel %vm1430, %v2242, 0
      %2253 = vmatprep.subr.bf16.mxu0 0
      %2254 = vmatpush1.bf16.msra.mxu0 0
      %2255 = vmatprep.subr.bf16.mxu0 0
      %2256 = vmatpush1.bf16.msra.mxu0 0
      %2257 = vmatprep.subr.bf16.mxu0 0
      %2258 = vmatpush1.bf16.msra.mxu0 0
      %2259 = vmatprep.subr.bf16.mxu0 0
      %2260 = vmatpush1.bf16.msra.mxu0 0
      %2261 = vmatprep.subr.bf16.mxu0 0
      %2262 = vmatpush1.bf16.msra.mxu0 0
      %2263 = vmatprep.subr.bf16.mxu0 0
      %2264 = vmatpush1.bf16.msra.mxu0 0
      %2265 = vmatprep.subr.bf16.mxu0 0
      %2266 = vmatpush1.bf16.msra.mxu0 %v2251
      %2267 = vmatprep.subr.bf16.mxu0 0
      %2268 = vmatpush1.bf16.msra.mxu0 %v2240
      %2269 = vmatprep.subr.bf16.mxu0 0
      %2270 = vmatpush2.bf16.msra.mxu0 0
      %2271 = vmatprep.subr.bf16.mxu0 0
      %2272 = vmatpush2.bf16.msra.mxu0 0
      %2273 = vmatprep.subr.bf16.mxu0 0
      %2274 = vmatpush2.bf16.msra.mxu0 0
      %2275 = vmatprep.subr.bf16.mxu0 0
      %2276 = vmatpush2.bf16.msra.mxu0 0
      %2277 = vmatprep.subr.bf16.mxu0 0
      %2278 = vmatpush2.bf16.msra.mxu0 0
      %2279 = vmatprep.subr.bf16.mxu0 0
      %2280 = vmatpush2.bf16.msra.mxu0 0
      %2281 = vmatprep.subr.bf16.mxu0 0
      %2282 = vmatpush2.bf16.msra.mxu0 0
      %2283 = vmatprep.subr.bf16.mxu0 0
      %2284 = vmatpush2.bf16.msra.mxu0 0
      %2285 = vmatprep.mubr.bf16.mxu0 0
      %2286 = vmatmul.mubr.bf16.gmra.mxu0 %v2245
      %v2287 = vpop.f32.mrf.mxu0
      %v2288 = vadd.f32 0.0, %v2287
      %v2289 = vpop.f32.mrf.mxu0
      %v2290 = vpop.f32.mrf.mxu0
      %v2291 = vadd.f32 0.0, %v2290
      %v2292 = vpop.f32.mrf.mxu0
      %2293 = vmatprep.mubr.bf16.mxu0 0
      %2294 = vmatmul.mubr.bf16.gmra.mxu0 %v2248
      %v2295 = vpop.f32.mrf.mxu0
      %v2296 = vadd.f32 0.0, %v2295
      %v2297 = vpop.f32.mrf.mxu0
      %v2298 = vpop.f32.mrf.mxu0
      %v2299 = vpop.f32.mrf.mxu0
      %2300 = vdwg.mxu0
      %2301 = vrot.lane.b32.xlu0 %v1207, 48
      %v2302 = vpop.permute.xlu0 %2301
      %2303 = vrot.lane.b32.xlu0 %v1208, 48
      %v2304 = vpop.permute.xlu0 %2303
      %v2307 = vsel %vm1348, %v2237, 0
      %v2310 = vsel %vm1348, %v2238, 0
      %v2313 = vsel %vm1430, %v2304, 0
      %2315 = vmatprep.subr.bf16.mxu0 0
      %2316 = vmatpush1.bf16.msra.mxu0 0
      %2317 = vmatprep.subr.bf16.mxu0 0
      %2318 = vmatpush1.bf16.msra.mxu0 0
      %2319 = vmatprep.subr.bf16.mxu0 0
      %2320 = vmatpush1.bf16.msra.mxu0 0
      %2321 = vmatprep.subr.bf16.mxu0 0
      %2322 = vmatpush1.bf16.msra.mxu0 0
      %2323 = vmatprep.subr.bf16.mxu0 0
      %2324 = vmatpush1.bf16.msra.mxu0 0
      %2325 = vmatprep.subr.bf16.mxu0 0
      %2326 = vmatpush1.bf16.msra.mxu0 0
      %2327 = vmatprep.subr.bf16.mxu0 0
      %2328 = vmatpush1.bf16.msra.mxu0 %v2313
      %2329 = vmatprep.subr.bf16.mxu0 0
      %2330 = vmatpush1.bf16.msra.mxu0 %v2302
      %2331 = vmatprep.subr.bf16.mxu0 0
      %2332 = vmatpush2.bf16.msra.mxu0 0
      %2333 = vmatprep.subr.bf16.mxu0 0
      %2334 = vmatpush2.bf16.msra.mxu0 0
      %2335 = vmatprep.subr.bf16.mxu0 0
      %2336 = vmatpush2.bf16.msra.mxu0 0
      %2337 = vmatprep.subr.bf16.mxu0 0
      %2338 = vmatpush2.bf16.msra.mxu0 0
      %2339 = vmatprep.subr.bf16.mxu0 0
      %2340 = vmatpush2.bf16.msra.mxu0 0
      %2341 = vmatprep.subr.bf16.mxu0 0
      %2342 = vmatpush2.bf16.msra.mxu0 0
      %2343 = vmatprep.subr.bf16.mxu0 0
      %2344 = vmatpush2.bf16.msra.mxu0 0
      %2345 = vmatprep.subr.bf16.mxu0 0
      %2346 = vmatpush2.bf16.msra.mxu0 0
      %2347 = vmatprep.mubr.bf16.mxu0 0
      %2348 = vmatmul.mubr.bf16.gmra.mxu0 %v2307
      %v2349 = vpop.f32.mrf.mxu0
      %v2350 = vadd.f32 0.0, %v2349
      %v2351 = vpop.f32.mrf.mxu0
      %v2352 = vpop.f32.mrf.mxu0
      %v2353 = vadd.f32 0.0, %v2352
      %v2354 = vpop.f32.mrf.mxu0
      %2355 = vmatprep.mubr.bf16.mxu0 0
      %2356 = vmatmul.mubr.bf16.gmra.mxu0 %v2310
      %v2357 = vpop.f32.mrf.mxu0
      %v2358 = vadd.f32 0.0, %v2357
      %v2359 = vpop.f32.mrf.mxu0
      %v2360 = vpop.f32.mrf.mxu0
      %v2361 = vpop.f32.mrf.mxu0
      %2362 = vdwg.mxu0
      %v2363 = vpack.c.bf16 %v2291, %v2288
      %v2364 = vpack.c.bf16 %v2350, %v2296
      %v2365 = vpack.c.bf16 %v2358, %v2353
      %s2366 = scalar_lea.vmem %s826, 8
      %v2367 = vld [vmem:[%s2366] sm:$0xf]
      %v2369 = vsel %vm1215, %v2363, 0
      %v2372 = vsel %vm1215, %v2364, 0
      %v2375 = vsel %vm1215, %v2365, 0
      %v2378 = vsel %vm1430, %v2367, 0
      %2380 = vmatprep.subr.bf16.mxu0 0
      %2381 = vmatpush1.bf16.msra.mxu0 0
      %2382 = vmatprep.subr.bf16.mxu0 0
      %2383 = vmatpush1.bf16.msra.mxu0 0
      %2384 = vmatprep.subr.bf16.mxu0 0
      %2385 = vmatpush1.bf16.msra.mxu0 0
      %2386 = vmatprep.subr.bf16.mxu0 0
      %2387 = vmatpush1.bf16.msra.mxu0 0
      %2388 = vmatprep.subr.bf16.mxu0 0
      %2389 = vmatpush1.bf16.msra.mxu0 0
      %2390 = vmatprep.subr.bf16.mxu0 0
      %2391 = vmatpush1.bf16.msra.mxu0 0
      %2392 = vmatprep.subr.bf16.mxu0 0
      %2393 = vmatpush1.bf16.msra.mxu0 0
      %2394 = vmatprep.subr.bf16.mxu0 0
      %2395 = vmatpush1.bf16.msra.mxu0 %v2378
      %2396 = vmatprep.subr.bf16.mxu0 0
      %2397 = vmatpush2.bf16.msra.mxu0 0
      %2398 = vmatprep.subr.bf16.mxu0 0
      %2399 = vmatpush2.bf16.msra.mxu0 0
      %2400 = vmatprep.subr.bf16.mxu0 0
      %2401 = vmatpush2.bf16.msra.mxu0 0
      %2402 = vmatprep.subr.bf16.mxu0 0
      %2403 = vmatpush2.bf16.msra.mxu0 0
      %2404 = vmatprep.subr.bf16.mxu0 0
      %2405 = vmatpush2.bf16.msra.mxu0 0
      %2406 = vmatprep.subr.bf16.mxu0 0
      %2407 = vmatpush2.bf16.msra.mxu0 0
      %2408 = vmatprep.subr.bf16.mxu0 0
      %2409 = vmatpush2.bf16.msra.mxu0 0
      %2410 = vmatprep.subr.bf16.mxu0 0
      %2411 = vmatpush2.bf16.msra.mxu0 0
      %2412 = vmatprep.mubr.bf16.mxu0 0
      %2413 = vmatmul.mubr.bf16.gmra.mxu0 %v2369
      %v2414 = vpop.f32.mrf.mxu0
      %v2415 = vadd.f32 0.0, %v2414
      %v2416 = vpop.f32.mrf.mxu0
      %v2417 = vpop.f32.mrf.mxu0
      %v2418 = vadd.f32 0.0, %v2417
      %v2419 = vpop.f32.mrf.mxu0
      %2420 = vmatprep.mubr.bf16.mxu0 0
      %2421 = vmatmul.mubr.bf16.gmra.mxu0 %v2372
      %v2422 = vpop.f32.mrf.mxu0
      %v2423 = vadd.f32 0.0, %v2422
      %v2424 = vpop.f32.mrf.mxu0
      %v2425 = vpop.f32.mrf.mxu0
      %v2426 = vadd.f32 0.0, %v2425
      %v2427 = vpop.f32.mrf.mxu0
      %2428 = vmatprep.mubr.bf16.mxu0 0
      %2429 = vmatmul.mubr.bf16.gmra.mxu0 %v2375
      %v2430 = vpop.f32.mrf.mxu0
      %v2431 = vadd.f32 0.0, %v2430
      %v2432 = vpop.f32.mrf.mxu0
      %v2433 = vpop.f32.mrf.mxu0
      %v2434 = vadd.f32 0.0, %v2433
      %v2435 = vpop.f32.mrf.mxu0
      %2436 = vdwg.mxu0
      %v2437 = vadd.f32 %v2005, %v2415
      %v2438 = vadd.f32 %v2008, %v2418
      %v2439 = vadd.f32 %v2013, %v2423
      %v2440 = vadd.f32 %v2016, %v2426
      %v2441 = vadd.f32 %v2021, %v2431
      %v2442 = vadd.f32 %v2024, %v2434
      %2443 = vrot.lane.b32.xlu0 %v1205, 104
      %v2444 = vpop.permute.xlu0 %2443
      %2445 = vrot.lane.b32.xlu0 %v1206, 104
      %v2446 = vpop.permute.xlu0 %2445
      %2447 = vrot.lane.b32.xlu0 %v1205, 72
      %v2448 = vpop.permute.xlu0 %2447
      %2449 = vrot.lane.b32.xlu0 %v1206, 72
      %v2450 = vpop.permute.xlu0 %2449
      %v2452 = vsel %vm1215, %v2444, 0
      %v2455 = vsel %vm1215, %v2446, 0
      %v2458 = vsel %vm1215, %v2448, 0
      %v2461 = vsel %vm1215, %v2450, 0
      %2463 = vmatprep.subr.bf16.mxu0 0
      %2464 = vmatpush1.bf16.xpose.msra.mxu0 0
      %2465 = vmatprep.subr.bf16.mxu0 0
      %2466 = vmatpush1.bf16.xpose.msra.mxu0 0
      %2467 = vmatprep.subr.bf16.mxu0 0
      %2468 = vmatpush1.bf16.xpose.msra.mxu0 0
      %2469 = vmatprep.subr.bf16.mxu0 0
      %2470 = vmatpush1.bf16.xpose.msra.mxu0 0
      %2471 = vmatprep.subr.bf16.mxu0 0
      %2472 = vmatpush1.bf16.xpose.msra.mxu0 0
      %2473 = vmatprep.subr.bf16.mxu0 0
      %2474 = vmatpush1.bf16.xpose.msra.mxu0 0
      %2475 = vmatprep.subr.bf16.mxu0 0
      %2476 = vmatpush1.bf16.xpose.msra.mxu0 %v2461
      %2477 = vmatprep.subr.bf16.mxu0 0
      %2478 = vmatpush1.bf16.xpose.msra.mxu0 %v2458
      %2479 = vmatprep.subr.bf16.mxu0 0
      %2480 = vmatpush2.bf16.xpose.msra.mxu0 0
      %2481 = vmatprep.subr.bf16.mxu0 0
      %2482 = vmatpush2.bf16.xpose.msra.mxu0 0
      %2483 = vmatprep.subr.bf16.mxu0 0
      %2484 = vmatpush2.bf16.xpose.msra.mxu0 0
      %2485 = vmatprep.subr.bf16.mxu0 0
      %2486 = vmatpush2.bf16.xpose.msra.mxu0 0
      %2487 = vmatprep.subr.bf16.mxu0 0
      %2488 = vmatpush2.bf16.xpose.msra.mxu0 0
      %2489 = vmatprep.subr.bf16.mxu0 0
      %2490 = vmatpush2.bf16.xpose.msra.mxu0 0
      %2491 = vmatprep.subr.bf16.mxu0 0
      %2492 = vmatpush2.bf16.xpose.msra.mxu0 0
      %2493 = vmatprep.subr.bf16.mxu0 0
      %2494 = vmatpush2.bf16.xpose.msra.mxu0 0
      %2495 = vmatprep.mubr.bf16.mxu0 0
      %2496 = vmatmul.mubr.bf16.gmra.mxu0 %v2452
      %v2497 = vpop.f32.mrf.mxu0
      %v2498 = vadd.f32 0.0, %v2497
      %v2499 = vpop.f32.mrf.mxu0
      %v2500 = vpop.f32.mrf.mxu0
      %v2501 = vadd.f32 0.0, %v2500
      %v2502 = vpop.f32.mrf.mxu0
      %2503 = vmatprep.mubr.bf16.mxu0 0
      %2504 = vmatmul.mubr.bf16.gmra.mxu0 %v2455
      %v2505 = vpop.f32.mrf.mxu0
      %v2506 = vadd.f32 0.0, %v2505
      %v2507 = vpop.f32.mrf.mxu0
      %v2508 = vpop.f32.mrf.mxu0
      %v2509 = vpop.f32.mrf.mxu0
      %2510 = vdwg.mxu0
      %2511 = vrot.lane.b32.xlu0 %v1207, 104
      %v2512 = vpop.permute.xlu0 %2511
      %2513 = vrot.lane.b32.xlu0 %v1208, 104
      %v2514 = vpop.permute.xlu0 %2513
      %2515 = vrot.lane.b32.xlu0 %v1207, 72
      %v2516 = vpop.permute.xlu0 %2515
      %2517 = vrot.lane.b32.xlu0 %v1208, 72
      %v2518 = vpop.permute.xlu0 %2517
      %v2520 = vsel %vm1215, %v2512, 0
      %v2523 = vsel %vm1215, %v2514, 0
      %v2526 = vsel %vm1215, %v2516, 0
      %v2529 = vsel %vm1215, %v2518, 0
      %2531 = vmatprep.subr.bf16.mxu0 0
      %2532 = vmatpush1.bf16.xpose.msra.mxu0 0
      %2533 = vmatprep.subr.bf16.mxu0 0
      %2534 = vmatpush1.bf16.xpose.msra.mxu0 0
      %2535 = vmatprep.subr.bf16.mxu0 0
      %2536 = vmatpush1.bf16.xpose.msra.mxu0 0
      %2537 = vmatprep.subr.bf16.mxu0 0
      %2538 = vmatpush1.bf16.xpose.msra.mxu0 0
      %2539 = vmatprep.subr.bf16.mxu0 0
      %2540 = vmatpush1.bf16.xpose.msra.mxu0 0
      %2541 = vmatprep.subr.bf16.mxu0 0
      %2542 = vmatpush1.bf16.xpose.msra.mxu0 0
      %2543 = vmatprep.subr.bf16.mxu0 0
      %2544 = vmatpush1.bf16.xpose.msra.mxu0 %v2529
      %2545 = vmatprep.subr.bf16.mxu0 0
      %2546 = vmatpush1.bf16.xpose.msra.mxu0 %v2526
      %2547 = vmatprep.subr.bf16.mxu0 0
      %2548 = vmatpush2.bf16.xpose.msra.mxu0 0
      %2549 = vmatprep.subr.bf16.mxu0 0
      %2550 = vmatpush2.bf16.xpose.msra.mxu0 0
      %2551 = vmatprep.subr.bf16.mxu0 0
      %2552 = vmatpush2.bf16.xpose.msra.mxu0 0
      %2553 = vmatprep.subr.bf16.mxu0 0
      %2554 = vmatpush2.bf16.xpose.msra.mxu0 0
      %2555 = vmatprep.subr.bf16.mxu0 0
      %2556 = vmatpush2.bf16.xpose.msra.mxu0 0
      %2557 = vmatprep.subr.bf16.mxu0 0
      %2558 = vmatpush2.bf16.xpose.msra.mxu0 0
      %2559 = vmatprep.subr.bf16.mxu0 0
      %2560 = vmatpush2.bf16.xpose.msra.mxu0 0
      %2561 = vmatprep.subr.bf16.mxu0 0
      %2562 = vmatpush2.bf16.xpose.msra.mxu0 0
      %2563 = vmatprep.mubr.bf16.mxu0 0
      %2564 = vmatmul.mubr.bf16.gmra.mxu0 %v2520
      %v2565 = vpop.f32.mrf.mxu0
      %v2566 = vadd.f32 0.0, %v2565
      %v2567 = vpop.f32.mrf.mxu0
      %v2568 = vpop.f32.mrf.mxu0
      %v2569 = vadd.f32 0.0, %v2568
      %v2570 = vpop.f32.mrf.mxu0
      %2571 = vmatprep.mubr.bf16.mxu0 0
      %2572 = vmatmul.mubr.bf16.gmra.mxu0 %v2523
      %v2573 = vpop.f32.mrf.mxu0
      %v2574 = vadd.f32 0.0, %v2573
      %v2575 = vpop.f32.mrf.mxu0
      %v2576 = vpop.f32.mrf.mxu0
      %v2577 = vpop.f32.mrf.mxu0
      %2578 = vdwg.mxu0
      %v2579 = vsel %vm1204, %v2498, -1e+30
      %v2580 = vsel %vm1204, %v2501, -1e+30
      %v2581 = vsel %vm1204, %v2506, -1e+30
      %v2582 = vsel %vm1204, %v2566, -1e+30
      %v2583 = vsel %vm1204, %v2569, -1e+30
      %v2584 = vsel %vm1204, %v2574, -1e+30
      %v2585 = vsel %vm1348, %v2579, -inf
      %2586 = vmax.xlane.f32.xlu0 %v2585
      %v2587 = vpop.xlane.xlu0 %2586
      %v2588 = vsel %vm1348, %v2580, -inf
      %2589 = vmax.xlane.f32.xlu0 %v2588
      %v2590 = vpop.xlane.xlu0 %2589
      %v2591 = vsel %vm1348, %v2581, -inf
      %2592 = vmax.xlane.f32.xlu0 %v2591
      %v2593 = vpop.xlane.xlu0 %2592
      %v2594 = vsel %vm1348, %v2582, -inf
      %2595 = vmax.xlane.f32.xlu0 %v2594
      %v2596 = vpop.xlane.xlu0 %2595
      %v2597 = vsel %vm1348, %v2583, -inf
      %2598 = vmax.xlane.f32.xlu0 %v2597
      %v2599 = vpop.xlane.xlu0 %2598
      %v2600 = vsel %vm1348, %v2584, -inf
      %2601 = vmax.xlane.f32.xlu0 %v2600
      %v2602 = vpop.xlane.xlu0 %2601
      %v2603 = vsub.f32 %v2579, %v2587
      %v2604 = vsub.f32 %v2580, %v2590
      %v2605 = vsub.f32 %v2581, %v2593
      %v2606 = vsub.f32 %v2582, %v2596
      %v2607 = vsub.f32 %v2583, %v2599
      %v2608 = vsub.f32 %v2584, %v2602
      %v2609 = vmul.f32 %v2603, 1.442695
      %v2610 = vpow.pop %v2609
      %v2611 = vmul.f32 %v2604, 1.442695
      %v2612 = vpow.pop %v2611
      %v2613 = vmul.f32 %v2605, 1.442695
      %v2614 = vpow.pop %v2613
      %v2615 = vmul.f32 %v2606, 1.442695
      %v2616 = vpow.pop %v2615
      %v2617 = vmul.f32 %v2607, 1.442695
      %v2618 = vpow.pop %v2617
      %v2619 = vmul.f32 %v2608, 1.442695
      %v2620 = vpow.pop %v2619
      %v2621 = vsel %vm1348, %v2610, 0.0
      %2622 = vadd.xlane.f32.xlu0 %v2621
      %v2623 = vpop.xlane.xlu0 %2622
      %v2624 = vsel %vm1348, %v2612, 0.0
      %2625 = vadd.xlane.f32.xlu0 %v2624
      %v2626 = vpop.xlane.xlu0 %2625
      %v2627 = vsel %vm1348, %v2614, 0.0
      %2628 = vadd.xlane.f32.xlu0 %v2627
      %v2629 = vpop.xlane.xlu0 %2628
      %v2630 = vsel %vm1348, %v2616, 0.0
      %2631 = vadd.xlane.f32.xlu0 %v2630
      %v2632 = vpop.xlane.xlu0 %2631
      %v2633 = vsel %vm1348, %v2618, 0.0
      %2634 = vadd.xlane.f32.xlu0 %v2633
      %v2635 = vpop.xlane.xlu0 %2634
      %v2636 = vsel %vm1348, %v2620, 0.0
      %2637 = vadd.xlane.f32.xlu0 %v2636
      %v2638 = vpop.xlane.xlu0 %2637
      %v2639 = vrcp.pop %v2623
      %v2640 = vrcp.pop %v2626
      %v2641 = vrcp.pop %v2629
      %v2642 = vrcp.pop %v2632
      %v2643 = vrcp.pop %v2635
      %v2644 = vrcp.pop %v2638
      %v2645 = vmul.f32 %v2610, %v2639
      %v2646 = vmul.f32 %v2612, %v2640
      %v2647 = vmul.f32 %v2614, %v2641
      %v2648 = vmul.f32 %v2616, %v2642
      %v2649 = vmul.f32 %v2618, %v2643
      %v2650 = vmul.f32 %v2620, %v2644
      %v2651 = vpack.c.bf16 %v2646, %v2645
      %v2652 = vpack.c.bf16 %v2647, %v2647
      %v2653 = vpack.c.bf16 %v2649, %v2648
      %v2654 = vpack.c.bf16 %v2650, %v2650
      %2655 = vrot.lane.b32.xlu0 %v1205, 40
      %v2656 = vpop.permute.xlu0 %2655
      %2657 = vrot.lane.b32.xlu0 %v1206, 40
      %v2658 = vpop.permute.xlu0 %2657
      %v2661 = vsel %vm1348, %v2651, 0
      %v2664 = vsel %vm1348, %v2652, 0
      %v2667 = vsel %vm1430, %v2658, 0
      %2669 = vmatprep.subr.bf16.mxu0 0
      %2670 = vmatpush1.bf16.msra.mxu0 0
      %2671 = vmatprep.subr.bf16.mxu0 0
      %2672 = vmatpush1.bf16.msra.mxu0 0
      %2673 = vmatprep.subr.bf16.mxu0 0
      %2674 = vmatpush1.bf16.msra.mxu0 0
      %2675 = vmatprep.subr.bf16.mxu0 0
      %2676 = vmatpush1.bf16.msra.mxu0 0
      %2677 = vmatprep.subr.bf16.mxu0 0
      %2678 = vmatpush1.bf16.msra.mxu0 0
      %2679 = vmatprep.subr.bf16.mxu0 0
      %2680 = vmatpush1.bf16.msra.mxu0 0
      %2681 = vmatprep.subr.bf16.mxu0 0
      %2682 = vmatpush1.bf16.msra.mxu0 %v2667
      %2683 = vmatprep.subr.bf16.mxu0 0
      %2684 = vmatpush1.bf16.msra.mxu0 %v2656
      %2685 = vmatprep.subr.bf16.mxu0 0
      %2686 = vmatpush2.bf16.msra.mxu0 0
      %2687 = vmatprep.subr.bf16.mxu0 0
      %2688 = vmatpush2.bf16.msra.mxu0 0
      %2689 = vmatprep.subr.bf16.mxu0 0
      %2690 = vmatpush2.bf16.msra.mxu0 0
      %2691 = vmatprep.subr.bf16.mxu0 0
      %2692 = vmatpush2.bf16.msra.mxu0 0
      %2693 = vmatprep.subr.bf16.mxu0 0
      %2694 = vmatpush2.bf16.msra.mxu0 0
      %2695 = vmatprep.subr.bf16.mxu0 0
      %2696 = vmatpush2.bf16.msra.mxu0 0
      %2697 = vmatprep.subr.bf16.mxu0 0
      %2698 = vmatpush2.bf16.msra.mxu0 0
      %2699 = vmatprep.subr.bf16.mxu0 0
      %2700 = vmatpush2.bf16.msra.mxu0 0
      %2701 = vmatprep.mubr.bf16.mxu0 0
      %2702 = vmatmul.mubr.bf16.gmra.mxu0 %v2661
      %v2703 = vpop.f32.mrf.mxu0
      %v2704 = vadd.f32 0.0, %v2703
      %v2705 = vpop.f32.mrf.mxu0
      %v2706 = vpop.f32.mrf.mxu0
      %v2707 = vadd.f32 0.0, %v2706
      %v2708 = vpop.f32.mrf.mxu0
      %2709 = vmatprep.mubr.bf16.mxu0 0
      %2710 = vmatmul.mubr.bf16.gmra.mxu0 %v2664
      %v2711 = vpop.f32.mrf.mxu0
      %v2712 = vadd.f32 0.0, %v2711
      %v2713 = vpop.f32.mrf.mxu0
      %v2714 = vpop.f32.mrf.mxu0
      %v2715 = vpop.f32.mrf.mxu0
      %2716 = vdwg.mxu0
      %2717 = vrot.lane.b32.xlu0 %v1207, 40
      %v2718 = vpop.permute.xlu0 %2717
      %2719 = vrot.lane.b32.xlu0 %v1208, 40
      %v2720 = vpop.permute.xlu0 %2719
      %v2723 = vsel %vm1348, %v2653, 0
      %v2726 = vsel %vm1348, %v2654, 0
      %v2729 = vsel %vm1430, %v2720, 0
      %2731 = vmatprep.subr.bf16.mxu0 0
      %2732 = vmatpush1.bf16.msra.mxu0 0
      %2733 = vmatprep.subr.bf16.mxu0 0
      %2734 = vmatpush1.bf16.msra.mxu0 0
      %2735 = vmatprep.subr.bf16.mxu0 0
      %2736 = vmatpush1.bf16.msra.mxu0 0
      %2737 = vmatprep.subr.bf16.mxu0 0
      %2738 = vmatpush1.bf16.msra.mxu0 0
      %2739 = vmatprep.subr.bf16.mxu0 0
      %2740 = vmatpush1.bf16.msra.mxu0 0
      %2741 = vmatprep.subr.bf16.mxu0 0
      %2742 = vmatpush1.bf16.msra.mxu0 0
      %2743 = vmatprep.subr.bf16.mxu0 0
      %2744 = vmatpush1.bf16.msra.mxu0 %v2729
      %2745 = vmatprep.subr.bf16.mxu0 0
      %2746 = vmatpush1.bf16.msra.mxu0 %v2718
      %2747 = vmatprep.subr.bf16.mxu0 0
      %2748 = vmatpush2.bf16.msra.mxu0 0
      %2749 = vmatprep.subr.bf16.mxu0 0
      %2750 = vmatpush2.bf16.msra.mxu0 0
      %2751 = vmatprep.subr.bf16.mxu0 0
      %2752 = vmatpush2.bf16.msra.mxu0 0
      %2753 = vmatprep.subr.bf16.mxu0 0
      %2754 = vmatpush2.bf16.msra.mxu0 0
      %2755 = vmatprep.subr.bf16.mxu0 0
      %2756 = vmatpush2.bf16.msra.mxu0 0
      %2757 = vmatprep.subr.bf16.mxu0 0
      %2758 = vmatpush2.bf16.msra.mxu0 0
      %2759 = vmatprep.subr.bf16.mxu0 0
      %2760 = vmatpush2.bf16.msra.mxu0 0
      %2761 = vmatprep.subr.bf16.mxu0 0
      %2762 = vmatpush2.bf16.msra.mxu0 0
      %2763 = vmatprep.mubr.bf16.mxu0 0
      %2764 = vmatmul.mubr.bf16.gmra.mxu0 %v2723
      %v2765 = vpop.f32.mrf.mxu0
      %v2766 = vadd.f32 0.0, %v2765
      %v2767 = vpop.f32.mrf.mxu0
      %v2768 = vpop.f32.mrf.mxu0
      %v2769 = vadd.f32 0.0, %v2768
      %v2770 = vpop.f32.mrf.mxu0
      %2771 = vmatprep.mubr.bf16.mxu0 0
      %2772 = vmatmul.mubr.bf16.gmra.mxu0 %v2726
      %v2773 = vpop.f32.mrf.mxu0
      %v2774 = vadd.f32 0.0, %v2773
      %v2775 = vpop.f32.mrf.mxu0
      %v2776 = vpop.f32.mrf.mxu0
      %v2777 = vpop.f32.mrf.mxu0
      %2778 = vdwg.mxu0
      %v2779 = vpack.c.bf16 %v2707, %v2704
      %v2780 = vpack.c.bf16 %v2766, %v2712
      %v2781 = vpack.c.bf16 %v2774, %v2769
      %s2782 = scalar_lea.vmem %s826, 12
      %v2783 = vld [vmem:[%s2782] sm:$0xf]
      %v2785 = vsel %vm1215, %v2779, 0
      %v2788 = vsel %vm1215, %v2780, 0
      %v2791 = vsel %vm1215, %v2781, 0
      %v2794 = vsel %vm1430, %v2783, 0
      %2796 = vmatprep.subr.bf16.mxu0 0
      %2797 = vmatpush1.bf16.msra.mxu0 0
      %2798 = vmatprep.subr.bf16.mxu0 0
      %2799 = vmatpush1.bf16.msra.mxu0 0
      %2800 = vmatprep.subr.bf16.mxu0 0
      %2801 = vmatpush1.bf16.msra.mxu0 0
      %2802 = vmatprep.subr.bf16.mxu0 0
      %2803 = vmatpush1.bf16.msra.mxu0 0
      %2804 = vmatprep.subr.bf16.mxu0 0
      %2805 = vmatpush1.bf16.msra.mxu0 0
      %2806 = vmatprep.subr.bf16.mxu0 0
      %2807 = vmatpush1.bf16.msra.mxu0 0
      %2808 = vmatprep.subr.bf16.mxu0 0
      %2809 = vmatpush1.bf16.msra.mxu0 0
      %2810 = vmatprep.subr.bf16.mxu0 0
      %2811 = vmatpush1.bf16.msra.mxu0 %v2794
      %2812 = vmatprep.subr.bf16.mxu0 0
      %2813 = vmatpush2.bf16.msra.mxu0 0
      %2814 = vmatprep.subr.bf16.mxu0 0
      %2815 = vmatpush2.bf16.msra.mxu0 0
      %2816 = vmatprep.subr.bf16.mxu0 0
      %2817 = vmatpush2.bf16.msra.mxu0 0
      %2818 = vmatprep.subr.bf16.mxu0 0
      %2819 = vmatpush2.bf16.msra.mxu0 0
      %2820 = vmatprep.subr.bf16.mxu0 0
      %2821 = vmatpush2.bf16.msra.mxu0 0
      %2822 = vmatprep.subr.bf16.mxu0 0
      %2823 = vmatpush2.bf16.msra.mxu0 0
      %2824 = vmatprep.subr.bf16.mxu0 0
      %2825 = vmatpush2.bf16.msra.mxu0 0
      %2826 = vmatprep.subr.bf16.mxu0 0
      %2827 = vmatpush2.bf16.msra.mxu0 0
      %2828 = vmatprep.mubr.bf16.mxu0 0
      %2829 = vmatmul.mubr.bf16.gmra.mxu0 %v2785
      %v2830 = vpop.f32.mrf.mxu0
      %v2831 = vadd.f32 0.0, %v2830
      %v2832 = vpop.f32.mrf.mxu0
      %v2833 = vpop.f32.mrf.mxu0
      %v2834 = vadd.f32 0.0, %v2833
      %v2835 = vpop.f32.mrf.mxu0
      %2836 = vmatprep.mubr.bf16.mxu0 0
      %2837 = vmatmul.mubr.bf16.gmra.mxu0 %v2788
      %v2838 = vpop.f32.mrf.mxu0
      %v2839 = vadd.f32 0.0, %v2838
      %v2840 = vpop.f32.mrf.mxu0
      %v2841 = vpop.f32.mrf.mxu0
      %v2842 = vadd.f32 0.0, %v2841
      %v2843 = vpop.f32.mrf.mxu0
      %2844 = vmatprep.mubr.bf16.mxu0 0
      %2845 = vmatmul.mubr.bf16.gmra.mxu0 %v2791
      %v2846 = vpop.f32.mrf.mxu0
      %v2847 = vadd.f32 0.0, %v2846
      %v2848 = vpop.f32.mrf.mxu0
      %v2849 = vpop.f32.mrf.mxu0
      %v2850 = vadd.f32 0.0, %v2849
      %v2851 = vpop.f32.mrf.mxu0
      %2852 = vdwg.mxu0
      %v2853 = vadd.f32 %v2437, %v2831
      %v2854 = vadd.f32 %v2438, %v2834
      %v2855 = vadd.f32 %v2439, %v2839
      %v2856 = vadd.f32 %v2440, %v2842
      %v2857 = vadd.f32 %v2441, %v2847
      %v2858 = vadd.f32 %v2442, %v2850
      %v2859 = vadd.f32 %v998, %v2853
      %v2860 = vadd.f32 %v999, %v2854
      %v2861 = vadd.f32 %v1000, %v2855
      %v2862 = vadd.f32 %v1001, %v2856
      %v2863 = vadd.f32 %v1002, %v2857
      %v2864 = vadd.f32 %v1003, %v2858
      %v2865 = vld [vmem:[%s829] sm:$0x1]
      %v2867 = vlaneseq
      %v2868 = vshrl.u32 %v2867, 7
      %v2869 = vsub.s32 0, %v2868
      %v2870 = vrot.slane %v2865, %v2869
      %v2872 = vadd.f32 %v2859, %v2870
      %v2873 = vadd.f32 %v2860, %v2870
      %v2874 = vadd.f32 %v2861, %v2870
      %v2875 = vadd.f32 %v2862, %v2870
      %v2876 = vadd.f32 %v2863, %v2870
      %v2877 = vadd.f32 %v2864, %v2870
      %v2878 = vld [vmem:[%s832] sm:$0x1]
      %v2879 = vld [vmem:[%s835] sm:$0x1]
      %v2880 = vsel %vm1006, %v2872, 0.0
      %2881 = vadd.xlane.f32.xlu0 %v2880
      %v2882 = vpop.xlane.xlu0 %2881
      %v2883 = vsel %vm1006, %v2873, 0.0
      %2884 = vadd.xlane.f32.xlu0 %v2883
      %v2885 = vpop.xlane.xlu0 %2884
      %v2886 = vsel %vm1006, %v2874, 0.0
      %2887 = vadd.xlane.f32.xlu0 %v2886
      %v2888 = vpop.xlane.xlu0 %2887
      %v2889 = vsel %vm1006, %v2875, 0.0
      %2890 = vadd.xlane.f32.xlu0 %v2889
      %v2891 = vpop.xlane.xlu0 %2890
      %v2892 = vsel %vm1006, %v2876, 0.0
      %2893 = vadd.xlane.f32.xlu0 %v2892
      %v2894 = vpop.xlane.xlu0 %2893
      %v2895 = vsel %vm1006, %v2877, 0.0
      %2896 = vadd.xlane.f32.xlu0 %v2895
      %v2897 = vpop.xlane.xlu0 %2896
      %v2898 = vmul.f32 %v2882, %v1025
      %v2899 = vmul.f32 %v2885, %v1025
      %v2900 = vmul.f32 %v2888, %v1025
      %v2901 = vmul.f32 %v2891, %v1025
      %v2902 = vmul.f32 %v2894, %v1025
      %v2903 = vmul.f32 %v2897, %v1025
      %v2904 = vsub.f32 %v2872, %v2898
      %v2905 = vsub.f32 %v2873, %v2899
      %v2906 = vsub.f32 %v2874, %v2900
      %v2907 = vsub.f32 %v2875, %v2901
      %v2908 = vsub.f32 %v2876, %v2902
      %v2909 = vsub.f32 %v2877, %v2903
      %v2910 = vmul.f32 %v2904, %v2904
      %v2911 = vmul.f32 %v2905, %v2905
      %v2912 = vmul.f32 %v2906, %v2906
      %v2913 = vmul.f32 %v2907, %v2907
      %v2914 = vmul.f32 %v2908, %v2908
      %v2915 = vmul.f32 %v2909, %v2909
      %v2916 = vsel %vm1006, %v2910, 0.0
      %2917 = vadd.xlane.f32.xlu0 %v2916
      %v2918 = vpop.xlane.xlu0 %2917
      %v2919 = vsel %vm1006, %v2911, 0.0
      %2920 = vadd.xlane.f32.xlu0 %v2919
      %v2921 = vpop.xlane.xlu0 %2920
      %v2922 = vsel %vm1006, %v2912, 0.0
      %2923 = vadd.xlane.f32.xlu0 %v2922
      %v2924 = vpop.xlane.xlu0 %2923
      %v2925 = vsel %vm1006, %v2913, 0.0
      %2926 = vadd.xlane.f32.xlu0 %v2925
      %v2927 = vpop.xlane.xlu0 %2926
      %v2928 = vsel %vm1006, %v2914, 0.0
      %2929 = vadd.xlane.f32.xlu0 %v2928
      %v2930 = vpop.xlane.xlu0 %2929
      %v2931 = vsel %vm1006, %v2915, 0.0
      %2932 = vadd.xlane.f32.xlu0 %v2931
      %v2933 = vpop.xlane.xlu0 %2932
      %v2934 = vmul.f32 %v2918, %v1025
      %v2935 = vmul.f32 %v2921, %v1025
      %v2936 = vmul.f32 %v2924, %v1025
      %v2937 = vmul.f32 %v2927, %v1025
      %v2938 = vmul.f32 %v2930, %v1025
      %v2939 = vmul.f32 %v2933, %v1025
      %v2940 = vadd.f32 %v2934, 1e-05
      %v2941 = vadd.f32 %v2935, 1e-05
      %v2942 = vadd.f32 %v2936, 1e-05
      %v2943 = vadd.f32 %v2937, 1e-05
      %v2944 = vadd.f32 %v2938, 1e-05
      %v2945 = vadd.f32 %v2939, 1e-05
      %v2946 = vrsqrt.pop %v2940
      %v2947 = vrsqrt.pop %v2941
      %v2948 = vrsqrt.pop %v2942
      %v2949 = vrsqrt.pop %v2943
      %v2950 = vrsqrt.pop %v2944
      %v2951 = vrsqrt.pop %v2945
      %v2952 = vmul.f32 %v2904, %v2946
      %v2953 = vmul.f32 %v2905, %v2947
      %v2954 = vmul.f32 %v2906, %v2948
      %v2955 = vmul.f32 %v2907, %v2949
      %v2956 = vmul.f32 %v2908, %v2950
      %v2957 = vmul.f32 %v2909, %v2951
      %v2959 = vlaneseq
      %v2960 = vshrl.u32 %v2959, 7
      %v2961 = vsub.s32 0, %v2960
      %v2962 = vrot.slane %v2878, %v2961
      %v2964 = vmul.f32 %v2952, %v2962
      %v2965 = vmul.f32 %v2953, %v2962
      %v2966 = vmul.f32 %v2954, %v2962
      %v2967 = vmul.f32 %v2955, %v2962
      %v2968 = vmul.f32 %v2956, %v2962
      %v2969 = vmul.f32 %v2957, %v2962
      %v2971 = vlaneseq
      %v2972 = vshrl.u32 %v2971, 7
      %v2973 = vsub.s32 0, %v2972
      %v2974 = vrot.slane %v2879, %v2973
      %v2976 = vadd.f32 %v2964, %v2974
      %v2977 = vadd.f32 %v2965, %v2974
      %v2978 = vadd.f32 %v2966, %v2974
      %v2979 = vadd.f32 %v2967, %v2974
      %v2980 = vadd.f32 %v2968, %v2974
      %v2981 = vadd.f32 %v2969, %v2974
      %v2982 = vpack.c.bf16 %v2977, %v2976
      %v2983 = vpack.c.bf16 %v2979, %v2978
      %v2984 = vpack.c.bf16 %v2981, %v2980
      %v2985 = vld [vmem:[%s840] sm:$0xf]
      %v2986 = vld [vmem:[%s840 + $0x4] sm:$0xf]
      %v2987 = vld [vmem:[%s840 + $0x8] sm:$0xf]
      %v2988 = vld [vmem:[%s840 + $0xc] sm:$0xf]
      %v2989 = vld [vmem:[%s843] sm:$0x1]
      %v2991 = vlaneseq
      %v2992 = vshrl.u32 %v2991, 7
      %v2993 = vsub.s32 0, %v2992
      %v2994 = vrot.slane %v2989, %v2993
      %v3000 = vunpack.c.l.b16 %v2985
      %v3001 = vunpack.c.l.b16 %v2986
      %v3002 = vunpack.c.l.b16 %v2987
      %v3003 = vunpack.c.l.b16 %v2988
      %v3004 = vpack.c.b16 %v3001, %v3000
      %v3005 = vpack.c.b16 %v3003, %v3002
      %v3009 = vsel %vm1006, %v2982, 0
      %v3012 = vsel %vm1006, %v2983, 0
      %v3015 = vsel %vm1006, %v2984, 0
      %3017 = vmatprep.subr.bf16.mxu0 0
      %3018 = vmatpush1.bf16.msra.mxu0 0
      %3019 = vmatprep.subr.bf16.mxu0 0
      %3020 = vmatpush1.bf16.msra.mxu0 0
      %3021 = vmatprep.subr.bf16.mxu0 0
      %3022 = vmatpush1.bf16.msra.mxu0 0
      %3023 = vmatprep.subr.bf16.mxu0 0
      %3024 = vmatpush1.bf16.msra.mxu0 0
      %3025 = vmatprep.subr.bf16.mxu0 0
      %3026 = vmatpush1.bf16.msra.mxu0 0
      %3027 = vmatprep.subr.bf16.mxu0 0
      %3028 = vmatpush1.bf16.msra.mxu0 0
      %3029 = vmatprep.subr.bf16.mxu0 0
      %3030 = vmatpush1.bf16.msra.mxu0 %v3005
      %3031 = vmatprep.subr.bf16.mxu0 0
      %3032 = vmatpush1.bf16.msra.mxu0 %v3004
      %3033 = vmatprep.subr.bf16.mxu0 0
      %3034 = vmatpush2.bf16.msra.mxu0 0
      %3035 = vmatprep.subr.bf16.mxu0 0
      %3036 = vmatpush2.bf16.msra.mxu0 0
      %3037 = vmatprep.subr.bf16.mxu0 0
      %3038 = vmatpush2.bf16.msra.mxu0 0
      %3039 = vmatprep.subr.bf16.mxu0 0
      %3040 = vmatpush2.bf16.msra.mxu0 0
      %3041 = vmatprep.subr.bf16.mxu0 0
      %3042 = vmatpush2.bf16.msra.mxu0 0
      %3043 = vmatprep.subr.bf16.mxu0 0
      %3044 = vmatpush2.bf16.msra.mxu0 0
      %3045 = vmatprep.subr.bf16.mxu0 0
      %3046 = vmatpush2.bf16.msra.mxu0 0
      %3047 = vmatprep.subr.bf16.mxu0 0
      %3048 = vmatpush2.bf16.msra.mxu0 0
      %3049 = vmatprep.mubr.bf16.mxu0 0
      %3050 = vmatmul.mubr.bf16.gmra.mxu0 %v3009
      %v3051 = vpop.f32.mrf.mxu0
      %v3052 = vadd.f32 %v2994, %v3051
      %v3053 = vpop.f32.mrf.mxu0
      %v3054 = vpop.f32.mrf.mxu0
      %v3055 = vadd.f32 %v2994, %v3054
      %v3056 = vpop.f32.mrf.mxu0
      %3057 = vmatprep.mubr.bf16.mxu0 0
      %3058 = vmatmul.mubr.bf16.gmra.mxu0 %v3012
      %v3059 = vpop.f32.mrf.mxu0
      %v3060 = vadd.f32 %v2994, %v3059
      %v3061 = vpop.f32.mrf.mxu0
      %v3062 = vpop.f32.mrf.mxu0
      %v3063 = vadd.f32 %v2994, %v3062
      %v3064 = vpop.f32.mrf.mxu0
      %3065 = vmatprep.mubr.bf16.mxu0 0
      %3066 = vmatmul.mubr.bf16.gmra.mxu0 %v3015
      %v3067 = vpop.f32.mrf.mxu0
      %v3068 = vadd.f32 %v2994, %v3067
      %v3069 = vpop.f32.mrf.mxu0
      %v3070 = vpop.f32.mrf.mxu0
      %v3071 = vadd.f32 %v2994, %v3070
      %v3072 = vpop.f32.mrf.mxu0
      %3073 = vdwg.mxu0
      %v3074 = vpack.c.bf16 %v3055, %v3052
      %v3075 = vpack.c.bf16 %v3063, %v3060
      %v3076 = vpack.c.bf16 %v3071, %v3068
      %v3077 = vmul.bf16 %v3074, 3218784218
      %v3078 = vmul.bf16 %v3075, 3218784218
      %v3079 = vmul.bf16 %v3076, 3218784218
      %v3081 = vmul.bf16 %v3077, 1069105081
      %v3082 = vpow.bf16.pop %v3081
      %v3084 = vmul.bf16 %v3078, 1069105081
      %v3085 = vpow.bf16.pop %v3084
      %v3087 = vmul.bf16 %v3079, 1069105081
      %v3088 = vpow.bf16.pop %v3087
      %v3089 = vadd.bf16 %v3082, 1065369472
      %v3090 = vadd.bf16 %v3085, 1065369472
      %v3091 = vadd.bf16 %v3088, 1065369472
      %v3092 = vrcp.bf16.pop %v3089
      %v3093 = vmul.bf16 1065369472, %v3092
      %v3094 = vrcp.bf16.pop %v3090
      %v3095 = vmul.bf16 1065369472, %v3094
      %v3096 = vrcp.bf16.pop %v3091
      %v3097 = vmul.bf16 1065369472, %v3096
      %v3098 = vmul.bf16 %v3074, %v3093
      %v3099 = vmul.bf16 %v3075, %v3095
      %v3100 = vmul.bf16 %v3076, %v3097
      %v3101 = vld [vmem:[%s848] sm:$0xf]
      %v3102 = vld [vmem:[%s848 + $0x4] sm:$0xf]
      %v3103 = vld [vmem:[%s848 + $0x8] sm:$0xf]
      %v3104 = vld [vmem:[%s848 + $0xc] sm:$0xf]
      %v3105 = vld [vmem:[%s848 + $0x10] sm:$0xf]
      %v3106 = vld [vmem:[%s848 + $0x14] sm:$0xf]
      %v3107 = vld [vmem:[%s848 + $0x18] sm:$0xf]
      %v3108 = vld [vmem:[%s848 + $0x1c] sm:$0xf]
      %v3109 = vld [vmem:[%s848 + $0x20] sm:$0xf]
      %v3110 = vld [vmem:[%s848 + $0x24] sm:$0xf]
      %v3111 = vld [vmem:[%s848 + $0x28] sm:$0xf]
      %v3112 = vld [vmem:[%s848 + $0x2c] sm:$0xf]
      %v3113 = vld [vmem:[%s848 + $0x30] sm:$0xf]
      %v3114 = vld [vmem:[%s848 + $0x34] sm:$0xf]
      %v3115 = vld [vmem:[%s848 + $0x38] sm:$0xf]
      %v3116 = vld [vmem:[%s848 + $0x3c] sm:$0xf]
      %v3117 = vld [vmem:[%s851] sm:$0x1]
      %v3119 = vlaneseq
      %v3120 = vshrl.u32 %v3119, 7
      %v3121 = vsub.s32 0, %v3120
      %v3122 = vrot.slane %v3117, %v3121
      %v3140 = vunpack.c.l.b16 %v3101
      %v3141 = vunpack.c.l.b16 %v3102
      %v3142 = vunpack.c.l.b16 %v3103
      %v3143 = vunpack.c.l.b16 %v3104
      %v3144 = vunpack.c.l.b16 %v3105
      %v3145 = vunpack.c.l.b16 %v3106
      %v3146 = vunpack.c.l.b16 %v3107
      %v3147 = vunpack.c.l.b16 %v3108
      %v3148 = vunpack.c.l.b16 %v3109
      %v3149 = vunpack.c.l.b16 %v3110
      %v3150 = vunpack.c.l.b16 %v3111
      %v3151 = vunpack.c.l.b16 %v3112
      %v3152 = vunpack.c.l.b16 %v3113
      %v3153 = vunpack.c.l.b16 %v3114
      %v3154 = vunpack.c.l.b16 %v3115
      %v3155 = vunpack.c.l.b16 %v3116
      %v3156 = vpack.c.b16 %v3141, %v3140
      %v3157 = vpack.c.b16 %v3143, %v3142
      %v3158 = vpack.c.b16 %v3145, %v3144
      %v3159 = vpack.c.b16 %v3147, %v3146
      %v3160 = vpack.c.b16 %v3149, %v3148
      %v3161 = vpack.c.b16 %v3151, %v3150
      %v3162 = vpack.c.b16 %v3153, %v3152
      %v3163 = vpack.c.b16 %v3155, %v3154
      %3172 = vmatprep.subr.bf16.mxu0 0
      %3173 = vmatpush1.bf16.msra.mxu0 %v3163
      %3174 = vmatprep.subr.bf16.mxu0 0
      %3175 = vmatpush1.bf16.msra.mxu0 %v3162
      %3176 = vmatprep.subr.bf16.mxu0 0
      %3177 = vmatpush1.bf16.msra.mxu0 %v3161
      %3178 = vmatprep.subr.bf16.mxu0 0
      %3179 = vmatpush1.bf16.msra.mxu0 %v3160
      %3180 = vmatprep.subr.bf16.mxu0 0
      %3181 = vmatpush1.bf16.msra.mxu0 %v3159
      %3182 = vmatprep.subr.bf16.mxu0 0
      %3183 = vmatpush1.bf16.msra.mxu0 %v3158
      %3184 = vmatprep.subr.bf16.mxu0 0
      %3185 = vmatpush1.bf16.msra.mxu0 %v3157
      %3186 = vmatprep.subr.bf16.mxu0 0
      %3187 = vmatpush1.bf16.msra.mxu0 %v3156
      %3188 = vmatprep.subr.bf16.mxu0 0
      %3189 = vmatpush2.bf16.msra.mxu0 0
      %3190 = vmatprep.subr.bf16.mxu0 0
      %3191 = vmatpush2.bf16.msra.mxu0 0
      %3192 = vmatprep.subr.bf16.mxu0 0
      %3193 = vmatpush2.bf16.msra.mxu0 0
      %3194 = vmatprep.subr.bf16.mxu0 0
      %3195 = vmatpush2.bf16.msra.mxu0 0
      %3196 = vmatprep.subr.bf16.mxu0 0
      %3197 = vmatpush2.bf16.msra.mxu0 0
      %3198 = vmatprep.subr.bf16.mxu0 0
      %3199 = vmatpush2.bf16.msra.mxu0 0
      %3200 = vmatprep.subr.bf16.mxu0 0
      %3201 = vmatpush2.bf16.msra.mxu0 0
      %3202 = vmatprep.subr.bf16.mxu0 0
      %3203 = vmatpush2.bf16.msra.mxu0 0
      %3204 = vmatprep.mubr.bf16.mxu0 0
      %3205 = vmatmul.mubr.bf16.gmra.mxu0 %v3098
      %v3206 = vpop.f32.mrf.mxu0
      %v3207 = vadd.f32 %v3122, %v3206
      %v3208 = vpop.f32.mrf.mxu0
      %v3209 = vpop.f32.mrf.mxu0
      %v3210 = vadd.f32 %v3122, %v3209
      %v3211 = vpop.f32.mrf.mxu0
      %3212 = vmatprep.mubr.bf16.mxu0 0
      %3213 = vmatmul.mubr.bf16.gmra.mxu0 %v3099
      %v3214 = vpop.f32.mrf.mxu0
      %v3215 = vadd.f32 %v3122, %v3214
      %v3216 = vpop.f32.mrf.mxu0
      %v3217 = vpop.f32.mrf.mxu0
      %v3218 = vadd.f32 %v3122, %v3217
      %v3219 = vpop.f32.mrf.mxu0
      %3220 = vmatprep.mubr.bf16.mxu0 0
      %3221 = vmatmul.mubr.bf16.gmra.mxu0 %v3100
      %v3222 = vpop.f32.mrf.mxu0
      %v3223 = vadd.f32 %v3122, %v3222
      %v3224 = vpop.f32.mrf.mxu0
      %v3225 = vpop.f32.mrf.mxu0
      %v3226 = vadd.f32 %v3122, %v3225
      %v3227 = vpop.f32.mrf.mxu0
      %3228 = vdwg.mxu0
      %v3229 = vadd.f32 %v2872, %v3207
      %v3230 = vadd.f32 %v2873, %v3210
      %v3231 = vadd.f32 %v2874, %v3215
      %v3232 = vadd.f32 %v2875, %v3218
      %v3233 = vadd.f32 %v2876, %v3223
      %v3234 = vadd.f32 %v2877, %v3226
      %3235 = vst.msk [vmem:[#allocation2] sm:$0xff] %vm1006, %v3229
      %3236 = vst.msk [vmem:[#allocation2 + $0x8] sm:$0xff] %vm1006, %v3230
      %3237 = vst.msk [vmem:[#allocation2 + $0x10] sm:$0xff] %vm1006, %v3231
      %3238 = vst.msk [vmem:[#allocation2 + $0x18] sm:$0xff] %vm1006, %v3232
      %3239 = vst.msk [vmem:[#allocation2 + $0x20] sm:$0xff] %vm1006, %v3233
      %3240 = vst.msk [vmem:[#allocation2 + $0x28] sm:$0xff] %vm1006, %v3234
      %p3241 = scmp.eq.s32.totalorder %s37, 10
      // Predicated region
      $region97: #{vision_transformer_forward.3} parent=91 // pred_check
        %p3242 = pneg %p3241
      $region98: #{vision_transformer_forward.3} parent=91 // pred_check_branch
        %3244 = sbr.rel (%p3242) target = $region100
      $region99: #{vision_transformer_forward.3} parent=91 // pred_region
        %3245 = vst.msk [vmem:[%s857] sm:$0xff] %vm1006, %v3229
        %3246 = vst.msk [vmem:[%s857 + $0x8] sm:$0xff] %vm1006, %v3230
        %3247 = vst.msk [vmem:[%s857 + $0x10] sm:$0xff] %vm1006, %v3231
        %3248 = vst.msk [vmem:[%s857 + $0x18] sm:$0xff] %vm1006, %v3232
        %3249 = vst.msk [vmem:[%s857 + $0x20] sm:$0xff] %vm1006, %v3233
        %3250 = vst.msk [vmem:[%s857 + $0x28] sm:$0xff] %vm1006, %v3234
      $region100: #{vision_transformer_forward.3} parent=91 // pred_fallthru
        _
      %p3251 = scmp.eq.s32.totalorder %s37, 11
      // Predicated region
      $region101: #{vision_transformer_forward.3} parent=91 // pred_check
        %p3252 = pneg %p3251
      $region102: #{vision_transformer_forward.3} parent=91 // pred_check_branch
        %3254 = sbr.rel (%p3252) target = $region104
      $region103: #{vision_transformer_forward.3} parent=91 // pred_region
        %v3255 = vld [vmem:[%s15] sm:$0x1]
        %v3256 = vld [vmem:[%s16] sm:$0x1]
        %v3257 = vsel %vm1006, %v3229, 0.0
        %3258 = vadd.xlane.f32.xlu0 %v3257
        %v3259 = vpop.xlane.xlu0 %3258
        %v3260 = vsel %vm1006, %v3230, 0.0
        %3261 = vadd.xlane.f32.xlu0 %v3260
        %v3262 = vpop.xlane.xlu0 %3261
        %v3263 = vsel %vm1006, %v3231, 0.0
        %3264 = vadd.xlane.f32.xlu0 %v3263
        %v3265 = vpop.xlane.xlu0 %3264
        %v3266 = vsel %vm1006, %v3232, 0.0
        %3267 = vadd.xlane.f32.xlu0 %v3266
        %v3268 = vpop.xlane.xlu0 %3267
        %v3269 = vsel %vm1006, %v3233, 0.0
        %3270 = vadd.xlane.f32.xlu0 %v3269
        %v3271 = vpop.xlane.xlu0 %3270
        %v3272 = vsel %vm1006, %v3234, 0.0
        %3273 = vadd.xlane.f32.xlu0 %v3272
        %v3274 = vpop.xlane.xlu0 %3273
        %v3275 = vmul.f32 %v3259, %v1025
        %v3276 = vmul.f32 %v3262, %v1025
        %v3277 = vmul.f32 %v3265, %v1025
        %v3278 = vmul.f32 %v3268, %v1025
        %v3279 = vmul.f32 %v3271, %v1025
        %v3280 = vmul.f32 %v3274, %v1025
        %v3281 = vsub.f32 %v3229, %v3275
        %v3282 = vsub.f32 %v3230, %v3276
        %v3283 = vsub.f32 %v3231, %v3277
        %v3284 = vsub.f32 %v3232, %v3278
        %v3285 = vsub.f32 %v3233, %v3279
        %v3286 = vsub.f32 %v3234, %v3280
        %v3287 = vmul.f32 %v3281, %v3281
        %v3288 = vmul.f32 %v3282, %v3282
        %v3289 = vmul.f32 %v3283, %v3283
        %v3290 = vmul.f32 %v3284, %v3284
        %v3291 = vmul.f32 %v3285, %v3285
        %v3292 = vmul.f32 %v3286, %v3286
        %v3293 = vsel %vm1006, %v3287, 0.0
        %3294 = vadd.xlane.f32.xlu0 %v3293
        %v3295 = vpop.xlane.xlu0 %3294
        %v3296 = vsel %vm1006, %v3288, 0.0
        %3297 = vadd.xlane.f32.xlu0 %v3296
        %v3298 = vpop.xlane.xlu0 %3297
        %v3299 = vsel %vm1006, %v3289, 0.0
        %3300 = vadd.xlane.f32.xlu0 %v3299
        %v3301 = vpop.xlane.xlu0 %3300
        %v3302 = vsel %vm1006, %v3290, 0.0
        %3303 = vadd.xlane.f32.xlu0 %v3302
        %v3304 = vpop.xlane.xlu0 %3303
        %v3305 = vsel %vm1006, %v3291, 0.0
        %3306 = vadd.xlane.f32.xlu0 %v3305
        %v3307 = vpop.xlane.xlu0 %3306
        %v3308 = vsel %vm1006, %v3292, 0.0
        %3309 = vadd.xlane.f32.xlu0 %v3308
        %v3310 = vpop.xlane.xlu0 %3309
        %v3311 = vmul.f32 %v3295, %v1025
        %v3312 = vmul.f32 %v3298, %v1025
        %v3313 = vmul.f32 %v3301, %v1025
        %v3314 = vmul.f32 %v3304, %v1025
        %v3315 = vmul.f32 %v3307, %v1025
        %v3316 = vmul.f32 %v3310, %v1025
        %v3317 = vadd.f32 %v3311, 1e-05
        %v3318 = vadd.f32 %v3312, 1e-05
        %v3319 = vadd.f32 %v3313, 1e-05
        %v3320 = vadd.f32 %v3314, 1e-05
        %v3321 = vadd.f32 %v3315, 1e-05
        %v3322 = vadd.f32 %v3316, 1e-05
        %v3323 = vrsqrt.pop %v3317
        %v3324 = vrsqrt.pop %v3318
        %v3325 = vrsqrt.pop %v3319
        %v3326 = vrsqrt.pop %v3320
        %v3327 = vrsqrt.pop %v3321
        %v3328 = vrsqrt.pop %v3322
        %v3329 = vmul.f32 %v3281, %v3323
        %v3330 = vmul.f32 %v3282, %v3324
        %v3331 = vmul.f32 %v3283, %v3325
        %v3332 = vmul.f32 %v3284, %v3326
        %v3333 = vmul.f32 %v3285, %v3327
        %v3334 = vmul.f32 %v3286, %v3328
        %v3336 = vlaneseq
        %v3337 = vshrl.u32 %v3336, 7
        %v3338 = vsub.s32 0, %v3337
        %v3339 = vrot.slane %v3255, %v3338
        %v3341 = vmul.f32 %v3329, %v3339
        %v3342 = vmul.f32 %v3330, %v3339
        %v3343 = vmul.f32 %v3331, %v3339
        %v3344 = vmul.f32 %v3332, %v3339
        %v3345 = vmul.f32 %v3333, %v3339
        %v3346 = vmul.f32 %v3334, %v3339
        %v3348 = vlaneseq
        %v3349 = vshrl.u32 %v3348, 7
        %v3350 = vsub.s32 0, %v3349
        %v3351 = vrot.slane %v3256, %v3350
        %v3353 = vadd.f32 %v3341, %v3351
        %v3354 = vadd.f32 %v3342, %v3351
        %v3355 = vadd.f32 %v3343, %v3351
        %v3356 = vadd.f32 %v3344, %v3351
        %v3357 = vadd.f32 %v3345, %v3351
        %v3358 = vadd.f32 %v3346, %v3351
        %3359 = vst.msk [vmem:[%s864] sm:$0xff] %vm1006, %v3353
        %3360 = vst.msk [vmem:[%s864 + $0x8] sm:$0xff] %vm1006, %v3354
        %3361 = vst.msk [vmem:[%s864 + $0x10] sm:$0xff] %vm1006, %v3355
        %3362 = vst.msk [vmem:[%s864 + $0x18] sm:$0xff] %vm1006, %v3356
        %3363 = vst.msk [vmem:[%s864 + $0x20] sm:$0xff] %vm1006, %v3357
        %3364 = vst.msk [vmem:[%s864 + $0x28] sm:$0xff] %vm1006, %v3358
        %v3365 = vpack.c.bf16 %v3354, %v3353
        %v3366 = vpack.c.bf16 %v3356, %v3355
        %v3367 = vpack.c.bf16 %v3358, %v3357
        %v3368 = vld [vmem:[%s17] sm:$0xf]
        %v3369 = vld [vmem:[%s17 + $0x4] sm:$0xf]
        %v3370 = vld [vmem:[%s17 + $0x8] sm:$0xf]
        %v3371 = vld [vmem:[%s17 + $0xc] sm:$0xf]
        %v3376 = vunpack.c.l.b16 %v3368
        %v3377 = vunpack.c.l.b16 %v3369
        %v3378 = vunpack.c.l.b16 %v3370
        %v3379 = vunpack.c.l.b16 %v3371
        %v3380 = vpack.c.b16 %v3377, %v3376
        %v3381 = vpack.c.b16 %v3379, %v3378
        %v3385 = vsel %vm1006, %v3365, 0
        %v3388 = vsel %vm1006, %v3366, 0
        %v3391 = vsel %vm1006, %v3367, 0
        %3393 = vmatprep.subr.bf16.mxu0 0
        %3394 = vmatpush1.bf16.msra.mxu0 0
        %3395 = vmatprep.subr.bf16.mxu0 0
        %3396 = vmatpush1.bf16.msra.mxu0 0
        %3397 = vmatprep.subr.bf16.mxu0 0
        %3398 = vmatpush1.bf16.msra.mxu0 0
        %3399 = vmatprep.subr.bf16.mxu0 0
        %3400 = vmatpush1.bf16.msra.mxu0 0
        %3401 = vmatprep.subr.bf16.mxu0 0
        %3402 = vmatpush1.bf16.msra.mxu0 0
        %3403 = vmatprep.subr.bf16.mxu0 0
        %3404 = vmatpush1.bf16.msra.mxu0 0
        %3405 = vmatprep.subr.bf16.mxu0 0
        %3406 = vmatpush1.bf16.msra.mxu0 %v3381
        %3407 = vmatprep.subr.bf16.mxu0 0
        %3408 = vmatpush1.bf16.msra.mxu0 %v3380
        %3409 = vmatprep.subr.bf16.mxu0 0
        %3410 = vmatpush2.bf16.msra.mxu0 0
        %3411 = vmatprep.subr.bf16.mxu0 0
        %3412 = vmatpush2.bf16.msra.mxu0 0
        %3413 = vmatprep.subr.bf16.mxu0 0
        %3414 = vmatpush2.bf16.msra.mxu0 0
        %3415 = vmatprep.subr.bf16.mxu0 0
        %3416 = vmatpush2.bf16.msra.mxu0 0
        %3417 = vmatprep.subr.bf16.mxu0 0
        %3418 = vmatpush2.bf16.msra.mxu0 0
        %3419 = vmatprep.subr.bf16.mxu0 0
        %3420 = vmatpush2.bf16.msra.mxu0 0
        %3421 = vmatprep.subr.bf16.mxu0 0
        %3422 = vmatpush2.bf16.msra.mxu0 0
        %3423 = vmatprep.subr.bf16.mxu0 0
        %3424 = vmatpush2.bf16.msra.mxu0 0
        %3425 = vmatprep.mubr.bf16.mxu0 0
        %3426 = vmatmul.mubr.bf16.gmra.mxu0 %v3385
        %v3427 = vpop.f32.mrf.mxu0
        %v3428 = vadd.f32 0.0, %v3427
        %v3429 = vpop.f32.mrf.mxu0
        %v3430 = vpop.f32.mrf.mxu0
        %v3431 = vadd.f32 0.0, %v3430
        %v3432 = vpop.f32.mrf.mxu0
        %3433 = vmatprep.mubr.bf16.mxu0 0
        %3434 = vmatmul.mubr.bf16.gmra.mxu0 %v3388
        %v3435 = vpop.f32.mrf.mxu0
        %v3436 = vadd.f32 0.0, %v3435
        %v3437 = vpop.f32.mrf.mxu0
        %v3438 = vpop.f32.mrf.mxu0
        %v3439 = vadd.f32 0.0, %v3438
        %v3440 = vpop.f32.mrf.mxu0
        %3441 = vmatprep.mubr.bf16.mxu0 0
        %3442 = vmatmul.mubr.bf16.gmra.mxu0 %v3391
        %v3443 = vpop.f32.mrf.mxu0
        %v3444 = vadd.f32 0.0, %v3443
        %v3445 = vpop.f32.mrf.mxu0
        %v3446 = vpop.f32.mrf.mxu0
        %v3447 = vadd.f32 0.0, %v3446
        %v3448 = vpop.f32.mrf.mxu0
        %3449 = vdwg.mxu0
        %vm3450 = vcmask 130048
        %3451 = vst.msk [vmem:[%s871] sm:$0xff] %vm3450, %v3428
        %3452 = vst.msk [vmem:[%s871 + $0x8] sm:$0xff] %vm3450, %v3431
        %3453 = vst.msk [vmem:[%s871 + $0x10] sm:$0xff] %vm3450, %v3436
        %3454 = vst.msk [vmem:[%s871 + $0x18] sm:$0xff] %vm3450, %v3439
        %3455 = vst.msk [vmem:[%s871 + $0x20] sm:$0xff] %vm3450, %v3444
        %3456 = vst.msk [vmem:[%s871 + $0x28] sm:$0xff] %vm3450, %v3447
      $region104: #{vision_transformer_forward.3} parent=91 // pred_fallthru
        _
      %s3457 = smul.u32 2, %s36
      %p3458 = scmp.lt.s32.totalorder %s3457, 1
      %s3459 = scalar_select %p3458, %s3457, 1
      %s3460 = smul.addr %s3459, 3
      %s3461 = smul.addr %s3460, 8
      %s3462 = scalar_lea.vmem %s18, %s3461
      %s3463 = smul.u32 2, %s36
      %p3464 = scmp.lt.s32.totalorder %s3463, 1
      %s3465 = scalar_select %p3464, %s3463, 1
      %s3466 = smul.addr %s3465, 3
      %s3467 = smul.addr %s3466, 8
      %s3468 = scalar_lea.vmem %s19, %s3467
      %s3469 = smul.u32 2, %s36
      %p3470 = scmp.lt.s32.totalorder %s3469, 1
      %s3471 = scalar_select %p3470, %s3469, 1
      %s3472 = smul.addr %s3471, 3
      %s3473 = smul.addr %s3472, 8
      %s3474 = scalar_lea.vmem %s20, %s3473
      // Predicated region
      $region105: #{vision_transformer_forward.3} parent=91 // pred_check
        %p3475 = pneg %p505
      $region106: #{vision_transformer_forward.3} parent=91 // pred_check_branch
        %3477 = sbr.rel (%p3475) target = $region108
      $region107: #{vision_transformer_forward.3} parent=91 // pred_region
        %s3478 = smul.u32 2, %s36
      $region108: #{vision_transformer_forward.3} parent=91 // pred_fallthru
        _
      // Predicated region
      $region109: #{vision_transformer_forward.3} parent=91 // pred_check
        %p3479 = pneg %p531
      $region110: #{vision_transformer_forward.3} parent=91 // pred_check_branch
        %3481 = sbr.rel (%p3479) target = $region112
      $region111: #{vision_transformer_forward.3} parent=91 // pred_region
        %s3482 = smul.u32 2, %s36
      $region112: #{vision_transformer_forward.3} parent=91 // pred_fallthru
        _
      // Predicated region
      $region113: #{vision_transformer_forward.3} parent=91 // pred_check
        %p3483 = pneg %p557
      $region114: #{vision_transformer_forward.3} parent=91 // pred_check_branch
        %3485 = sbr.rel (%p3483) target = $region116
      $region115: #{vision_transformer_forward.3} parent=91 // pred_region
        %s3486 = smul.u32 2, %s36
      $region116: #{vision_transformer_forward.3} parent=91 // pred_fallthru
        _
      // Predicated region
      $region117: #{vision_transformer_forward.3} parent=91 // pred_check
        %p3487 = pneg %p505
      $region118: #{vision_transformer_forward.3} parent=91 // pred_check_branch
        %3489 = sbr.rel (%p3487) target = $region120
      $region119: #{vision_transformer_forward.3} parent=91 // pred_region
        %s3490 = smul.u32 2, %s36
        %p3491 = scmp.lt.s32.totalorder %s3490, 1
        %s3492 = scalar_select %p3491, %s3490, 1
        %s3493 = smul.addr %s3492, 3
        %s3494 = smul.addr %s3493, 8
        %s3495 = scalar_lea.vmem %s18, %s3494
      $region120: #{vision_transformer_forward.3} parent=91 // pred_fallthru
        _
      // Predicated region
      $region121: #{vision_transformer_forward.3} parent=91 // pred_check
        %p3496 = pneg %p531
      $region122: #{vision_transformer_forward.3} parent=91 // pred_check_branch
        %3498 = sbr.rel (%p3496) target = $region124
      $region123: #{vision_transformer_forward.3} parent=91 // pred_region
        %s3499 = smul.u32 2, %s36
        %p3500 = scmp.lt.s32.totalorder %s3499, 1
        %s3501 = scalar_select %p3500, %s3499, 1
        %s3502 = smul.addr %s3501, 3
        %s3503 = smul.addr %s3502, 8
        %s3504 = scalar_lea.vmem %s19, %s3503
      $region124: #{vision_transformer_forward.3} parent=91 // pred_fallthru
        _
      // Predicated region
      $region125: #{vision_transformer_forward.3} parent=91 // pred_check
        %p3505 = pneg %p557
      $region126: #{vision_transformer_forward.3} parent=91 // pred_check_branch
        %3507 = sbr.rel (%p3505) target = $region128
      $region127: #{vision_transformer_forward.3} parent=91 // pred_region
        %s3508 = smul.u32 2, %s36
        %p3509 = scmp.lt.s32.totalorder %s3508, 1
        %s3510 = scalar_select %p3509, %s3508, 1
        %s3511 = smul.addr %s3510, 3
        %s3512 = smul.addr %s3511, 8
        %s3513 = scalar_lea.vmem %s20, %s3512
      $region128: #{vision_transformer_forward.3} parent=91 // pred_fallthru
        _
    $region92: #{vision_transformer_forward.3} parent=5 // pred_fallthru
      _
    %p3514 = scmp.le.s32.totalorder 2, %s27
    // Predicated region
    $region129: #{vision_transformer_forward.3} parent=5 // pred_check
      %p3515 = pneg %p3514
    $region130: #{vision_transformer_forward.3} parent=5 // pred_check_branch
      %3517 = sbr.rel (%p3515) target = $region132
    $region131: #{vision_transformer_forward.3} parent=5 // pred_region
      %s3518 = ssub.s32 %s27, 2
    $region132: #{vision_transformer_forward.3} parent=5 // pred_fallthru
      _
  $region6: #{vision_transformer_forward.3} parent=0 // loop_footer
    %s31 = sadd.s32 1, %s27
  $region7: #{vision_transformer_forward.3} parent=0 // loop_footer_branch
    %26 = sbr.rel target = $region3
  $region8: #{vision_transformer_forward.3} parent=0 // loop_exit
    _

</llo_original>
